<compile_context>
chip_gen: v5e
topology: v5e:2x2
jax: 0.10.0
libtpu: 0.0.40
codegen_flags: <defaults>
</compile_context>

<pallas_src>
import functools

import jax
import jax.numpy as jnp
from jax.experimental import pallas as pl
from jax.experimental.pallas import tpu as pltpu


def _round_up(x, m):
    return ((x + m - 1) // m) * m


# ----------------------------------------------------------------------------
# Fused kernel: multi-layer LSTM + FC head, single invocation.
# ----------------------------------------------------------------------------
def _fused_lstm_fc_kernel(*refs, num_layers, T, Bp, Hp):
    # refs = (x2d, [w_ih, w_hh, bias] * num_layers, w_fc, b_fc, out)
    x2d_ref = refs[0]
    layer_refs = refs[1:1 + 3 * num_layers]
    w_fc_ref = refs[1 + 3 * num_layers]
    b_fc_ref = refs[2 + 3 * num_layers]
    out_ref = refs[3 + 3 * num_layers]

    inp = x2d_ref[...]                                   # (T*Bp, in_dim) f32
    h = jnp.zeros((Bp, Hp), jnp.float32)

    for layer in range(num_layers):
        w_ih = layer_refs[3 * layer][...]                # (in_dim, 4Hp)
        w_hh = layer_refs[3 * layer + 1][...]            # (Hp, 4Hp)
        bias = layer_refs[3 * layer + 2][...]            # (1, 4Hp)

        # Hoisted input projection: one big MXU pass over all timesteps.
        gx = jnp.dot(inp, w_ih, preferred_element_type=jnp.float32) + bias

        h = jnp.zeros((Bp, Hp), jnp.float32)
        c = jnp.zeros((Bp, Hp), jnp.float32)
        hs = []
        # T is static -> unrolled at trace time (equivalent to unroll=True).
        # For very long sequences, switch to lax.fori_loop + a VMEM scratch
        # to bound code size / live ranges.
        for t in range(T):
            g_t = gx[t * Bp:(t + 1) * Bp, :]             # sublane-aligned slice
            gates = g_t + jnp.dot(h, w_hh, preferred_element_type=jnp.float32)
            # Hp is a multiple of 128 -> gate slices are lane(vreg)-aligned.
            i_g = jax.nn.sigmoid(gates[:, 0 * Hp:1 * Hp])
            f_g = jax.nn.sigmoid(gates[:, 1 * Hp:2 * Hp])
            g_g = jnp.tanh(gates[:, 2 * Hp:3 * Hp])
            o_g = jax.nn.sigmoid(gates[:, 3 * Hp:4 * Hp])
            c = f_g * c + i_g * g_g
            h = o_g * jnp.tanh(c)
            if layer < num_layers - 1:
                hs.append(h)

        if layer < num_layers - 1:
            # Full sequence of this layer feeds the next layer's projection;
            # stays in VMEM/vregs, never touches HBM.
            inp = jnp.concatenate(hs, axis=0)            # (T*Bp, Hp)

    # FC head on the last timestep's hidden state. Output slab is lane-dense.
    logits = (jnp.dot(h, w_fc_ref[...], preferred_element_type=jnp.float32)
              + b_fc_ref[...])                           # (Bp, Cp)
    out_ref[...] = logits.astype(out_ref.dtype)


# ----------------------------------------------------------------------------
# One-time weight preparation (transpose, gate-block lane padding, bias sum).
# ----------------------------------------------------------------------------
def _pack_gate_weight(w_t, in_p, H, Hp):
    """w_t: (in_dim, 4H) -> (in_p, 4Hp); each gate gets a lane-aligned Hp slot."""
    in_dim = w_t.shape[0]
    out = jnp.zeros((in_p, 4 * Hp), jnp.float32)
    for g in range(4):
        out = out.at[:in_dim, g * Hp:g * Hp + H].set(w_t[:, g * H:(g + 1) * H])
    return out


def prepare_params(params, input_size, hidden_size, num_classes):
    """Convert PyTorch-layout params to kernel layout, once (not per forward)."""
    H = hidden_size
    Hp = _round_up(H, 128)
    Cp = _round_up(num_classes, 128)
    layers = []
    for li, (w_ih, w_hh, b_ih, b_hh) in enumerate(params["lstm"]):
        in_dim = w_ih.shape[1]                 # input_size for layer 0, H after
        in_p = in_dim if li == 0 else Hp
        w_ih_p = _pack_gate_weight(jnp.transpose(w_ih), in_p, H, Hp)
        w_hh_p = _pack_gate_weight(jnp.transpose(w_hh), Hp, H, Hp)
        b = b_ih + b_hh
        b_p = jnp.zeros((1, 4 * Hp), jnp.float32)
        for g in range(4):
            b_p = b_p.at[0, g * Hp:g * Hp + H].set(b[g * H:(g + 1) * H])
        layers.append((w_ih_p, w_hh_p, b_p))
    w_fc, b_fc = params["fc"]
    w_fc_p = jnp.zeros((Hp, Cp), jnp.float32).at[:H, :num_classes].set(
        jnp.transpose(w_fc))
    b_fc_p = jnp.zeros((1, Cp), jnp.float32).at[0, :num_classes].set(b_fc)
    return {"layers": layers, "fc": (w_fc_p, b_fc_p),
            "Hp": Hp, "Cp": Cp, "num_classes": num_classes}


# ----------------------------------------------------------------------------
# Forward pass (mirrors LSTMModel.forward).
# ----------------------------------------------------------------------------
def lstm_model(x_bti, prepared):
    B, T, I = x_bti.shape
    Hp = prepared["Hp"]
    Cp = prepared["Cp"]
    num_classes = prepared["num_classes"]
    num_layers = len(prepared["layers"])
    Bp = _round_up(max(B, 8), 8)

    # (B, T, I) -> (T, B, I) -> pad batch to Bp sublanes -> flatten to 2D once.
    x_tbi = jnp.transpose(x_bti, (1, 0, 2)).astype(jnp.float32)
    x_tbi = jnp.pad(x_tbi, ((0, 0), (0, Bp - B), (0, 0)))
    x2d = x_tbi.reshape(T * Bp, I)

    flat_inputs = [x2d]
    in_specs = [pl.BlockSpec(x2d.shape, lambda i: (0, 0))]
    for (w_ih_p, w_hh_p, b_p) in prepared["layers"]:
        for a in (w_ih_p, w_hh_p, b_p):
            flat_inputs.append(a)
            in_specs.append(pl.BlockSpec(a.shape, lambda i: (0, 0)))
    w_fc_p, b_fc_p = prepared["fc"]
    flat_inputs += [w_fc_p, b_fc_p]
    in_specs += [pl.BlockSpec(w_fc_p.shape, lambda i: (0, 0)),
                 pl.BlockSpec(b_fc_p.shape, lambda i: (0, 0))]

    kernel = functools.partial(_fused_lstm_fc_kernel,
                               num_layers=num_layers, T=T, Bp=Bp, Hp=Hp)

    out_padded = pl.pallas_call(
        kernel,
        out_shape=jax.ShapeDtypeStruct((Bp, Cp), jnp.float32),
        grid_spec=pltpu.PrefetchScalarGridSpec(
            num_scalar_prefetch=0,
            grid=(1,),
            in_specs=in_specs,
            out_specs=pl.BlockSpec((Bp, Cp), lambda i: (0, 0)),
        ),
    )(*flat_inputs)

    return out_padded[:B, :num_classes]


# ----------------------------------------------------------------------------
# PyTorch-style init + pure-JAX reference (for the numerical sanity check).
# ----------------------------------------------------------------------------
def init_params(key, input_size, hidden_size, num_layers, num_classes):
    params = {"lstm": [], "fc": None}
    bound = 1.0 / jnp.sqrt(jnp.float32(hidden_size))
    for layer in range(num_layers):
        in_sz = input_size if layer == 0 else hidden_size
        key, k1, k2, k3, k4 = jax.random.split(key, 5)
        w_ih = jax.random.uniform(k1, (4 * hidden_size, in_sz), jnp.float32, -bound, bound)
        w_hh = jax.random.uniform(k2, (4 * hidden_size, hidden_size), jnp.float32, -bound, bound)
        b_ih = jax.random.uniform(k3, (4 * hidden_size,), jnp.float32, -bound, bound)
        b_hh = jax.random.uniform(k4, (4 * hidden_size,), jnp.float32, -bound, bound)
        params["lstm"].append((w_ih, w_hh, b_ih, b_hh))
    key, k5, k6 = jax.random.split(key, 3)
    w_fc = jax.random.uniform(k5, (num_classes, hidden_size), jnp.float32, -bound, bound)
    b_fc = jax.random.uniform(k6, (num_classes,), jnp.float32, -bound, bound)
    params["fc"] = (w_fc, b_fc)
    return params


def lstm_model_ref(x_bti, params):
    x = jnp.transpose(x_bti, (1, 0, 2)).astype(jnp.float32)  # (T, B, I)
    B = x.shape[1]
    for (w_ih, w_hh, b_ih, b_hh) in params["lstm"]:
        H = w_hh.shape[1]

        def step(carry, x_t):
            h, c = carry
            gates = x_t @ w_ih.T + h @ w_hh.T + b_ih + b_hh
            i_g = jax.nn.sigmoid(gates[:, 0 * H:1 * H])
            f_g = jax.nn.sigmoid(gates[:, 1 * H:2 * H])
            g_g = jnp.tanh(gates[:, 2 * H:3 * H])
            o_g = jax.nn.sigmoid(gates[:, 3 * H:4 * H])
            c_n = f_g * c + i_g * g_g
            h_n = o_g * jnp.tanh(c_n)
            return (h_n, c_n), h_n

        init = (jnp.zeros((B, H), jnp.float32), jnp.zeros((B, H), jnp.float32))
        _, hs = jax.lax.scan(step, init, x)
        x = hs
    w_fc, b_fc = params["fc"]
    return x[-1] @ w_fc.T + b_fc


if __name__ == "__main__":
    batch, seq, input_size = 2, 8, 16
    hidden_size, num_layers, num_classes = 32, 2, 8

    key = jax.random.PRNGKey(0)
    key, kx, kp = jax.random.split(key, 3)
    x = jax.random.normal(kx, (batch, seq, input_size), jnp.float32)
    params = init_params(kp, input_size, hidden_size, num_layers, num_classes)
    prepared = prepare_params(params, input_size, hidden_size, num_classes)

    out = jax.block_until_ready(lstm_model(x, prepared))
    ref = jax.block_until_ready(lstm_model_ref(x, params))

    assert out.shape == (batch, num_classes)
    assert jnp.allclose(out, ref, atol=1e-4, rtol=1e-4), "mismatch vs reference"

    print("KERNEL_OK")
</pallas_src>

<mosaic_0001>
module attributes {stable_mosaic.version = 11 : i64} {
  func.func @_fused_lstm_fc_kernel(%arg0: i32, %arg1: memref<64x16xf32, #tpu.memory_space<vmem>>, %arg2: memref<16x512xf32, #tpu.memory_space<vmem>>, %arg3: memref<128x512xf32, #tpu.memory_space<vmem>>, %arg4: memref<1x512xf32, #tpu.memory_space<vmem>>, %arg5: memref<128x512xf32, #tpu.memory_space<vmem>>, %arg6: memref<128x512xf32, #tpu.memory_space<vmem>>, %arg7: memref<1x512xf32, #tpu.memory_space<vmem>>, %arg8: memref<128x128xf32, #tpu.memory_space<vmem>>, %arg9: memref<1x128xf32, #tpu.memory_space<vmem>>, %arg10: memref<8x128xf32, #tpu.memory_space<vmem>>) attributes {dimension_semantics = [#tpu.dimension_semantics<arbitrary>], iteration_bounds = array<i64: 1>, scalar_prefetch = 0 : i64, scratch_operands = 0 : i64, tpu.core_type = #tpu.core_type<tc>, window_params = [{pipeline_mode = #tpu.pipeline_mode<synchronous>, transform_indices = @transform_0, window_bounds = array<i64: 64, 16>}, {pipeline_mode = #tpu.pipeline_mode<synchronous>, transform_indices = @transform_1, window_bounds = array<i64: 16, 512>}, {pipeline_mode = #tpu.pipeline_mode<synchronous>, transform_indices = @transform_2, window_bounds = array<i64: 128, 512>}, {pipeline_mode = #tpu.pipeline_mode<synchronous>, transform_indices = @transform_3, window_bounds = array<i64: 1, 512>}, {pipeline_mode = #tpu.pipeline_mode<synchronous>, transform_indices = @transform_4, window_bounds = array<i64: 128, 512>}, {pipeline_mode = #tpu.pipeline_mode<synchronous>, transform_indices = @transform_5, window_bounds = array<i64: 128, 512>}, {pipeline_mode = #tpu.pipeline_mode<synchronous>, transform_indices = @transform_6, window_bounds = array<i64: 1, 512>}, {pipeline_mode = #tpu.pipeline_mode<synchronous>, transform_indices = @transform_7, window_bounds = array<i64: 128, 128>}, {pipeline_mode = #tpu.pipeline_mode<synchronous>, transform_indices = @transform_8, window_bounds = array<i64: 1, 128>}, {pipeline_mode = #tpu.pipeline_mode<synchronous>, transform_indices = @transform_9, window_bounds = array<i64: 8, 128>}]} {
    %c0 = arith.constant 0 : index
    %c0_0 = arith.constant 0 : index
    %0 = vector.load %arg1[%c0, %c0_0] : memref<64x16xf32, #tpu.memory_space<vmem>>, vector<64x16xf32>
    %c0_1 = arith.constant 0 : index
    %c0_2 = arith.constant 0 : index
    %1 = vector.load %arg2[%c0_1, %c0_2] : memref<16x512xf32, #tpu.memory_space<vmem>>, vector<16x512xf32>
    %c0_3 = arith.constant 0 : index
    %c0_4 = arith.constant 0 : index
    %2 = vector.load %arg3[%c0_3, %c0_4] : memref<128x512xf32, #tpu.memory_space<vmem>>, vector<128x512xf32>
    %c0_5 = arith.constant 0 : index
    %c0_6 = arith.constant 0 : index
    %3 = vector.load %arg4[%c0_5, %c0_6] : memref<1x512xf32, #tpu.memory_space<vmem>>, vector<1x512xf32>
    %cst = arith.constant dense<0.000000e+00> : vector<64x512xf32>
    %4 = tpu.matmul %0, %1, %cst {dimension_numbers = #tpu.dot_dimension_numbers<[1], [0], [0], [1], [0, 0, 1, 1], [], []>} : vector<64x16xf32>, vector<16x512xf32>, vector<64x512xf32> -> vector<64x512xf32>
    %5 = vector.broadcast %3 : vector<1x512xf32> to vector<64x512xf32>
    %6 = arith.addf %4, %5 : vector<64x512xf32>
    %cst_7 = arith.constant 0.000000e+00 : f32
    %7 = vector.broadcast %cst_7 : f32 to vector<8x128xf32>
    %cst_8 = arith.constant 0.000000e+00 : f32
    %8 = vector.broadcast %cst_8 : f32 to vector<8x128xf32>
    %9 = vector.extract_strided_slice %6 {offsets = [0, 0], sizes = [8, 512], strides = [1, 1]} : vector<64x512xf32> to vector<8x512xf32>
    %cst_9 = arith.constant dense<0.000000e+00> : vector<8x512xf32>
    %10 = tpu.matmul %7, %2, %cst_9 {dimension_numbers = #tpu.dot_dimension_numbers<[1], [0], [0], [1], [0, 0, 1, 1], [], []>} : vector<8x128xf32>, vector<128x512xf32>, vector<8x512xf32> -> vector<8x512xf32>
    %11 = arith.addf %9, %10 : vector<8x512xf32>
    %12 = vector.extract_strided_slice %11 {offsets = [0, 0], sizes = [8, 128], strides = [1, 1]} : vector<8x512xf32> to vector<8x128xf32>
    %13 = arith.negf %12 : vector<8x128xf32>
    %14 = math.exp %13 : vector<8x128xf32>
    %cst_10 = arith.constant 1.000000e+00 : f32
    %15 = vector.broadcast %cst_10 : f32 to vector<8x128xf32>
    %16 = arith.addf %15, %14 : vector<8x128xf32>
    %17 = arith.divf %15, %16 : vector<8x128xf32>
    %18 = vector.extract_strided_slice %11 {offsets = [0, 128], sizes = [8, 128], strides = [1, 1]} : vector<8x512xf32> to vector<8x128xf32>
    %19 = arith.negf %18 : vector<8x128xf32>
    %20 = math.exp %19 : vector<8x128xf32>
    %cst_11 = arith.constant 1.000000e+00 : f32
    %21 = vector.broadcast %cst_11 : f32 to vector<8x128xf32>
    %22 = arith.addf %21, %20 : vector<8x128xf32>
    %23 = arith.divf %21, %22 : vector<8x128xf32>
    %24 = vector.extract_strided_slice %11 {offsets = [0, 256], sizes = [8, 128], strides = [1, 1]} : vector<8x512xf32> to vector<8x128xf32>
    %25 = math.tanh %24 : vector<8x128xf32>
    %26 = vector.extract_strided_slice %11 {offsets = [0, 384], sizes = [8, 128], strides = [1, 1]} : vector<8x512xf32> to vector<8x128xf32>
    %27 = arith.negf %26 : vector<8x128xf32>
    %28 = math.exp %27 : vector<8x128xf32>
    %cst_12 = arith.constant 1.000000e+00 : f32
    %29 = vector.broadcast %cst_12 : f32 to vector<8x128xf32>
    %30 = arith.addf %29, %28 : vector<8x128xf32>
    %31 = arith.divf %29, %30 : vector<8x128xf32>
    %32 = arith.mulf %23, %8 : vector<8x128xf32>
    %33 = arith.mulf %17, %25 : vector<8x128xf32>
    %34 = arith.addf %32, %33 : vector<8x128xf32>
    %35 = math.tanh %34 : vector<8x128xf32>
    %36 = arith.mulf %31, %35 : vector<8x128xf32>
    %37 = vector.extract_strided_slice %6 {offsets = [8, 0], sizes = [8, 512], strides = [1, 1]} : vector<64x512xf32> to vector<8x512xf32>
    %cst_13 = arith.constant dense<0.000000e+00> : vector<8x512xf32>
    %38 = tpu.matmul %36, %2, %cst_13 {dimension_numbers = #tpu.dot_dimension_numbers<[1], [0], [0], [1], [0, 0, 1, 1], [], []>} : vector<8x128xf32>, vector<128x512xf32>, vector<8x512xf32> -> vector<8x512xf32>
    %39 = arith.addf %37, %38 : vector<8x512xf32>
    %40 = vector.extract_strided_slice %39 {offsets = [0, 0], sizes = [8, 128], strides = [1, 1]} : vector<8x512xf32> to vector<8x128xf32>
    %41 = arith.negf %40 : vector<8x128xf32>
    %42 = math.exp %41 : vector<8x128xf32>
    %cst_14 = arith.constant 1.000000e+00 : f32
    %43 = vector.broadcast %cst_14 : f32 to vector<8x128xf32>
    %44 = arith.addf %43, %42 : vector<8x128xf32>
    %45 = arith.divf %43, %44 : vector<8x128xf32>
    %46 = vector.extract_strided_slice %39 {offsets = [0, 128], sizes = [8, 128], strides = [1, 1]} : vector<8x512xf32> to vector<8x128xf32>
    %47 = arith.negf %46 : vector<8x128xf32>
    %48 = math.exp %47 : vector<8x128xf32>
    %cst_15 = arith.constant 1.000000e+00 : f32
    %49 = vector.broadcast %cst_15 : f32 to vector<8x128xf32>
    %50 = arith.addf %49, %48 : vector<8x128xf32>
    %51 = arith.divf %49, %50 : vector<8x128xf32>
    %52 = vector.extract_strided_slice %39 {offsets = [0, 256], sizes = [8, 128], strides = [1, 1]} : vector<8x512xf32> to vector<8x128xf32>
    %53 = math.tanh %52 : vector<8x128xf32>
    %54 = vector.extract_strided_slice %39 {offsets = [0, 384], sizes = [8, 128], strides = [1, 1]} : vector<8x512xf32> to vector<8x128xf32>
    %55 = arith.negf %54 : vector<8x128xf32>
    %56 = math.exp %55 : vector<8x128xf32>
    %cst_16 = arith.constant 1.000000e+00 : f32
    %57 = vector.broadcast %cst_16 : f32 to vector<8x128xf32>
    %58 = arith.addf %57, %56 : vector<8x128xf32>
    %59 = arith.divf %57, %58 : vector<8x128xf32>
    %60 = arith.mulf %51, %34 : vector<8x128xf32>
    %61 = arith.mulf %45, %53 : vector<8x128xf32>
    %62 = arith.addf %60, %61 : vector<8x128xf32>
    %63 = math.tanh %62 : vector<8x128xf32>
    %64 = arith.mulf %59, %63 : vector<8x128xf32>
    %65 = vector.extract_strided_slice %6 {offsets = [16, 0], sizes = [8, 512], strides = [1, 1]} : vector<64x512xf32> to vector<8x512xf32>
    %cst_17 = arith.constant dense<0.000000e+00> : vector<8x512xf32>
    %66 = tpu.matmul %64, %2, %cst_17 {dimension_numbers = #tpu.dot_dimension_numbers<[1], [0], [0], [1], [0, 0, 1, 1], [], []>} : vector<8x128xf32>, vector<128x512xf32>, vector<8x512xf32> -> vector<8x512xf32>
    %67 = arith.addf %65, %66 : vector<8x512xf32>
    %68 = vector.extract_strided_slice %67 {offsets = [0, 0], sizes = [8, 128], strides = [1, 1]} : vector<8x512xf32> to vector<8x128xf32>
    %69 = arith.negf %68 : vector<8x128xf32>
    %70 = math.exp %69 : vector<8x128xf32>
    %cst_18 = arith.constant 1.000000e+00 : f32
    %71 = vector.broadcast %cst_18 : f32 to vector<8x128xf32>
    %72 = arith.addf %71, %70 : vector<8x128xf32>
    %73 = arith.divf %71, %72 : vector<8x128xf32>
    %74 = vector.extract_strided_slice %67 {offsets = [0, 128], sizes = [8, 128], strides = [1, 1]} : vector<8x512xf32> to vector<8x128xf32>
    %75 = arith.negf %74 : vector<8x128xf32>
    %76 = math.exp %75 : vector<8x128xf32>
    %cst_19 = arith.constant 1.000000e+00 : f32
    %77 = vector.broadcast %cst_19 : f32 to vector<8x128xf32>
    %78 = arith.addf %77, %76 : vector<8x128xf32>
    %79 = arith.divf %77, %78 : vector<8x128xf32>
    %80 = vector.extract_strided_slice %67 {offsets = [0, 256], sizes = [8, 128], strides = [1, 1]} : vector<8x512xf32> to vector<8x128xf32>
    %81 = math.tanh %80 : vector<8x128xf32>
    %82 = vector.extract_strided_slice %67 {offsets = [0, 384], sizes = [8, 128], strides = [1, 1]} : vector<8x512xf32> to vector<8x128xf32>
    %83 = arith.negf %82 : vector<8x128xf32>
    %84 = math.exp %83 : vector<8x128xf32>
    %cst_20 = arith.constant 1.000000e+00 : f32
    %85 = vector.broadcast %cst_20 : f32 to vector<8x128xf32>
    %86 = arith.addf %85, %84 : vector<8x128xf32>
    %87 = arith.divf %85, %86 : vector<8x128xf32>
    %88 = arith.mulf %79, %62 : vector<8x128xf32>
    %89 = arith.mulf %73, %81 : vector<8x128xf32>
    %90 = arith.addf %88, %89 : vector<8x128xf32>
    %91 = math.tanh %90 : vector<8x128xf32>
    %92 = arith.mulf %87, %91 : vector<8x128xf32>
    %93 = vector.extract_strided_slice %6 {offsets = [24, 0], sizes = [8, 512], strides = [1, 1]} : vector<64x512xf32> to vector<8x512xf32>
    %cst_21 = arith.constant dense<0.000000e+00> : vector<8x512xf32>
    %94 = tpu.matmul %92, %2, %cst_21 {dimension_numbers = #tpu.dot_dimension_numbers<[1], [0], [0], [1], [0, 0, 1, 1], [], []>} : vector<8x128xf32>, vector<128x512xf32>, vector<8x512xf32> -> vector<8x512xf32>
    %95 = arith.addf %93, %94 : vector<8x512xf32>
    %96 = vector.extract_strided_slice %95 {offsets = [0, 0], sizes = [8, 128], strides = [1, 1]} : vector<8x512xf32> to vector<8x128xf32>
    %97 = arith.negf %96 : vector<8x128xf32>
    %98 = math.exp %97 : vector<8x128xf32>
    %cst_22 = arith.constant 1.000000e+00 : f32
    %99 = vector.broadcast %cst_22 : f32 to vector<8x128xf32>
    %100 = arith.addf %99, %98 : vector<8x128xf32>
    %101 = arith.divf %99, %100 : vector<8x128xf32>
    %102 = vector.extract_strided_slice %95 {offsets = [0, 128], sizes = [8, 128], strides = [1, 1]} : vector<8x512xf32> to vector<8x128xf32>
    %103 = arith.negf %102 : vector<8x128xf32>
    %104 = math.exp %103 : vector<8x128xf32>
    %cst_23 = arith.constant 1.000000e+00 : f32
    %105 = vector.broadcast %cst_23 : f32 to vector<8x128xf32>
    %106 = arith.addf %105, %104 : vector<8x128xf32>
    %107 = arith.divf %105, %106 : vector<8x128xf32>
    %108 = vector.extract_strided_slice %95 {offsets = [0, 256], sizes = [8, 128], strides = [1, 1]} : vector<8x512xf32> to vector<8x128xf32>
    %109 = math.tanh %108 : vector<8x128xf32>
    %110 = vector.extract_strided_slice %95 {offsets = [0, 384], sizes = [8, 128], strides = [1, 1]} : vector<8x512xf32> to vector<8x128xf32>
    %111 = arith.negf %110 : vector<8x128xf32>
    %112 = math.exp %111 : vector<8x128xf32>
    %cst_24 = arith.constant 1.000000e+00 : f32
    %113 = vector.broadcast %cst_24 : f32 to vector<8x128xf32>
    %114 = arith.addf %113, %112 : vector<8x128xf32>
    %115 = arith.divf %113, %114 : vector<8x128xf32>
    %116 = arith.mulf %107, %90 : vector<8x128xf32>
    %117 = arith.mulf %101, %109 : vector<8x128xf32>
    %118 = arith.addf %116, %117 : vector<8x128xf32>
    %119 = math.tanh %118 : vector<8x128xf32>
    %120 = arith.mulf %115, %119 : vector<8x128xf32>
    %121 = vector.extract_strided_slice %6 {offsets = [32, 0], sizes = [8, 512], strides = [1, 1]} : vector<64x512xf32> to vector<8x512xf32>
    %cst_25 = arith.constant dense<0.000000e+00> : vector<8x512xf32>
    %122 = tpu.matmul %120, %2, %cst_25 {dimension_numbers = #tpu.dot_dimension_numbers<[1], [0], [0], [1], [0, 0, 1, 1], [], []>} : vector<8x128xf32>, vector<128x512xf32>, vector<8x512xf32> -> vector<8x512xf32>
    %123 = arith.addf %121, %122 : vector<8x512xf32>
    %124 = vector.extract_strided_slice %123 {offsets = [0, 0], sizes = [8, 128], strides = [1, 1]} : vector<8x512xf32> to vector<8x128xf32>
    %125 = arith.negf %124 : vector<8x128xf32>
    %126 = math.exp %125 : vector<8x128xf32>
    %cst_26 = arith.constant 1.000000e+00 : f32
    %127 = vector.broadcast %cst_26 : f32 to vector<8x128xf32>
    %128 = arith.addf %127, %126 : vector<8x128xf32>
    %129 = arith.divf %127, %128 : vector<8x128xf32>
    %130 = vector.extract_strided_slice %123 {offsets = [0, 128], sizes = [8, 128], strides = [1, 1]} : vector<8x512xf32> to vector<8x128xf32>
    %131 = arith.negf %130 : vector<8x128xf32>
    %132 = math.exp %131 : vector<8x128xf32>
    %cst_27 = arith.constant 1.000000e+00 : f32
    %133 = vector.broadcast %cst_27 : f32 to vector<8x128xf32>
    %134 = arith.addf %133, %132 : vector<8x128xf32>
    %135 = arith.divf %133, %134 : vector<8x128xf32>
    %136 = vector.extract_strided_slice %123 {offsets = [0, 256], sizes = [8, 128], strides = [1, 1]} : vector<8x512xf32> to vector<8x128xf32>
    %137 = math.tanh %136 : vector<8x128xf32>
    %138 = vector.extract_strided_slice %123 {offsets = [0, 384], sizes = [8, 128], strides = [1, 1]} : vector<8x512xf32> to vector<8x128xf32>
    %139 = arith.negf %138 : vector<8x128xf32>
    %140 = math.exp %139 : vector<8x128xf32>
    %cst_28 = arith.constant 1.000000e+00 : f32
    %141 = vector.broadcast %cst_28 : f32 to vector<8x128xf32>
    %142 = arith.addf %141, %140 : vector<8x128xf32>
    %143 = arith.divf %141, %142 : vector<8x128xf32>
    %144 = arith.mulf %135, %118 : vector<8x128xf32>
    %145 = arith.mulf %129, %137 : vector<8x128xf32>
    %146 = arith.addf %144, %145 : vector<8x128xf32>
    %147 = math.tanh %146 : vector<8x128xf32>
    %148 = arith.mulf %143, %147 : vector<8x128xf32>
    %149 = vector.extract_strided_slice %6 {offsets = [40, 0], sizes = [8, 512], strides = [1, 1]} : vector<64x512xf32> to vector<8x512xf32>
    %cst_29 = arith.constant dense<0.000000e+00> : vector<8x512xf32>
    %150 = tpu.matmul %148, %2, %cst_29 {dimension_numbers = #tpu.dot_dimension_numbers<[1], [0], [0], [1], [0, 0, 1, 1], [], []>} : vector<8x128xf32>, vector<128x512xf32>, vector<8x512xf32> -> vector<8x512xf32>
    %151 = arith.addf %149, %150 : vector<8x512xf32>
    %152 = vector.extract_strided_slice %151 {offsets = [0, 0], sizes = [8, 128], strides = [1, 1]} : vector<8x512xf32> to vector<8x128xf32>
    %153 = arith.negf %152 : vector<8x128xf32>
    %154 = math.exp %153 : vector<8x128xf32>
    %cst_30 = arith.constant 1.000000e+00 : f32
    %155 = vector.broadcast %cst_30 : f32 to vector<8x128xf32>
    %156 = arith.addf %155, %154 : vector<8x128xf32>
    %157 = arith.divf %155, %156 : vector<8x128xf32>
    %158 = vector.extract_strided_slice %151 {offsets = [0, 128], sizes = [8, 128], strides = [1, 1]} : vector<8x512xf32> to vector<8x128xf32>
    %159 = arith.negf %158 : vector<8x128xf32>
    %160 = math.exp %159 : vector<8x128xf32>
    %cst_31 = arith.constant 1.000000e+00 : f32
    %161 = vector.broadcast %cst_31 : f32 to vector<8x128xf32>
    %162 = arith.addf %161, %160 : vector<8x128xf32>
    %163 = arith.divf %161, %162 : vector<8x128xf32>
    %164 = vector.extract_strided_slice %151 {offsets = [0, 256], sizes = [8, 128], strides = [1, 1]} : vector<8x512xf32> to vector<8x128xf32>
    %165 = math.tanh %164 : vector<8x128xf32>
    %166 = vector.extract_strided_slice %151 {offsets = [0, 384], sizes = [8, 128], strides = [1, 1]} : vector<8x512xf32> to vector<8x128xf32>
    %167 = arith.negf %166 : vector<8x128xf32>
    %168 = math.exp %167 : vector<8x128xf32>
    %cst_32 = arith.constant 1.000000e+00 : f32
    %169 = vector.broadcast %cst_32 : f32 to vector<8x128xf32>
    %170 = arith.addf %169, %168 : vector<8x128xf32>
    %171 = arith.divf %169, %170 : vector<8x128xf32>
    %172 = arith.mulf %163, %146 : vector<8x128xf32>
    %173 = arith.mulf %157, %165 : vector<8x128xf32>
    %174 = arith.addf %172, %173 : vector<8x128xf32>
    %175 = math.tanh %174 : vector<8x128xf32>
    %176 = arith.mulf %171, %175 : vector<8x128xf32>
    %177 = vector.extract_strided_slice %6 {offsets = [48, 0], sizes = [8, 512], strides = [1, 1]} : vector<64x512xf32> to vector<8x512xf32>
    %cst_33 = arith.constant dense<0.000000e+00> : vector<8x512xf32>
    %178 = tpu.matmul %176, %2, %cst_33 {dimension_numbers = #tpu.dot_dimension_numbers<[1], [0], [0], [1], [0, 0, 1, 1], [], []>} : vector<8x128xf32>, vector<128x512xf32>, vector<8x512xf32> -> vector<8x512xf32>
    %179 = arith.addf %177, %178 : vector<8x512xf32>
    %180 = vector.extract_strided_slice %179 {offsets = [0, 0], sizes = [8, 128], strides = [1, 1]} : vector<8x512xf32> to vector<8x128xf32>
    %181 = arith.negf %180 : vector<8x128xf32>
    %182 = math.exp %181 : vector<8x128xf32>
    %cst_34 = arith.constant 1.000000e+00 : f32
    %183 = vector.broadcast %cst_34 : f32 to vector<8x128xf32>
    %184 = arith.addf %183, %182 : vector<8x128xf32>
    %185 = arith.divf %183, %184 : vector<8x128xf32>
    %186 = vector.extract_strided_slice %179 {offsets = [0, 128], sizes = [8, 128], strides = [1, 1]} : vector<8x512xf32> to vector<8x128xf32>
    %187 = arith.negf %186 : vector<8x128xf32>
    %188 = math.exp %187 : vector<8x128xf32>
    %cst_35 = arith.constant 1.000000e+00 : f32
    %189 = vector.broadcast %cst_35 : f32 to vector<8x128xf32>
    %190 = arith.addf %189, %188 : vector<8x128xf32>
    %191 = arith.divf %189, %190 : vector<8x128xf32>
    %192 = vector.extract_strided_slice %179 {offsets = [0, 256], sizes = [8, 128], strides = [1, 1]} : vector<8x512xf32> to vector<8x128xf32>
    %193 = math.tanh %192 : vector<8x128xf32>
    %194 = vector.extract_strided_slice %179 {offsets = [0, 384], sizes = [8, 128], strides = [1, 1]} : vector<8x512xf32> to vector<8x128xf32>
    %195 = arith.negf %194 : vector<8x128xf32>
    %196 = math.exp %195 : vector<8x128xf32>
    %cst_36 = arith.constant 1.000000e+00 : f32
    %197 = vector.broadcast %cst_36 : f32 to vector<8x128xf32>
    %198 = arith.addf %197, %196 : vector<8x128xf32>
    %199 = arith.divf %197, %198 : vector<8x128xf32>
    %200 = arith.mulf %191, %174 : vector<8x128xf32>
    %201 = arith.mulf %185, %193 : vector<8x128xf32>
    %202 = arith.addf %200, %201 : vector<8x128xf32>
    %203 = math.tanh %202 : vector<8x128xf32>
    %204 = arith.mulf %199, %203 : vector<8x128xf32>
    %205 = vector.extract_strided_slice %6 {offsets = [56, 0], sizes = [8, 512], strides = [1, 1]} : vector<64x512xf32> to vector<8x512xf32>
    %cst_37 = arith.constant dense<0.000000e+00> : vector<8x512xf32>
    %206 = tpu.matmul %204, %2, %cst_37 {dimension_numbers = #tpu.dot_dimension_numbers<[1], [0], [0], [1], [0, 0, 1, 1], [], []>} : vector<8x128xf32>, vector<128x512xf32>, vector<8x512xf32> -> vector<8x512xf32>
    %207 = arith.addf %205, %206 : vector<8x512xf32>
    %208 = vector.extract_strided_slice %207 {offsets = [0, 0], sizes = [8, 128], strides = [1, 1]} : vector<8x512xf32> to vector<8x128xf32>
    %209 = arith.negf %208 : vector<8x128xf32>
    %210 = math.exp %209 : vector<8x128xf32>
    %cst_38 = arith.constant 1.000000e+00 : f32
    %211 = vector.broadcast %cst_38 : f32 to vector<8x128xf32>
    %212 = arith.addf %211, %210 : vector<8x128xf32>
    %213 = arith.divf %211, %212 : vector<8x128xf32>
    %214 = vector.extract_strided_slice %207 {offsets = [0, 128], sizes = [8, 128], strides = [1, 1]} : vector<8x512xf32> to vector<8x128xf32>
    %215 = arith.negf %214 : vector<8x128xf32>
    %216 = math.exp %215 : vector<8x128xf32>
    %cst_39 = arith.constant 1.000000e+00 : f32
    %217 = vector.broadcast %cst_39 : f32 to vector<8x128xf32>
    %218 = arith.addf %217, %216 : vector<8x128xf32>
    %219 = arith.divf %217, %218 : vector<8x128xf32>
    %220 = vector.extract_strided_slice %207 {offsets = [0, 256], sizes = [8, 128], strides = [1, 1]} : vector<8x512xf32> to vector<8x128xf32>
    %221 = math.tanh %220 : vector<8x128xf32>
    %222 = vector.extract_strided_slice %207 {offsets = [0, 384], sizes = [8, 128], strides = [1, 1]} : vector<8x512xf32> to vector<8x128xf32>
    %223 = arith.negf %222 : vector<8x128xf32>
    %224 = math.exp %223 : vector<8x128xf32>
    %cst_40 = arith.constant 1.000000e+00 : f32
    %225 = vector.broadcast %cst_40 : f32 to vector<8x128xf32>
    %226 = arith.addf %225, %224 : vector<8x128xf32>
    %227 = arith.divf %225, %226 : vector<8x128xf32>
    %228 = arith.mulf %219, %202 : vector<8x128xf32>
    %229 = arith.mulf %213, %221 : vector<8x128xf32>
    %230 = arith.addf %228, %229 : vector<8x128xf32>
    %231 = math.tanh %230 : vector<8x128xf32>
    %232 = arith.mulf %227, %231 : vector<8x128xf32>
    %233 = tpu.concatenate %36, %64, %92, %120, %148, %176, %204, %232 in 0 : vector<8x128xf32>, vector<8x128xf32>, vector<8x128xf32>, vector<8x128xf32>, vector<8x128xf32>, vector<8x128xf32>, vector<8x128xf32>, vector<8x128xf32> -> vector<64x128xf32>
    %c0_41 = arith.constant 0 : index
    %c0_42 = arith.constant 0 : index
    %234 = vector.load %arg5[%c0_41, %c0_42] : memref<128x512xf32, #tpu.memory_space<vmem>>, vector<128x512xf32>
    %c0_43 = arith.constant 0 : index
    %c0_44 = arith.constant 0 : index
    %235 = vector.load %arg6[%c0_43, %c0_44] : memref<128x512xf32, #tpu.memory_space<vmem>>, vector<128x512xf32>
    %c0_45 = arith.constant 0 : index
    %c0_46 = arith.constant 0 : index
    %236 = vector.load %arg7[%c0_45, %c0_46] : memref<1x512xf32, #tpu.memory_space<vmem>>, vector<1x512xf32>
    %cst_47 = arith.constant dense<0.000000e+00> : vector<64x512xf32>
    %237 = tpu.matmul %233, %234, %cst_47 {dimension_numbers = #tpu.dot_dimension_numbers<[1], [0], [0], [1], [0, 0, 1, 1], [], []>} : vector<64x128xf32>, vector<128x512xf32>, vector<64x512xf32> -> vector<64x512xf32>
    %238 = vector.broadcast %236 : vector<1x512xf32> to vector<64x512xf32>
    %239 = arith.addf %237, %238 : vector<64x512xf32>
    %cst_48 = arith.constant 0.000000e+00 : f32
    %240 = vector.broadcast %cst_48 : f32 to vector<8x128xf32>
    %cst_49 = arith.constant 0.000000e+00 : f32
    %241 = vector.broadcast %cst_49 : f32 to vector<8x128xf32>
    %242 = vector.extract_strided_slice %239 {offsets = [0, 0], sizes = [8, 512], strides = [1, 1]} : vector<64x512xf32> to vector<8x512xf32>
    %cst_50 = arith.constant dense<0.000000e+00> : vector<8x512xf32>
    %243 = tpu.matmul %240, %235, %cst_50 {dimension_numbers = #tpu.dot_dimension_numbers<[1], [0], [0], [1], [0, 0, 1, 1], [], []>} : vector<8x128xf32>, vector<128x512xf32>, vector<8x512xf32> -> vector<8x512xf32>
    %244 = arith.addf %242, %243 : vector<8x512xf32>
    %245 = vector.extract_strided_slice %244 {offsets = [0, 0], sizes = [8, 128], strides = [1, 1]} : vector<8x512xf32> to vector<8x128xf32>
    %246 = arith.negf %245 : vector<8x128xf32>
    %247 = math.exp %246 : vector<8x128xf32>
    %cst_51 = arith.constant 1.000000e+00 : f32
    %248 = vector.broadcast %cst_51 : f32 to vector<8x128xf32>
    %249 = arith.addf %248, %247 : vector<8x128xf32>
    %250 = arith.divf %248, %249 : vector<8x128xf32>
    %251 = vector.extract_strided_slice %244 {offsets = [0, 128], sizes = [8, 128], strides = [1, 1]} : vector<8x512xf32> to vector<8x128xf32>
    %252 = arith.negf %251 : vector<8x128xf32>
    %253 = math.exp %252 : vector<8x128xf32>
    %cst_52 = arith.constant 1.000000e+00 : f32
    %254 = vector.broadcast %cst_52 : f32 to vector<8x128xf32>
    %255 = arith.addf %254, %253 : vector<8x128xf32>
    %256 = arith.divf %254, %255 : vector<8x128xf32>
    %257 = vector.extract_strided_slice %244 {offsets = [0, 256], sizes = [8, 128], strides = [1, 1]} : vector<8x512xf32> to vector<8x128xf32>
    %258 = math.tanh %257 : vector<8x128xf32>
    %259 = vector.extract_strided_slice %244 {offsets = [0, 384], sizes = [8, 128], strides = [1, 1]} : vector<8x512xf32> to vector<8x128xf32>
    %260 = arith.negf %259 : vector<8x128xf32>
    %261 = math.exp %260 : vector<8x128xf32>
    %cst_53 = arith.constant 1.000000e+00 : f32
    %262 = vector.broadcast %cst_53 : f32 to vector<8x128xf32>
    %263 = arith.addf %262, %261 : vector<8x128xf32>
    %264 = arith.divf %262, %263 : vector<8x128xf32>
    %265 = arith.mulf %256, %241 : vector<8x128xf32>
    %266 = arith.mulf %250, %258 : vector<8x128xf32>
    %267 = arith.addf %265, %266 : vector<8x128xf32>
    %268 = math.tanh %267 : vector<8x128xf32>
    %269 = arith.mulf %264, %268 : vector<8x128xf32>
    %270 = vector.extract_strided_slice %239 {offsets = [8, 0], sizes = [8, 512], strides = [1, 1]} : vector<64x512xf32> to vector<8x512xf32>
    %cst_54 = arith.constant dense<0.000000e+00> : vector<8x512xf32>
    %271 = tpu.matmul %269, %235, %cst_54 {dimension_numbers = #tpu.dot_dimension_numbers<[1], [0], [0], [1], [0, 0, 1, 1], [], []>} : vector<8x128xf32>, vector<128x512xf32>, vector<8x512xf32> -> vector<8x512xf32>
    %272 = arith.addf %270, %271 : vector<8x512xf32>
    %273 = vector.extract_strided_slice %272 {offsets = [0, 0], sizes = [8, 128], strides = [1, 1]} : vector<8x512xf32> to vector<8x128xf32>
    %274 = arith.negf %273 : vector<8x128xf32>
    %275 = math.exp %274 : vector<8x128xf32>
    %cst_55 = arith.constant 1.000000e+00 : f32
    %276 = vector.broadcast %cst_55 : f32 to vector<8x128xf32>
    %277 = arith.addf %276, %275 : vector<8x128xf32>
    %278 = arith.divf %276, %277 : vector<8x128xf32>
    %279 = vector.extract_strided_slice %272 {offsets = [0, 128], sizes = [8, 128], strides = [1, 1]} : vector<8x512xf32> to vector<8x128xf32>
    %280 = arith.negf %279 : vector<8x128xf32>
    %281 = math.exp %280 : vector<8x128xf32>
    %cst_56 = arith.constant 1.000000e+00 : f32
    %282 = vector.broadcast %cst_56 : f32 to vector<8x128xf32>
    %283 = arith.addf %282, %281 : vector<8x128xf32>
    %284 = arith.divf %282, %283 : vector<8x128xf32>
    %285 = vector.extract_strided_slice %272 {offsets = [0, 256], sizes = [8, 128], strides = [1, 1]} : vector<8x512xf32> to vector<8x128xf32>
    %286 = math.tanh %285 : vector<8x128xf32>
    %287 = vector.extract_strided_slice %272 {offsets = [0, 384], sizes = [8, 128], strides = [1, 1]} : vector<8x512xf32> to vector<8x128xf32>
    %288 = arith.negf %287 : vector<8x128xf32>
    %289 = math.exp %288 : vector<8x128xf32>
    %cst_57 = arith.constant 1.000000e+00 : f32
    %290 = vector.broadcast %cst_57 : f32 to vector<8x128xf32>
    %291 = arith.addf %290, %289 : vector<8x128xf32>
    %292 = arith.divf %290, %291 : vector<8x128xf32>
    %293 = arith.mulf %284, %267 : vector<8x128xf32>
    %294 = arith.mulf %278, %286 : vector<8x128xf32>
    %295 = arith.addf %293, %294 : vector<8x128xf32>
    %296 = math.tanh %295 : vector<8x128xf32>
    %297 = arith.mulf %292, %296 : vector<8x128xf32>
    %298 = vector.extract_strided_slice %239 {offsets = [16, 0], sizes = [8, 512], strides = [1, 1]} : vector<64x512xf32> to vector<8x512xf32>
    %cst_58 = arith.constant dense<0.000000e+00> : vector<8x512xf32>
    %299 = tpu.matmul %297, %235, %cst_58 {dimension_numbers = #tpu.dot_dimension_numbers<[1], [0], [0], [1], [0, 0, 1, 1], [], []>} : vector<8x128xf32>, vector<128x512xf32>, vector<8x512xf32> -> vector<8x512xf32>
    %300 = arith.addf %298, %299 : vector<8x512xf32>
    %301 = vector.extract_strided_slice %300 {offsets = [0, 0], sizes = [8, 128], strides = [1, 1]} : vector<8x512xf32> to vector<8x128xf32>
    %302 = arith.negf %301 : vector<8x128xf32>
    %303 = math.exp %302 : vector<8x128xf32>
    %cst_59 = arith.constant 1.000000e+00 : f32
    %304 = vector.broadcast %cst_59 : f32 to vector<8x128xf32>
    %305 = arith.addf %304, %303 : vector<8x128xf32>
    %306 = arith.divf %304, %305 : vector<8x128xf32>
    %307 = vector.extract_strided_slice %300 {offsets = [0, 128], sizes = [8, 128], strides = [1, 1]} : vector<8x512xf32> to vector<8x128xf32>
    %308 = arith.negf %307 : vector<8x128xf32>
    %309 = math.exp %308 : vector<8x128xf32>
    %cst_60 = arith.constant 1.000000e+00 : f32
    %310 = vector.broadcast %cst_60 : f32 to vector<8x128xf32>
    %311 = arith.addf %310, %309 : vector<8x128xf32>
    %312 = arith.divf %310, %311 : vector<8x128xf32>
    %313 = vector.extract_strided_slice %300 {offsets = [0, 256], sizes = [8, 128], strides = [1, 1]} : vector<8x512xf32> to vector<8x128xf32>
    %314 = math.tanh %313 : vector<8x128xf32>
    %315 = vector.extract_strided_slice %300 {offsets = [0, 384], sizes = [8, 128], strides = [1, 1]} : vector<8x512xf32> to vector<8x128xf32>
    %316 = arith.negf %315 : vector<8x128xf32>
    %317 = math.exp %316 : vector<8x128xf32>
    %cst_61 = arith.constant 1.000000e+00 : f32
    %318 = vector.broadcast %cst_61 : f32 to vector<8x128xf32>
    %319 = arith.addf %318, %317 : vector<8x128xf32>
    %320 = arith.divf %318, %319 : vector<8x128xf32>
    %321 = arith.mulf %312, %295 : vector<8x128xf32>
    %322 = arith.mulf %306, %314 : vector<8x128xf32>
    %323 = arith.addf %321, %322 : vector<8x128xf32>
    %324 = math.tanh %323 : vector<8x128xf32>
    %325 = arith.mulf %320, %324 : vector<8x128xf32>
    %326 = vector.extract_strided_slice %239 {offsets = [24, 0], sizes = [8, 512], strides = [1, 1]} : vector<64x512xf32> to vector<8x512xf32>
    %cst_62 = arith.constant dense<0.000000e+00> : vector<8x512xf32>
    %327 = tpu.matmul %325, %235, %cst_62 {dimension_numbers = #tpu.dot_dimension_numbers<[1], [0], [0], [1], [0, 0, 1, 1], [], []>} : vector<8x128xf32>, vector<128x512xf32>, vector<8x512xf32> -> vector<8x512xf32>
    %328 = arith.addf %326, %327 : vector<8x512xf32>
    %329 = vector.extract_strided_slice %328 {offsets = [0, 0], sizes = [8, 128], strides = [1, 1]} : vector<8x512xf32> to vector<8x128xf32>
    %330 = arith.negf %329 : vector<8x128xf32>
    %331 = math.exp %330 : vector<8x128xf32>
    %cst_63 = arith.constant 1.000000e+00 : f32
    %332 = vector.broadcast %cst_63 : f32 to vector<8x128xf32>
    %333 = arith.addf %332, %331 : vector<8x128xf32>
    %334 = arith.divf %332, %333 : vector<8x128xf32>
    %335 = vector.extract_strided_slice %328 {offsets = [0, 128], sizes = [8, 128], strides = [1, 1]} : vector<8x512xf32> to vector<8x128xf32>
    %336 = arith.negf %335 : vector<8x128xf32>
    %337 = math.exp %336 : vector<8x128xf32>
    %cst_64 = arith.constant 1.000000e+00 : f32
    %338 = vector.broadcast %cst_64 : f32 to vector<8x128xf32>
    %339 = arith.addf %338, %337 : vector<8x128xf32>
    %340 = arith.divf %338, %339 : vector<8x128xf32>
    %341 = vector.extract_strided_slice %328 {offsets = [0, 256], sizes = [8, 128], strides = [1, 1]} : vector<8x512xf32> to vector<8x128xf32>
    %342 = math.tanh %341 : vector<8x128xf32>
    %343 = vector.extract_strided_slice %328 {offsets = [0, 384], sizes = [8, 128], strides = [1, 1]} : vector<8x512xf32> to vector<8x128xf32>
    %344 = arith.negf %343 : vector<8x128xf32>
    %345 = math.exp %344 : vector<8x128xf32>
    %cst_65 = arith.constant 1.000000e+00 : f32
    %346 = vector.broadcast %cst_65 : f32 to vector<8x128xf32>
    %347 = arith.addf %346, %345 : vector<8x128xf32>
    %348 = arith.divf %346, %347 : vector<8x128xf32>
    %349 = arith.mulf %340, %323 : vector<8x128xf32>
    %350 = arith.mulf %334, %342 : vector<8x128xf32>
    %351 = arith.addf %349, %350 : vector<8x128xf32>
    %352 = math.tanh %351 : vector<8x128xf32>
    %353 = arith.mulf %348, %352 : vector<8x128xf32>
    %354 = vector.extract_strided_slice %239 {offsets = [32, 0], sizes = [8, 512], strides = [1, 1]} : vector<64x512xf32> to vector<8x512xf32>
    %cst_66 = arith.constant dense<0.000000e+00> : vector<8x512xf32>
    %355 = tpu.matmul %353, %235, %cst_66 {dimension_numbers = #tpu.dot_dimension_numbers<[1], [0], [0], [1], [0, 0, 1, 1], [], []>} : vector<8x128xf32>, vector<128x512xf32>, vector<8x512xf32> -> vector<8x512xf32>
    %356 = arith.addf %354, %355 : vector<8x512xf32>
    %357 = vector.extract_strided_slice %356 {offsets = [0, 0], sizes = [8, 128], strides = [1, 1]} : vector<8x512xf32> to vector<8x128xf32>
    %358 = arith.negf %357 : vector<8x128xf32>
    %359 = math.exp %358 : vector<8x128xf32>
    %cst_67 = arith.constant 1.000000e+00 : f32
    %360 = vector.broadcast %cst_67 : f32 to vector<8x128xf32>
    %361 = arith.addf %360, %359 : vector<8x128xf32>
    %362 = arith.divf %360, %361 : vector<8x128xf32>
    %363 = vector.extract_strided_slice %356 {offsets = [0, 128], sizes = [8, 128], strides = [1, 1]} : vector<8x512xf32> to vector<8x128xf32>
    %364 = arith.negf %363 : vector<8x128xf32>
    %365 = math.exp %364 : vector<8x128xf32>
    %cst_68 = arith.constant 1.000000e+00 : f32
    %366 = vector.broadcast %cst_68 : f32 to vector<8x128xf32>
    %367 = arith.addf %366, %365 : vector<8x128xf32>
    %368 = arith.divf %366, %367 : vector<8x128xf32>
    %369 = vector.extract_strided_slice %356 {offsets = [0, 256], sizes = [8, 128], strides = [1, 1]} : vector<8x512xf32> to vector<8x128xf32>
    %370 = math.tanh %369 : vector<8x128xf32>
    %371 = vector.extract_strided_slice %356 {offsets = [0, 384], sizes = [8, 128], strides = [1, 1]} : vector<8x512xf32> to vector<8x128xf32>
    %372 = arith.negf %371 : vector<8x128xf32>
    %373 = math.exp %372 : vector<8x128xf32>
    %cst_69 = arith.constant 1.000000e+00 : f32
    %374 = vector.broadcast %cst_69 : f32 to vector<8x128xf32>
    %375 = arith.addf %374, %373 : vector<8x128xf32>
    %376 = arith.divf %374, %375 : vector<8x128xf32>
    %377 = arith.mulf %368, %351 : vector<8x128xf32>
    %378 = arith.mulf %362, %370 : vector<8x128xf32>
    %379 = arith.addf %377, %378 : vector<8x128xf32>
    %380 = math.tanh %379 : vector<8x128xf32>
    %381 = arith.mulf %376, %380 : vector<8x128xf32>
    %382 = vector.extract_strided_slice %239 {offsets = [40, 0], sizes = [8, 512], strides = [1, 1]} : vector<64x512xf32> to vector<8x512xf32>
    %cst_70 = arith.constant dense<0.000000e+00> : vector<8x512xf32>
    %383 = tpu.matmul %381, %235, %cst_70 {dimension_numbers = #tpu.dot_dimension_numbers<[1], [0], [0], [1], [0, 0, 1, 1], [], []>} : vector<8x128xf32>, vector<128x512xf32>, vector<8x512xf32> -> vector<8x512xf32>
    %384 = arith.addf %382, %383 : vector<8x512xf32>
    %385 = vector.extract_strided_slice %384 {offsets = [0, 0], sizes = [8, 128], strides = [1, 1]} : vector<8x512xf32> to vector<8x128xf32>
    %386 = arith.negf %385 : vector<8x128xf32>
    %387 = math.exp %386 : vector<8x128xf32>
    %cst_71 = arith.constant 1.000000e+00 : f32
    %388 = vector.broadcast %cst_71 : f32 to vector<8x128xf32>
    %389 = arith.addf %388, %387 : vector<8x128xf32>
    %390 = arith.divf %388, %389 : vector<8x128xf32>
    %391 = vector.extract_strided_slice %384 {offsets = [0, 128], sizes = [8, 128], strides = [1, 1]} : vector<8x512xf32> to vector<8x128xf32>
    %392 = arith.negf %391 : vector<8x128xf32>
    %393 = math.exp %392 : vector<8x128xf32>
    %cst_72 = arith.constant 1.000000e+00 : f32
    %394 = vector.broadcast %cst_72 : f32 to vector<8x128xf32>
    %395 = arith.addf %394, %393 : vector<8x128xf32>
    %396 = arith.divf %394, %395 : vector<8x128xf32>
    %397 = vector.extract_strided_slice %384 {offsets = [0, 256], sizes = [8, 128], strides = [1, 1]} : vector<8x512xf32> to vector<8x128xf32>
    %398 = math.tanh %397 : vector<8x128xf32>
    %399 = vector.extract_strided_slice %384 {offsets = [0, 384], sizes = [8, 128], strides = [1, 1]} : vector<8x512xf32> to vector<8x128xf32>
    %400 = arith.negf %399 : vector<8x128xf32>
    %401 = math.exp %400 : vector<8x128xf32>
    %cst_73 = arith.constant 1.000000e+00 : f32
    %402 = vector.broadcast %cst_73 : f32 to vector<8x128xf32>
    %403 = arith.addf %402, %401 : vector<8x128xf32>
    %404 = arith.divf %402, %403 : vector<8x128xf32>
    %405 = arith.mulf %396, %379 : vector<8x128xf32>
    %406 = arith.mulf %390, %398 : vector<8x128xf32>
    %407 = arith.addf %405, %406 : vector<8x128xf32>
    %408 = math.tanh %407 : vector<8x128xf32>
    %409 = arith.mulf %404, %408 : vector<8x128xf32>
    %410 = vector.extract_strided_slice %239 {offsets = [48, 0], sizes = [8, 512], strides = [1, 1]} : vector<64x512xf32> to vector<8x512xf32>
    %cst_74 = arith.constant dense<0.000000e+00> : vector<8x512xf32>
    %411 = tpu.matmul %409, %235, %cst_74 {dimension_numbers = #tpu.dot_dimension_numbers<[1], [0], [0], [1], [0, 0, 1, 1], [], []>} : vector<8x128xf32>, vector<128x512xf32>, vector<8x512xf32> -> vector<8x512xf32>
    %412 = arith.addf %410, %411 : vector<8x512xf32>
    %413 = vector.extract_strided_slice %412 {offsets = [0, 0], sizes = [8, 128], strides = [1, 1]} : vector<8x512xf32> to vector<8x128xf32>
    %414 = arith.negf %413 : vector<8x128xf32>
    %415 = math.exp %414 : vector<8x128xf32>
    %cst_75 = arith.constant 1.000000e+00 : f32
    %416 = vector.broadcast %cst_75 : f32 to vector<8x128xf32>
    %417 = arith.addf %416, %415 : vector<8x128xf32>
    %418 = arith.divf %416, %417 : vector<8x128xf32>
    %419 = vector.extract_strided_slice %412 {offsets = [0, 128], sizes = [8, 128], strides = [1, 1]} : vector<8x512xf32> to vector<8x128xf32>
    %420 = arith.negf %419 : vector<8x128xf32>
    %421 = math.exp %420 : vector<8x128xf32>
    %cst_76 = arith.constant 1.000000e+00 : f32
    %422 = vector.broadcast %cst_76 : f32 to vector<8x128xf32>
    %423 = arith.addf %422, %421 : vector<8x128xf32>
    %424 = arith.divf %422, %423 : vector<8x128xf32>
    %425 = vector.extract_strided_slice %412 {offsets = [0, 256], sizes = [8, 128], strides = [1, 1]} : vector<8x512xf32> to vector<8x128xf32>
    %426 = math.tanh %425 : vector<8x128xf32>
    %427 = vector.extract_strided_slice %412 {offsets = [0, 384], sizes = [8, 128], strides = [1, 1]} : vector<8x512xf32> to vector<8x128xf32>
    %428 = arith.negf %427 : vector<8x128xf32>
    %429 = math.exp %428 : vector<8x128xf32>
    %cst_77 = arith.constant 1.000000e+00 : f32
    %430 = vector.broadcast %cst_77 : f32 to vector<8x128xf32>
    %431 = arith.addf %430, %429 : vector<8x128xf32>
    %432 = arith.divf %430, %431 : vector<8x128xf32>
    %433 = arith.mulf %424, %407 : vector<8x128xf32>
    %434 = arith.mulf %418, %426 : vector<8x128xf32>
    %435 = arith.addf %433, %434 : vector<8x128xf32>
    %436 = math.tanh %435 : vector<8x128xf32>
    %437 = arith.mulf %432, %436 : vector<8x128xf32>
    %438 = vector.extract_strided_slice %239 {offsets = [56, 0], sizes = [8, 512], strides = [1, 1]} : vector<64x512xf32> to vector<8x512xf32>
    %cst_78 = arith.constant dense<0.000000e+00> : vector<8x512xf32>
    %439 = tpu.matmul %437, %235, %cst_78 {dimension_numbers = #tpu.dot_dimension_numbers<[1], [0], [0], [1], [0, 0, 1, 1], [], []>} : vector<8x128xf32>, vector<128x512xf32>, vector<8x512xf32> -> vector<8x512xf32>
    %440 = arith.addf %438, %439 : vector<8x512xf32>
    %441 = vector.extract_strided_slice %440 {offsets = [0, 0], sizes = [8, 128], strides = [1, 1]} : vector<8x512xf32> to vector<8x128xf32>
    %442 = arith.negf %441 : vector<8x128xf32>
    %443 = math.exp %442 : vector<8x128xf32>
    %cst_79 = arith.constant 1.000000e+00 : f32
    %444 = vector.broadcast %cst_79 : f32 to vector<8x128xf32>
    %445 = arith.addf %444, %443 : vector<8x128xf32>
    %446 = arith.divf %444, %445 : vector<8x128xf32>
    %447 = vector.extract_strided_slice %440 {offsets = [0, 128], sizes = [8, 128], strides = [1, 1]} : vector<8x512xf32> to vector<8x128xf32>
    %448 = arith.negf %447 : vector<8x128xf32>
    %449 = math.exp %448 : vector<8x128xf32>
    %cst_80 = arith.constant 1.000000e+00 : f32
    %450 = vector.broadcast %cst_80 : f32 to vector<8x128xf32>
    %451 = arith.addf %450, %449 : vector<8x128xf32>
    %452 = arith.divf %450, %451 : vector<8x128xf32>
    %453 = vector.extract_strided_slice %440 {offsets = [0, 256], sizes = [8, 128], strides = [1, 1]} : vector<8x512xf32> to vector<8x128xf32>
    %454 = math.tanh %453 : vector<8x128xf32>
    %455 = vector.extract_strided_slice %440 {offsets = [0, 384], sizes = [8, 128], strides = [1, 1]} : vector<8x512xf32> to vector<8x128xf32>
    %456 = arith.negf %455 : vector<8x128xf32>
    %457 = math.exp %456 : vector<8x128xf32>
    %cst_81 = arith.constant 1.000000e+00 : f32
    %458 = vector.broadcast %cst_81 : f32 to vector<8x128xf32>
    %459 = arith.addf %458, %457 : vector<8x128xf32>
    %460 = arith.divf %458, %459 : vector<8x128xf32>
    %461 = arith.mulf %452, %435 : vector<8x128xf32>
    %462 = arith.mulf %446, %454 : vector<8x128xf32>
    %463 = arith.addf %461, %462 : vector<8x128xf32>
    %464 = math.tanh %463 : vector<8x128xf32>
    %465 = arith.mulf %460, %464 : vector<8x128xf32>
    %c0_82 = arith.constant 0 : index
    %c0_83 = arith.constant 0 : index
    %466 = vector.load %arg8[%c0_82, %c0_83] : memref<128x128xf32, #tpu.memory_space<vmem>>, vector<128x128xf32>
    %cst_84 = arith.constant dense<0.000000e+00> : vector<8x128xf32>
    %467 = tpu.matmul %465, %466, %cst_84 {dimension_numbers = #tpu.dot_dimension_numbers<[1], [0], [0], [1], [0, 0, 1, 1], [], []>} : vector<8x128xf32>, vector<128x128xf32>, vector<8x128xf32> -> vector<8x128xf32>
    %c0_85 = arith.constant 0 : index
    %c0_86 = arith.constant 0 : index
    %468 = vector.load %arg9[%c0_85, %c0_86] : memref<1x128xf32, #tpu.memory_space<vmem>>, vector<1x128xf32>
    %469 = vector.broadcast %468 : vector<1x128xf32> to vector<8x128xf32>
    %470 = arith.addf %467, %469 : vector<8x128xf32>
    %c0_87 = arith.constant 0 : index
    %c0_88 = arith.constant 0 : index
    %471 = vector.load %arg10[%c0_87, %c0_88] : memref<8x128xf32, #tpu.memory_space<vmem>>, vector<8x128xf32>
    tpu.vector_store %arg10[%c0_87, %c0_88], %470 {strides = array<i32>} : memref<8x128xf32, #tpu.memory_space<vmem>>, vector<8x128xf32>,
    return
  }
  func.func @transform_0(%arg0: i32) -> (i32, i32) {
    %c0_i32 = arith.constant 0 : i32
    %c0_i32_0 = arith.constant 0 : i32
    %c0_i32_1 = arith.constant 0 : i32
    return %c0_i32, %c0_i32_0 : i32, i32
  }
  func.func @transform_1(%arg0: i32) -> (i32, i32) {
    %c0_i32 = arith.constant 0 : i32
    %c0_i32_0 = arith.constant 0 : i32
    %c0_i32_1 = arith.constant 0 : i32
    return %c0_i32, %c0_i32_0 : i32, i32
  }
  func.func @transform_2(%arg0: i32) -> (i32, i32) {
    %c0_i32 = arith.constant 0 : i32
    %c0_i32_0 = arith.constant 0 : i32
    %c0_i32_1 = arith.constant 0 : i32
    return %c0_i32, %c0_i32_0 : i32, i32
  }
  func.func @transform_3(%arg0: i32) -> (i32, i32) {
    %c0_i32 = arith.constant 0 : i32
    %c0_i32_0 = arith.constant 0 : i32
    %c0_i32_1 = arith.constant 0 : i32
    return %c0_i32, %c0_i32_0 : i32, i32
  }
  func.func @transform_4(%arg0: i32) -> (i32, i32) {
    %c0_i32 = arith.constant 0 : i32
    %c0_i32_0 = arith.constant 0 : i32
    %c0_i32_1 = arith.constant 0 : i32
    return %c0_i32, %c0_i32_0 : i32, i32
  }
  func.func @transform_5(%arg0: i32) -> (i32, i32) {
    %c0_i32 = arith.constant 0 : i32
    %c0_i32_0 = arith.constant 0 : i32
    %c0_i32_1 = arith.constant 0 : i32
    return %c0_i32, %c0_i32_0 : i32, i32
  }
  func.func @transform_6(%arg0: i32) -> (i32, i32) {
    %c0_i32 = arith.constant 0 : i32
    %c0_i32_0 = arith.constant 0 : i32
    %c0_i32_1 = arith.constant 0 : i32
    return %c0_i32, %c0_i32_0 : i32, i32
  }
  func.func @transform_7(%arg0: i32) -> (i32, i32) {
    %c0_i32 = arith.constant 0 : i32
    %c0_i32_0 = arith.constant 0 : i32
    %c0_i32_1 = arith.constant 0 : i32
    return %c0_i32, %c0_i32_0 : i32, i32
  }
  func.func @transform_8(%arg0: i32) -> (i32, i32) {
    %c0_i32 = arith.constant 0 : i32
    %c0_i32_0 = arith.constant 0 : i32
    %c0_i32_1 = arith.constant 0 : i32
    return %c0_i32, %c0_i32_0 : i32, i32
  }
  func.func @transform_9(%arg0: i32) -> (i32, i32) {
    %c0_i32 = arith.constant 0 : i32
    %c0_i32_0 = arith.constant 0 : i32
    %c0_i32_1 = arith.constant 0 : i32
    return %c0_i32, %c0_i32_0 : i32, i32
  }
}

</mosaic_0001>

<llo_original>
// kernel: tpu_custom_call.1
$region0: #{tpu_custom_call.1}
  #allocation0 [shape = 'u32[]', space=smem, size = 0x4, offset = 0x4, fixed_abs, tag = 'smem constant byte address 0x4 - core index']
  #allocation1 [shape = 'u32[72,128]{1,0:T(1,128)}', space=vmem, size = 0x9000, scoped, tag = 'internal scratch']
  %s0 = inlined_call_operand.vmem [shape: f32[64,16], index: 0, kind: input, shape index: {}]
  %s1 = inlined_call_operand.vmem [shape: f32[16,512], index: 1, kind: input, shape index: {}]
  %s2 = inlined_call_operand.hbm [shape: f32[128,512], index: 2, kind: input, shape index: {}]
  %s3 = inlined_call_operand.vmem [shape: f32[1,512], index: 3, kind: input, shape index: {}]
  %s4 = inlined_call_operand.hbm [shape: f32[128,512], index: 4, kind: input, shape index: {}]
  %s5 = inlined_call_operand.hbm [shape: f32[128,512], index: 5, kind: input, shape index: {}]
  %s6 = inlined_call_operand.vmem [shape: f32[1,512], index: 6, kind: input, shape index: {}]
  %s7 = inlined_call_operand.hbm [shape: f32[128,128], index: 7, kind: input, shape index: {}]
  %s8 = inlined_call_operand.vmem [shape: f32[1,128], index: 8, kind: input, shape index: {}]
  %s9 = inlined_call_operand.hbm [shape: f32[8,128], index: 9, kind: output, shape index: {}]
  %s10 = sld [smem:[#allocation0]]
  $region62: #{tpu_custom_call.1} parent=0
    _
  %s12 = ssub.s32 1, %s10
  %s13 = scalar_select 0, %s12, %s10
  $region1: #{tpu_custom_call.1} parent=0
    #allocation2 [shape = 'u8[262144]{0}', space=vmem, size = 0x40000, scoped, tag = 'input window, operand 2, single buffered']
    #allocation3 [shape = 's32[1]{0}', space=sflag, size = 0x4, scoped, tag = 'scoped memory for tpu_custom_call.1']
    #allocation4 [shape = 's32[1]{0}', space=sflag, size = 0x4, scoped, tag = 'scoped memory for tpu_custom_call.1']
    #allocation5 [shape = 'u8[262144]{0}', space=vmem, size = 0x40000, scoped, tag = 'input window, operand 4, single buffered']
    #allocation6 [shape = 's32[1]{0}', space=sflag, size = 0x4, scoped, tag = 'scoped memory for tpu_custom_call.1']
    #allocation7 [shape = 'u8[262144]{0}', space=vmem, size = 0x40000, scoped, tag = 'input window, operand 5, single buffered']
    #allocation8 [shape = 'u8[65536]{0}', space=vmem, size = 0x10000, scoped, tag = 'input window, operand 7, single buffered']
    #allocation9 [shape = 's32[1]{0}', space=sflag, size = 0x4, scoped, tag = 'scoped memory for tpu_custom_call.1']
    #allocation10 [shape = 'u8[4096]{0}', space=vmem, size = 0x1000, scoped, tag = 'output window, operand 0, single buffered']
    %14 = vsyncpa [#allocation3], 0
    %15 = vsyncpa [#allocation6], 0
    %16 = vsyncpa [#allocation9], 0
    %17 = vsyncpa [#allocation4], 0
    // Predicated region
    $region2: #{tpu_custom_call.1} parent=1 // pred_check
      _
    $region3: #{tpu_custom_call.1} parent=1 // pred_check_branch
      %19 = sbr.rel (0) target = $region5
    $region4: #{tpu_custom_call.1} parent=1 // pred_region
      _
    $region5: #{tpu_custom_call.1} parent=1 // pred_fallthru
      _
    // Predicated region
    $region6: #{tpu_custom_call.1} parent=1 // pred_check
      _
    $region7: #{tpu_custom_call.1} parent=1 // pred_check_branch
      %21 = sbr.rel (0) target = $region9
    $region8: #{tpu_custom_call.1} parent=1 // pred_region
      _
    $region9: #{tpu_custom_call.1} parent=1 // pred_fallthru
      _
    // Predicated region
    $region10: #{tpu_custom_call.1} parent=1 // pred_check
      _
    $region11: #{tpu_custom_call.1} parent=1 // pred_check_branch
      %23 = sbr.rel (0) target = $region13
    $region12: #{tpu_custom_call.1} parent=1 // pred_region
      %25 = vsyncadd [#allocation3], 0
      %s26 = sshll.u32 %s2, 4
      %s27 = int_to_ptr.hbm [resolvable:$true] %s26
      %s28 = sshll.u32 [#allocation2], 4
      %s29 = int_to_ptr.vmem [resolvable:$true] %s28
      %34 = dma.hbm_to_vmem [thread:$0]  %s27, 8192, %s29, [#allocation3], 512, 512, 32
    $region13: #{tpu_custom_call.1} parent=1 // pred_fallthru
      _
    // Predicated region
    $region14: #{tpu_custom_call.1} parent=1 // pred_check
      _
    $region15: #{tpu_custom_call.1} parent=1 // pred_check_branch
      %36 = sbr.rel (0) target = $region17
    $region16: #{tpu_custom_call.1} parent=1 // pred_region
      _
    $region17: #{tpu_custom_call.1} parent=1 // pred_fallthru
      _
    // Predicated region
    $region18: #{tpu_custom_call.1} parent=1 // pred_check
      _
    $region19: #{tpu_custom_call.1} parent=1 // pred_check_branch
      %38 = sbr.rel (0) target = $region21
    $region20: #{tpu_custom_call.1} parent=1 // pred_region
      %40 = vsyncadd [#allocation6], 0
      %s41 = sshll.u32 %s4, 4
      %s42 = int_to_ptr.hbm [resolvable:$true] %s41
      %s43 = sshll.u32 [#allocation5], 4
      %s44 = int_to_ptr.vmem [resolvable:$true] %s43
      %49 = dma.hbm_to_vmem [thread:$0]  %s42, 8192, %s44, [#allocation6], 512, 512, 32
    $region21: #{tpu_custom_call.1} parent=1 // pred_fallthru
      _
    // Predicated region
    $region22: #{tpu_custom_call.1} parent=1 // pred_check
      _
    $region23: #{tpu_custom_call.1} parent=1 // pred_check_branch
      %51 = sbr.rel (0) target = $region25
    $region24: #{tpu_custom_call.1} parent=1 // pred_region
      %53 = vsyncadd [#allocation6], 0
      %s54 = sshll.u32 %s5, 4
      %s55 = int_to_ptr.hbm [resolvable:$true] %s54
      %s56 = sshll.u32 [#allocation7], 4
      %s57 = int_to_ptr.vmem [resolvable:$true] %s56
      %62 = dma.hbm_to_vmem [thread:$0]  %s55, 8192, %s57, [#allocation6], 512, 512, 32
    $region25: #{tpu_custom_call.1} parent=1 // pred_fallthru
      _
    // Predicated region
    $region26: #{tpu_custom_call.1} parent=1 // pred_check
      _
    $region27: #{tpu_custom_call.1} parent=1 // pred_check_branch
      %64 = sbr.rel (0) target = $region29
    $region28: #{tpu_custom_call.1} parent=1 // pred_region
      _
    $region29: #{tpu_custom_call.1} parent=1 // pred_fallthru
      _
    // Predicated region
    $region30: #{tpu_custom_call.1} parent=1 // pred_check
      _
    $region31: #{tpu_custom_call.1} parent=1 // pred_check_branch
      %66 = sbr.rel (0) target = $region33
    $region32: #{tpu_custom_call.1} parent=1 // pred_region
      %68 = vsyncadd [#allocation9], 0
      %s69 = sshll.u32 %s7, 4
      %s70 = int_to_ptr.hbm [resolvable:$true] %s69
      %s71 = sshll.u32 [#allocation8], 4
      %s72 = int_to_ptr.vmem [resolvable:$true] %s71
      %77 = dma.hbm_to_vmem [thread:$0]  %s70, 2048, %s72, [#allocation9], 128, 128, 8
    $region33: #{tpu_custom_call.1} parent=1 // pred_fallthru
      _
    // Predicated region
    $region34: #{tpu_custom_call.1} parent=1 // pred_check
      _
    $region35: #{tpu_custom_call.1} parent=1 // pred_check_branch
      %79 = sbr.rel (0) target = $region37
    $region36: #{tpu_custom_call.1} parent=1 // pred_region
      _
    $region37: #{tpu_custom_call.1} parent=1 // pred_fallthru
      _
    // Predicated region
    $region38: #{tpu_custom_call.1} parent=1 // pred_check
      _
    $region39: #{tpu_custom_call.1} parent=1 // pred_check_branch
      %81 = sbr.rel (0) target = $region41
    $region40: #{tpu_custom_call.1} parent=1 // pred_region
      %83 = dma.done [#allocation3], 8192
    $region41: #{tpu_custom_call.1} parent=1 // pred_fallthru
      _
    // Predicated region
    $region42: #{tpu_custom_call.1} parent=1 // pred_check
      _
    $region43: #{tpu_custom_call.1} parent=1 // pred_check_branch
      %85 = sbr.rel (0) target = $region45
    $region44: #{tpu_custom_call.1} parent=1 // pred_region
      %87 = dma.done [#allocation6], 8192
    $region45: #{tpu_custom_call.1} parent=1 // pred_fallthru
      _
    // Predicated region
    $region46: #{tpu_custom_call.1} parent=1 // pred_check
      _
    $region47: #{tpu_custom_call.1} parent=1 // pred_check_branch
      %89 = sbr.rel (0) target = $region49
    $region48: #{tpu_custom_call.1} parent=1 // pred_region
      %91 = dma.done [#allocation6], 8192
    $region49: #{tpu_custom_call.1} parent=1 // pred_fallthru
      _
    // Predicated region
    $region50: #{tpu_custom_call.1} parent=1 // pred_check
      _
    $region51: #{tpu_custom_call.1} parent=1 // pred_check_branch
      %93 = sbr.rel (0) target = $region53
    $region52: #{tpu_custom_call.1} parent=1 // pred_region
      %95 = dma.done [#allocation9], 2048
    $region53: #{tpu_custom_call.1} parent=1 // pred_fallthru
      _
    %v96 = vld [vmem:[%s0] sm:$0xff]
    %v97 = vld [vmem:[%s0 + $0x8] sm:$0xff]
    %v98 = vld [vmem:[%s0 + $0x10] sm:$0xff]
    %v99 = vld [vmem:[%s0 + $0x18] sm:$0xff]
    %v100 = vld [vmem:[%s0 + $0x20] sm:$0xff]
    %v101 = vld [vmem:[%s0 + $0x28] sm:$0xff]
    %v102 = vld [vmem:[%s0 + $0x30] sm:$0xff]
    %v103 = vld [vmem:[%s0 + $0x38] sm:$0xff]
    %v104 = vld [vmem:[%s1] sm:$0xff]
    %v105 = vld [vmem:[%s1 + $0x8] sm:$0xff]
    %v106 = vld [vmem:[%s1 + $0x10] sm:$0xff]
    %v107 = vld [vmem:[%s1 + $0x18] sm:$0xff]
    %v108 = vld [vmem:[%s1 + $0x20] sm:$0xff]
    %v109 = vld [vmem:[%s1 + $0x28] sm:$0xff]
    %v110 = vld [vmem:[%s1 + $0x30] sm:$0xff]
    %v111 = vld [vmem:[%s1 + $0x38] sm:$0xff]
    %v112 = vld [vmem:[#allocation2] sm:$0xff]
    %v113 = vld [vmem:[#allocation2 + $0x8] sm:$0xff]
    %v114 = vld [vmem:[#allocation2 + $0x10] sm:$0xff]
    %v115 = vld [vmem:[#allocation2 + $0x18] sm:$0xff]
    %v116 = vld [vmem:[#allocation2 + $0x20] sm:$0xff]
    %v117 = vld [vmem:[#allocation2 + $0x28] sm:$0xff]
    %v118 = vld [vmem:[#allocation2 + $0x30] sm:$0xff]
    %v119 = vld [vmem:[#allocation2 + $0x38] sm:$0xff]
    %v120 = vld [vmem:[#allocation2 + $0x40] sm:$0xff]
    %v121 = vld [vmem:[#allocation2 + $0x48] sm:$0xff]
    %v122 = vld [vmem:[#allocation2 + $0x50] sm:$0xff]
    %v123 = vld [vmem:[#allocation2 + $0x58] sm:$0xff]
    %v124 = vld [vmem:[#allocation2 + $0x60] sm:$0xff]
    %v125 = vld [vmem:[#allocation2 + $0x68] sm:$0xff]
    %v126 = vld [vmem:[#allocation2 + $0x70] sm:$0xff]
    %v127 = vld [vmem:[#allocation2 + $0x78] sm:$0xff]
    %v128 = vld [vmem:[#allocation2 + $0x80] sm:$0xff]
    %v129 = vld [vmem:[#allocation2 + $0x88] sm:$0xff]
    %v130 = vld [vmem:[#allocation2 + $0x90] sm:$0xff]
    %v131 = vld [vmem:[#allocation2 + $0x98] sm:$0xff]
    %v132 = vld [vmem:[#allocation2 + $0xa0] sm:$0xff]
    %v133 = vld [vmem:[#allocation2 + $0xa8] sm:$0xff]
    %v134 = vld [vmem:[#allocation2 + $0xb0] sm:$0xff]
    %v135 = vld [vmem:[#allocation2 + $0xb8] sm:$0xff]
    %v136 = vld [vmem:[#allocation2 + $0xc0] sm:$0xff]
    %v137 = vld [vmem:[#allocation2 + $0xc8] sm:$0xff]
    %v138 = vld [vmem:[#allocation2 + $0xd0] sm:$0xff]
    %v139 = vld [vmem:[#allocation2 + $0xd8] sm:$0xff]
    %v140 = vld [vmem:[#allocation2 + $0xe0] sm:$0xff]
    %v141 = vld [vmem:[#allocation2 + $0xe8] sm:$0xff]
    %v142 = vld [vmem:[#allocation2 + $0xf0] sm:$0xff]
    %v143 = vld [vmem:[#allocation2 + $0xf8] sm:$0xff]
    %v144 = vld [vmem:[#allocation2 + $0x100] sm:$0xff]
    %v145 = vld [vmem:[#allocation2 + $0x108] sm:$0xff]
    %v146 = vld [vmem:[#allocation2 + $0x110] sm:$0xff]
    %v147 = vld [vmem:[#allocation2 + $0x118] sm:$0xff]
    %v148 = vld [vmem:[#allocation2 + $0x120] sm:$0xff]
    %v149 = vld [vmem:[#allocation2 + $0x128] sm:$0xff]
    %v150 = vld [vmem:[#allocation2 + $0x130] sm:$0xff]
    %v151 = vld [vmem:[#allocation2 + $0x138] sm:$0xff]
    %v152 = vld [vmem:[#allocation2 + $0x140] sm:$0xff]
    %v153 = vld [vmem:[#allocation2 + $0x148] sm:$0xff]
    %v154 = vld [vmem:[#allocation2 + $0x150] sm:$0xff]
    %v155 = vld [vmem:[#allocation2 + $0x158] sm:$0xff]
    %v156 = vld [vmem:[#allocation2 + $0x160] sm:$0xff]
    %v157 = vld [vmem:[#allocation2 + $0x168] sm:$0xff]
    %v158 = vld [vmem:[#allocation2 + $0x170] sm:$0xff]
    %v159 = vld [vmem:[#allocation2 + $0x178] sm:$0xff]
    %v160 = vld [vmem:[#allocation2 + $0x180] sm:$0xff]
    %v161 = vld [vmem:[#allocation2 + $0x188] sm:$0xff]
    %v162 = vld [vmem:[#allocation2 + $0x190] sm:$0xff]
    %v163 = vld [vmem:[#allocation2 + $0x198] sm:$0xff]
    %v164 = vld [vmem:[#allocation2 + $0x1a0] sm:$0xff]
    %v165 = vld [vmem:[#allocation2 + $0x1a8] sm:$0xff]
    %v166 = vld [vmem:[#allocation2 + $0x1b0] sm:$0xff]
    %v167 = vld [vmem:[#allocation2 + $0x1b8] sm:$0xff]
    %v168 = vld [vmem:[#allocation2 + $0x1c0] sm:$0xff]
    %v169 = vld [vmem:[#allocation2 + $0x1c8] sm:$0xff]
    %v170 = vld [vmem:[#allocation2 + $0x1d0] sm:$0xff]
    %v171 = vld [vmem:[#allocation2 + $0x1d8] sm:$0xff]
    %v172 = vld [vmem:[#allocation2 + $0x1e0] sm:$0xff]
    %v173 = vld [vmem:[#allocation2 + $0x1e8] sm:$0xff]
    %v174 = vld [vmem:[#allocation2 + $0x1f0] sm:$0xff]
    %v175 = vld [vmem:[#allocation2 + $0x1f8] sm:$0xff]
    %v176 = vld [vmem:[%s3] sm:$0xf]
    %v178 = vperm.slane %v176, 0
    %v179 = vperm.slane %v176, 1
    %v180 = vperm.slane %v176, 2
    %v181 = vperm.slane %v176, 3
    %vm186 = vcmask 130048
    %v188 = vsel %vm186, %v96, 0
    %v191 = vsel %vm186, %v97, 0
    %v194 = vsel %vm186, %v98, 0
    %v197 = vsel %vm186, %v99, 0
    %v200 = vsel %vm186, %v100, 0
    %v203 = vsel %vm186, %v101, 0
    %v206 = vsel %vm186, %v102, 0
    %v209 = vsel %vm186, %v103, 0
    %211 = vmatpush.msra.mxu0 0.0
    %212 = vmatpush.msra.mxu0 0.0
    %213 = vmatpush.msra.mxu0 0.0
    %214 = vmatpush.msra.mxu0 0.0
    %215 = vmatpush.msra.mxu0 0.0
    %216 = vmatpush.msra.mxu0 0.0
    %217 = vmatpush.msra.mxu0 0.0
    %218 = vmatpush.msra.mxu0 0.0
    %219 = vmatpush.msra.mxu0 0.0
    %220 = vmatpush.msra.mxu0 0.0
    %221 = vmatpush.msra.mxu0 0.0
    %222 = vmatpush.msra.mxu0 0.0
    %223 = vmatpush.msra.mxu0 0.0
    %224 = vmatpush.msra.mxu0 0.0
    %225 = vmatpush.msra.mxu0 %v108
    %226 = vmatpush.msra.mxu0 %v104
    %227 = vmatmul.f32.gmra.mxu0 %v188
    %v228 = vpop.f32.mrf.mxu0
    %v229 = vadd.f32 %v178, %v228
    %230 = vmatmul.f32.gmra.mxu0 %v191
    %v231 = vpop.f32.mrf.mxu0
    %v232 = vadd.f32 %v178, %v231
    %233 = vmatmul.f32.gmra.mxu0 %v194
    %v234 = vpop.f32.mrf.mxu0
    %v235 = vadd.f32 %v178, %v234
    %236 = vmatmul.f32.gmra.mxu0 %v197
    %v237 = vpop.f32.mrf.mxu0
    %v238 = vadd.f32 %v178, %v237
    %239 = vmatmul.f32.gmra.mxu0 %v200
    %v240 = vpop.f32.mrf.mxu0
    %v241 = vadd.f32 %v178, %v240
    %242 = vmatmul.f32.gmra.mxu0 %v203
    %v243 = vpop.f32.mrf.mxu0
    %v244 = vadd.f32 %v178, %v243
    %245 = vmatmul.f32.gmra.mxu0 %v206
    %v246 = vpop.f32.mrf.mxu0
    %v247 = vadd.f32 %v178, %v246
    %248 = vmatmul.f32.gmra.mxu0 %v209
    %v249 = vpop.f32.mrf.mxu0
    %v250 = vadd.f32 %v178, %v249
    %251 = vdwg.mxu0
    %252 = vmatpush.msra.mxu0 0.0
    %253 = vmatpush.msra.mxu0 0.0
    %254 = vmatpush.msra.mxu0 0.0
    %255 = vmatpush.msra.mxu0 0.0
    %256 = vmatpush.msra.mxu0 0.0
    %257 = vmatpush.msra.mxu0 0.0
    %258 = vmatpush.msra.mxu0 0.0
    %259 = vmatpush.msra.mxu0 0.0
    %260 = vmatpush.msra.mxu0 0.0
    %261 = vmatpush.msra.mxu0 0.0
    %262 = vmatpush.msra.mxu0 0.0
    %263 = vmatpush.msra.mxu0 0.0
    %264 = vmatpush.msra.mxu0 0.0
    %265 = vmatpush.msra.mxu0 0.0
    %266 = vmatpush.msra.mxu0 %v109
    %267 = vmatpush.msra.mxu0 %v105
    %268 = vmatmul.f32.gmra.mxu0 %v188
    %v269 = vpop.f32.mrf.mxu0
    %v270 = vadd.f32 %v179, %v269
    %271 = vmatmul.f32.gmra.mxu0 %v191
    %v272 = vpop.f32.mrf.mxu0
    %v273 = vadd.f32 %v179, %v272
    %274 = vmatmul.f32.gmra.mxu0 %v194
    %v275 = vpop.f32.mrf.mxu0
    %v276 = vadd.f32 %v179, %v275
    %277 = vmatmul.f32.gmra.mxu0 %v197
    %v278 = vpop.f32.mrf.mxu0
    %v279 = vadd.f32 %v179, %v278
    %280 = vmatmul.f32.gmra.mxu0 %v200
    %v281 = vpop.f32.mrf.mxu0
    %v282 = vadd.f32 %v179, %v281
    %283 = vmatmul.f32.gmra.mxu0 %v203
    %v284 = vpop.f32.mrf.mxu0
    %v285 = vadd.f32 %v179, %v284
    %286 = vmatmul.f32.gmra.mxu0 %v206
    %v287 = vpop.f32.mrf.mxu0
    %v288 = vadd.f32 %v179, %v287
    %289 = vmatmul.f32.gmra.mxu0 %v209
    %v290 = vpop.f32.mrf.mxu0
    %v291 = vadd.f32 %v179, %v290
    %292 = vdwg.mxu0
    %293 = vmatpush.msra.mxu0 0.0
    %294 = vmatpush.msra.mxu0 0.0
    %295 = vmatpush.msra.mxu0 0.0
    %296 = vmatpush.msra.mxu0 0.0
    %297 = vmatpush.msra.mxu0 0.0
    %298 = vmatpush.msra.mxu0 0.0
    %299 = vmatpush.msra.mxu0 0.0
    %300 = vmatpush.msra.mxu0 0.0
    %301 = vmatpush.msra.mxu0 0.0
    %302 = vmatpush.msra.mxu0 0.0
    %303 = vmatpush.msra.mxu0 0.0
    %304 = vmatpush.msra.mxu0 0.0
    %305 = vmatpush.msra.mxu0 0.0
    %306 = vmatpush.msra.mxu0 0.0
    %307 = vmatpush.msra.mxu0 %v110
    %308 = vmatpush.msra.mxu0 %v106
    %309 = vmatmul.f32.gmra.mxu0 %v188
    %v310 = vpop.f32.mrf.mxu0
    %v311 = vadd.f32 %v180, %v310
    %312 = vmatmul.f32.gmra.mxu0 %v191
    %v313 = vpop.f32.mrf.mxu0
    %v314 = vadd.f32 %v180, %v313
    %315 = vmatmul.f32.gmra.mxu0 %v194
    %v316 = vpop.f32.mrf.mxu0
    %v317 = vadd.f32 %v180, %v316
    %318 = vmatmul.f32.gmra.mxu0 %v197
    %v319 = vpop.f32.mrf.mxu0
    %v320 = vadd.f32 %v180, %v319
    %321 = vmatmul.f32.gmra.mxu0 %v200
    %v322 = vpop.f32.mrf.mxu0
    %v323 = vadd.f32 %v180, %v322
    %324 = vmatmul.f32.gmra.mxu0 %v203
    %v325 = vpop.f32.mrf.mxu0
    %v326 = vadd.f32 %v180, %v325
    %327 = vmatmul.f32.gmra.mxu0 %v206
    %v328 = vpop.f32.mrf.mxu0
    %v329 = vadd.f32 %v180, %v328
    %330 = vmatmul.f32.gmra.mxu0 %v209
    %v331 = vpop.f32.mrf.mxu0
    %v332 = vadd.f32 %v180, %v331
    %333 = vdwg.mxu0
    %334 = vmatpush.msra.mxu0 0.0
    %335 = vmatpush.msra.mxu0 0.0
    %336 = vmatpush.msra.mxu0 0.0
    %337 = vmatpush.msra.mxu0 0.0
    %338 = vmatpush.msra.mxu0 0.0
    %339 = vmatpush.msra.mxu0 0.0
    %340 = vmatpush.msra.mxu0 0.0
    %341 = vmatpush.msra.mxu0 0.0
    %342 = vmatpush.msra.mxu0 0.0
    %343 = vmatpush.msra.mxu0 0.0
    %344 = vmatpush.msra.mxu0 0.0
    %345 = vmatpush.msra.mxu0 0.0
    %346 = vmatpush.msra.mxu0 0.0
    %347 = vmatpush.msra.mxu0 0.0
    %348 = vmatpush.msra.mxu0 %v111
    %349 = vmatpush.msra.mxu0 %v107
    %350 = vmatmul.f32.gmra.mxu0 %v188
    %v351 = vpop.f32.mrf.mxu0
    %v352 = vadd.f32 %v181, %v351
    %353 = vmatmul.f32.gmra.mxu0 %v191
    %v354 = vpop.f32.mrf.mxu0
    %v355 = vadd.f32 %v181, %v354
    %356 = vmatmul.f32.gmra.mxu0 %v194
    %v357 = vpop.f32.mrf.mxu0
    %v358 = vadd.f32 %v181, %v357
    %359 = vmatmul.f32.gmra.mxu0 %v197
    %v360 = vpop.f32.mrf.mxu0
    %v361 = vadd.f32 %v181, %v360
    %362 = vmatmul.f32.gmra.mxu0 %v200
    %v363 = vpop.f32.mrf.mxu0
    %v364 = vadd.f32 %v181, %v363
    %365 = vmatmul.f32.gmra.mxu0 %v203
    %v366 = vpop.f32.mrf.mxu0
    %v367 = vadd.f32 %v181, %v366
    %368 = vmatmul.f32.gmra.mxu0 %v206
    %v369 = vpop.f32.mrf.mxu0
    %v370 = vadd.f32 %v181, %v369
    %371 = vmatmul.f32.gmra.mxu0 %v209
    %v372 = vpop.f32.mrf.mxu0
    %v373 = vadd.f32 %v181, %v372
    %374 = vdwg.mxu0
    %375 = vmatpush.msra.mxu0 %v172
    %376 = vmatpush.msra.mxu0 %v168
    %377 = vmatpush.msra.mxu0 %v164
    %378 = vmatpush.msra.mxu0 %v160
    %379 = vmatpush.msra.mxu0 %v156
    %380 = vmatpush.msra.mxu0 %v152
    %381 = vmatpush.msra.mxu0 %v148
    %382 = vmatpush.msra.mxu0 %v144
    %383 = vmatpush.msra.mxu0 %v140
    %384 = vmatpush.msra.mxu0 %v136
    %385 = vmatpush.msra.mxu0 %v132
    %386 = vmatpush.msra.mxu0 %v128
    %387 = vmatpush.msra.mxu0 %v124
    %388 = vmatpush.msra.mxu0 %v120
    %389 = vmatpush.msra.mxu0 %v116
    %390 = vmatpush.msra.mxu0 %v112
    %391 = vmatmul.f32.gmra.mxu0 0.0
    %v392 = vpop.f32.mrf.mxu0
    %v393 = vadd.f32 0.0, %v392
    %394 = vdwg.mxu0
    %395 = vmatpush.msra.mxu0 %v173
    %396 = vmatpush.msra.mxu0 %v169
    %397 = vmatpush.msra.mxu0 %v165
    %398 = vmatpush.msra.mxu0 %v161
    %399 = vmatpush.msra.mxu0 %v157
    %400 = vmatpush.msra.mxu0 %v153
    %401 = vmatpush.msra.mxu0 %v149
    %402 = vmatpush.msra.mxu0 %v145
    %403 = vmatpush.msra.mxu0 %v141
    %404 = vmatpush.msra.mxu0 %v137
    %405 = vmatpush.msra.mxu0 %v133
    %406 = vmatpush.msra.mxu0 %v129
    %407 = vmatpush.msra.mxu0 %v125
    %408 = vmatpush.msra.mxu0 %v121
    %409 = vmatpush.msra.mxu0 %v117
    %410 = vmatpush.msra.mxu0 %v113
    %411 = vmatmul.f32.gmra.mxu0 0.0
    %v412 = vpop.f32.mrf.mxu0
    %v413 = vadd.f32 0.0, %v412
    %414 = vdwg.mxu0
    %415 = vmatpush.msra.mxu0 %v174
    %416 = vmatpush.msra.mxu0 %v170
    %417 = vmatpush.msra.mxu0 %v166
    %418 = vmatpush.msra.mxu0 %v162
    %419 = vmatpush.msra.mxu0 %v158
    %420 = vmatpush.msra.mxu0 %v154
    %421 = vmatpush.msra.mxu0 %v150
    %422 = vmatpush.msra.mxu0 %v146
    %423 = vmatpush.msra.mxu0 %v142
    %424 = vmatpush.msra.mxu0 %v138
    %425 = vmatpush.msra.mxu0 %v134
    %426 = vmatpush.msra.mxu0 %v130
    %427 = vmatpush.msra.mxu0 %v126
    %428 = vmatpush.msra.mxu0 %v122
    %429 = vmatpush.msra.mxu0 %v118
    %430 = vmatpush.msra.mxu0 %v114
    %431 = vmatmul.f32.gmra.mxu0 0.0
    %v432 = vpop.f32.mrf.mxu0
    %v433 = vadd.f32 0.0, %v432
    %434 = vdwg.mxu0
    %435 = vmatpush.msra.mxu0 %v175
    %436 = vmatpush.msra.mxu0 %v171
    %437 = vmatpush.msra.mxu0 %v167
    %438 = vmatpush.msra.mxu0 %v163
    %439 = vmatpush.msra.mxu0 %v159
    %440 = vmatpush.msra.mxu0 %v155
    %441 = vmatpush.msra.mxu0 %v151
    %442 = vmatpush.msra.mxu0 %v147
    %443 = vmatpush.msra.mxu0 %v143
    %444 = vmatpush.msra.mxu0 %v139
    %445 = vmatpush.msra.mxu0 %v135
    %446 = vmatpush.msra.mxu0 %v131
    %447 = vmatpush.msra.mxu0 %v127
    %448 = vmatpush.msra.mxu0 %v123
    %449 = vmatpush.msra.mxu0 %v119
    %450 = vmatpush.msra.mxu0 %v115
    %451 = vmatmul.f32.gmra.mxu0 0.0
    %v452 = vpop.f32.mrf.mxu0
    %v453 = vadd.f32 0.0, %v452
    %454 = vdwg.mxu0
    %v455 = vadd.f32 %v229, %v393
    %v456 = vadd.f32 %v270, %v413
    %v457 = vadd.f32 %v311, %v433
    %v458 = vadd.f32 %v352, %v453
    %v459 = vxor.u32 %v455, 2147483648
    %v460 = vmul.f32 %v459, 1.442695
    %v461 = vpow.pop %v460
    %v462 = vadd.f32 %v461, 1.0
    %v463 = vrcp.pop %v462
    %v464 = vmul.f32 %v462, %v463
    %v465 = vsub.f32 1.0, %v464
    %v466 = vmul.f32 %v463, %v465
    %v467 = vadd.f32 %v463, %v466
    %vm468 = vweird.f32 %v462
    %vm469 = vweird.f32 %v463
    %vm470 = vmor %vm468, %vm469
    %v471 = vsel %vm470, %v463, %v467
    %v472 = vand.u32 2147483647, %v462
    %vm473 = vcmp.eq.f32.partialorder %v472, 8.507059e+37
    %v474 = vand.u32 %v462, 2147483648
    %v475 = vor.u32 1.1754944e-38, %v474
    %v476 = vsel %vm473, %v475, %v471
    %v477 = vmul.f32 1.0, %v476
    %v478 = vxor.u32 %v456, 2147483648
    %v479 = vmul.f32 %v478, 1.442695
    %v480 = vpow.pop %v479
    %v481 = vadd.f32 %v480, 1.0
    %v482 = vrcp.pop %v481
    %v483 = vmul.f32 %v481, %v482
    %v484 = vsub.f32 1.0, %v483
    %v485 = vmul.f32 %v482, %v484
    %v486 = vadd.f32 %v482, %v485
    %vm487 = vweird.f32 %v481
    %vm488 = vweird.f32 %v482
    %vm489 = vmor %vm487, %vm488
    %v490 = vsel %vm489, %v482, %v486
    %v491 = vand.u32 2147483647, %v481
    %vm492 = vcmp.eq.f32.partialorder %v491, 8.507059e+37
    %v493 = vand.u32 %v481, 2147483648
    %v494 = vor.u32 1.1754944e-38, %v493
    %v495 = vsel %vm492, %v494, %v490
    %v496 = vmul.f32 1.0, %v495
    %v497 = vtanh.pop %v457
    %v498 = vxor.u32 %v458, 2147483648
    %v499 = vmul.f32 %v498, 1.442695
    %v500 = vpow.pop %v499
    %v501 = vadd.f32 %v500, 1.0
    %v502 = vrcp.pop %v501
    %v503 = vmul.f32 %v501, %v502
    %v504 = vsub.f32 1.0, %v503
    %v505 = vmul.f32 %v502, %v504
    %v506 = vadd.f32 %v502, %v505
    %vm507 = vweird.f32 %v501
    %vm508 = vweird.f32 %v502
    %vm509 = vmor %vm507, %vm508
    %v510 = vsel %vm509, %v502, %v506
    %v511 = vand.u32 2147483647, %v501
    %vm512 = vcmp.eq.f32.partialorder %v511, 8.507059e+37
    %v513 = vand.u32 %v501, 2147483648
    %v514 = vor.u32 1.1754944e-38, %v513
    %v515 = vsel %vm512, %v514, %v510
    %v516 = vmul.f32 1.0, %v515
    %v517 = vmul.f32 %v496, 0.0
    %v518 = vmul.f32 %v477, %v497
    %v519 = vadd.f32 %v517, %v518
    %v520 = vtanh.pop %v519
    %v521 = vmul.f32 %v516, %v520
    %522 = vmatpush.msra.mxu0 %v172
    %523 = vmatpush.msra.mxu0 %v168
    %524 = vmatpush.msra.mxu0 %v164
    %525 = vmatpush.msra.mxu0 %v160
    %526 = vmatpush.msra.mxu0 %v156
    %527 = vmatpush.msra.mxu0 %v152
    %528 = vmatpush.msra.mxu0 %v148
    %529 = vmatpush.msra.mxu0 %v144
    %530 = vmatpush.msra.mxu0 %v140
    %531 = vmatpush.msra.mxu0 %v136
    %532 = vmatpush.msra.mxu0 %v132
    %533 = vmatpush.msra.mxu0 %v128
    %534 = vmatpush.msra.mxu0 %v124
    %535 = vmatpush.msra.mxu0 %v120
    %536 = vmatpush.msra.mxu0 %v116
    %537 = vmatpush.msra.mxu0 %v112
    %538 = vmatmul.f32.gmra.mxu0 %v521
    %v539 = vpop.f32.mrf.mxu0
    %v540 = vadd.f32 0.0, %v539
    %541 = vdwg.mxu0
    %542 = vmatpush.msra.mxu0 %v173
    %543 = vmatpush.msra.mxu0 %v169
    %544 = vmatpush.msra.mxu0 %v165
    %545 = vmatpush.msra.mxu0 %v161
    %546 = vmatpush.msra.mxu0 %v157
    %547 = vmatpush.msra.mxu0 %v153
    %548 = vmatpush.msra.mxu0 %v149
    %549 = vmatpush.msra.mxu0 %v145
    %550 = vmatpush.msra.mxu0 %v141
    %551 = vmatpush.msra.mxu0 %v137
    %552 = vmatpush.msra.mxu0 %v133
    %553 = vmatpush.msra.mxu0 %v129
    %554 = vmatpush.msra.mxu0 %v125
    %555 = vmatpush.msra.mxu0 %v121
    %556 = vmatpush.msra.mxu0 %v117
    %557 = vmatpush.msra.mxu0 %v113
    %558 = vmatmul.f32.gmra.mxu0 %v521
    %v559 = vpop.f32.mrf.mxu0
    %v560 = vadd.f32 0.0, %v559
    %561 = vdwg.mxu0
    %562 = vmatpush.msra.mxu0 %v174
    %563 = vmatpush.msra.mxu0 %v170
    %564 = vmatpush.msra.mxu0 %v166
    %565 = vmatpush.msra.mxu0 %v162
    %566 = vmatpush.msra.mxu0 %v158
    %567 = vmatpush.msra.mxu0 %v154
    %568 = vmatpush.msra.mxu0 %v150
    %569 = vmatpush.msra.mxu0 %v146
    %570 = vmatpush.msra.mxu0 %v142
    %571 = vmatpush.msra.mxu0 %v138
    %572 = vmatpush.msra.mxu0 %v134
    %573 = vmatpush.msra.mxu0 %v130
    %574 = vmatpush.msra.mxu0 %v126
    %575 = vmatpush.msra.mxu0 %v122
    %576 = vmatpush.msra.mxu0 %v118
    %577 = vmatpush.msra.mxu0 %v114
    %578 = vmatmul.f32.gmra.mxu0 %v521
    %v579 = vpop.f32.mrf.mxu0
    %v580 = vadd.f32 0.0, %v579
    %581 = vdwg.mxu0
    %582 = vmatpush.msra.mxu0 %v175
    %583 = vmatpush.msra.mxu0 %v171
    %584 = vmatpush.msra.mxu0 %v167
    %585 = vmatpush.msra.mxu0 %v163
    %586 = vmatpush.msra.mxu0 %v159
    %587 = vmatpush.msra.mxu0 %v155
    %588 = vmatpush.msra.mxu0 %v151
    %589 = vmatpush.msra.mxu0 %v147
    %590 = vmatpush.msra.mxu0 %v143
    %591 = vmatpush.msra.mxu0 %v139
    %592 = vmatpush.msra.mxu0 %v135
    %593 = vmatpush.msra.mxu0 %v131
    %594 = vmatpush.msra.mxu0 %v127
    %595 = vmatpush.msra.mxu0 %v123
    %596 = vmatpush.msra.mxu0 %v119
    %597 = vmatpush.msra.mxu0 %v115
    %598 = vmatmul.f32.gmra.mxu0 %v521
    %v599 = vpop.f32.mrf.mxu0
    %v600 = vadd.f32 0.0, %v599
    %601 = vdwg.mxu0
    %v602 = vadd.f32 %v232, %v540
    %v603 = vadd.f32 %v273, %v560
    %v604 = vadd.f32 %v314, %v580
    %v605 = vadd.f32 %v355, %v600
    %v606 = vxor.u32 %v602, 2147483648
    %v607 = vmul.f32 %v606, 1.442695
    %v608 = vpow.pop %v607
    %v609 = vadd.f32 %v608, 1.0
    %v610 = vrcp.pop %v609
    %v611 = vmul.f32 %v609, %v610
    %v612 = vsub.f32 1.0, %v611
    %v613 = vmul.f32 %v610, %v612
    %v614 = vadd.f32 %v610, %v613
    %vm615 = vweird.f32 %v609
    %vm616 = vweird.f32 %v610
    %vm617 = vmor %vm615, %vm616
    %v618 = vsel %vm617, %v610, %v614
    %v619 = vand.u32 2147483647, %v609
    %vm620 = vcmp.eq.f32.partialorder %v619, 8.507059e+37
    %v621 = vand.u32 %v609, 2147483648
    %v622 = vor.u32 1.1754944e-38, %v621
    %v623 = vsel %vm620, %v622, %v618
    %v624 = vmul.f32 1.0, %v623
    %v625 = vxor.u32 %v603, 2147483648
    %v626 = vmul.f32 %v625, 1.442695
    %v627 = vpow.pop %v626
    %v628 = vadd.f32 %v627, 1.0
    %v629 = vrcp.pop %v628
    %v630 = vmul.f32 %v628, %v629
    %v631 = vsub.f32 1.0, %v630
    %v632 = vmul.f32 %v629, %v631
    %v633 = vadd.f32 %v629, %v632
    %vm634 = vweird.f32 %v628
    %vm635 = vweird.f32 %v629
    %vm636 = vmor %vm634, %vm635
    %v637 = vsel %vm636, %v629, %v633
    %v638 = vand.u32 2147483647, %v628
    %vm639 = vcmp.eq.f32.partialorder %v638, 8.507059e+37
    %v640 = vand.u32 %v628, 2147483648
    %v641 = vor.u32 1.1754944e-38, %v640
    %v642 = vsel %vm639, %v641, %v637
    %v643 = vmul.f32 1.0, %v642
    %v644 = vtanh.pop %v604
    %v645 = vxor.u32 %v605, 2147483648
    %v646 = vmul.f32 %v645, 1.442695
    %v647 = vpow.pop %v646
    %v648 = vadd.f32 %v647, 1.0
    %v649 = vrcp.pop %v648
    %v650 = vmul.f32 %v648, %v649
    %v651 = vsub.f32 1.0, %v650
    %v652 = vmul.f32 %v649, %v651
    %v653 = vadd.f32 %v649, %v652
    %vm654 = vweird.f32 %v648
    %vm655 = vweird.f32 %v649
    %vm656 = vmor %vm654, %vm655
    %v657 = vsel %vm656, %v649, %v653
    %v658 = vand.u32 2147483647, %v648
    %vm659 = vcmp.eq.f32.partialorder %v658, 8.507059e+37
    %v660 = vand.u32 %v648, 2147483648
    %v661 = vor.u32 1.1754944e-38, %v660
    %v662 = vsel %vm659, %v661, %v657
    %v663 = vmul.f32 1.0, %v662
    %v664 = vmul.f32 %v643, %v519
    %v665 = vmul.f32 %v624, %v644
    %v666 = vadd.f32 %v664, %v665
    %v667 = vtanh.pop %v666
    %v668 = vmul.f32 %v663, %v667
    %669 = vmatpush.msra.mxu0 %v172
    %670 = vmatpush.msra.mxu0 %v168
    %671 = vmatpush.msra.mxu0 %v164
    %672 = vmatpush.msra.mxu0 %v160
    %673 = vmatpush.msra.mxu0 %v156
    %674 = vmatpush.msra.mxu0 %v152
    %675 = vmatpush.msra.mxu0 %v148
    %676 = vmatpush.msra.mxu0 %v144
    %677 = vmatpush.msra.mxu0 %v140
    %678 = vmatpush.msra.mxu0 %v136
    %679 = vmatpush.msra.mxu0 %v132
    %680 = vmatpush.msra.mxu0 %v128
    %681 = vmatpush.msra.mxu0 %v124
    %682 = vmatpush.msra.mxu0 %v120
    %683 = vmatpush.msra.mxu0 %v116
    %684 = vmatpush.msra.mxu0 %v112
    %685 = vmatmul.f32.gmra.mxu0 %v668
    %v686 = vpop.f32.mrf.mxu0
    %v687 = vadd.f32 0.0, %v686
    %688 = vdwg.mxu0
    %689 = vmatpush.msra.mxu0 %v173
    %690 = vmatpush.msra.mxu0 %v169
    %691 = vmatpush.msra.mxu0 %v165
    %692 = vmatpush.msra.mxu0 %v161
    %693 = vmatpush.msra.mxu0 %v157
    %694 = vmatpush.msra.mxu0 %v153
    %695 = vmatpush.msra.mxu0 %v149
    %696 = vmatpush.msra.mxu0 %v145
    %697 = vmatpush.msra.mxu0 %v141
    %698 = vmatpush.msra.mxu0 %v137
    %699 = vmatpush.msra.mxu0 %v133
    %700 = vmatpush.msra.mxu0 %v129
    %701 = vmatpush.msra.mxu0 %v125
    %702 = vmatpush.msra.mxu0 %v121
    %703 = vmatpush.msra.mxu0 %v117
    %704 = vmatpush.msra.mxu0 %v113
    %705 = vmatmul.f32.gmra.mxu0 %v668
    %v706 = vpop.f32.mrf.mxu0
    %v707 = vadd.f32 0.0, %v706
    %708 = vdwg.mxu0
    %709 = vmatpush.msra.mxu0 %v174
    %710 = vmatpush.msra.mxu0 %v170
    %711 = vmatpush.msra.mxu0 %v166
    %712 = vmatpush.msra.mxu0 %v162
    %713 = vmatpush.msra.mxu0 %v158
    %714 = vmatpush.msra.mxu0 %v154
    %715 = vmatpush.msra.mxu0 %v150
    %716 = vmatpush.msra.mxu0 %v146
    %717 = vmatpush.msra.mxu0 %v142
    %718 = vmatpush.msra.mxu0 %v138
    %719 = vmatpush.msra.mxu0 %v134
    %720 = vmatpush.msra.mxu0 %v130
    %721 = vmatpush.msra.mxu0 %v126
    %722 = vmatpush.msra.mxu0 %v122
    %723 = vmatpush.msra.mxu0 %v118
    %724 = vmatpush.msra.mxu0 %v114
    %725 = vmatmul.f32.gmra.mxu0 %v668
    %v726 = vpop.f32.mrf.mxu0
    %v727 = vadd.f32 0.0, %v726
    %728 = vdwg.mxu0
    %729 = vmatpush.msra.mxu0 %v175
    %730 = vmatpush.msra.mxu0 %v171
    %731 = vmatpush.msra.mxu0 %v167
    %732 = vmatpush.msra.mxu0 %v163
    %733 = vmatpush.msra.mxu0 %v159
    %734 = vmatpush.msra.mxu0 %v155
    %735 = vmatpush.msra.mxu0 %v151
    %736 = vmatpush.msra.mxu0 %v147
    %737 = vmatpush.msra.mxu0 %v143
    %738 = vmatpush.msra.mxu0 %v139
    %739 = vmatpush.msra.mxu0 %v135
    %740 = vmatpush.msra.mxu0 %v131
    %741 = vmatpush.msra.mxu0 %v127
    %742 = vmatpush.msra.mxu0 %v123
    %743 = vmatpush.msra.mxu0 %v119
    %744 = vmatpush.msra.mxu0 %v115
    %745 = vmatmul.f32.gmra.mxu0 %v668
    %v746 = vpop.f32.mrf.mxu0
    %v747 = vadd.f32 0.0, %v746
    %748 = vdwg.mxu0
    %v749 = vadd.f32 %v235, %v687
    %v750 = vadd.f32 %v276, %v707
    %v751 = vadd.f32 %v317, %v727
    %v752 = vadd.f32 %v358, %v747
    %v753 = vxor.u32 %v749, 2147483648
    %v754 = vmul.f32 %v753, 1.442695
    %v755 = vpow.pop %v754
    %v756 = vadd.f32 %v755, 1.0
    %v757 = vrcp.pop %v756
    %v758 = vmul.f32 %v756, %v757
    %v759 = vsub.f32 1.0, %v758
    %v760 = vmul.f32 %v757, %v759
    %v761 = vadd.f32 %v757, %v760
    %vm762 = vweird.f32 %v756
    %vm763 = vweird.f32 %v757
    %vm764 = vmor %vm762, %vm763
    %v765 = vsel %vm764, %v757, %v761
    %v766 = vand.u32 2147483647, %v756
    %vm767 = vcmp.eq.f32.partialorder %v766, 8.507059e+37
    %v768 = vand.u32 %v756, 2147483648
    %v769 = vor.u32 1.1754944e-38, %v768
    %v770 = vsel %vm767, %v769, %v765
    %v771 = vmul.f32 1.0, %v770
    %v772 = vxor.u32 %v750, 2147483648
    %v773 = vmul.f32 %v772, 1.442695
    %v774 = vpow.pop %v773
    %v775 = vadd.f32 %v774, 1.0
    %v776 = vrcp.pop %v775
    %v777 = vmul.f32 %v775, %v776
    %v778 = vsub.f32 1.0, %v777
    %v779 = vmul.f32 %v776, %v778
    %v780 = vadd.f32 %v776, %v779
    %vm781 = vweird.f32 %v775
    %vm782 = vweird.f32 %v776
    %vm783 = vmor %vm781, %vm782
    %v784 = vsel %vm783, %v776, %v780
    %v785 = vand.u32 2147483647, %v775
    %vm786 = vcmp.eq.f32.partialorder %v785, 8.507059e+37
    %v787 = vand.u32 %v775, 2147483648
    %v788 = vor.u32 1.1754944e-38, %v787
    %v789 = vsel %vm786, %v788, %v784
    %v790 = vmul.f32 1.0, %v789
    %v791 = vtanh.pop %v751
    %v792 = vxor.u32 %v752, 2147483648
    %v793 = vmul.f32 %v792, 1.442695
    %v794 = vpow.pop %v793
    %v795 = vadd.f32 %v794, 1.0
    %v796 = vrcp.pop %v795
    %v797 = vmul.f32 %v795, %v796
    %v798 = vsub.f32 1.0, %v797
    %v799 = vmul.f32 %v796, %v798
    %v800 = vadd.f32 %v796, %v799
    %vm801 = vweird.f32 %v795
    %vm802 = vweird.f32 %v796
    %vm803 = vmor %vm801, %vm802
    %v804 = vsel %vm803, %v796, %v800
    %v805 = vand.u32 2147483647, %v795
    %vm806 = vcmp.eq.f32.partialorder %v805, 8.507059e+37
    %v807 = vand.u32 %v795, 2147483648
    %v808 = vor.u32 1.1754944e-38, %v807
    %v809 = vsel %vm806, %v808, %v804
    %v810 = vmul.f32 1.0, %v809
    %v811 = vmul.f32 %v790, %v666
    %v812 = vmul.f32 %v771, %v791
    %v813 = vadd.f32 %v811, %v812
    %v814 = vtanh.pop %v813
    %v815 = vmul.f32 %v810, %v814
    %816 = vmatpush.msra.mxu0 %v172
    %817 = vmatpush.msra.mxu0 %v168
    %818 = vmatpush.msra.mxu0 %v164
    %819 = vmatpush.msra.mxu0 %v160
    %820 = vmatpush.msra.mxu0 %v156
    %821 = vmatpush.msra.mxu0 %v152
    %822 = vmatpush.msra.mxu0 %v148
    %823 = vmatpush.msra.mxu0 %v144
    %824 = vmatpush.msra.mxu0 %v140
    %825 = vmatpush.msra.mxu0 %v136
    %826 = vmatpush.msra.mxu0 %v132
    %827 = vmatpush.msra.mxu0 %v128
    %828 = vmatpush.msra.mxu0 %v124
    %829 = vmatpush.msra.mxu0 %v120
    %830 = vmatpush.msra.mxu0 %v116
    %831 = vmatpush.msra.mxu0 %v112
    %832 = vmatmul.f32.gmra.mxu0 %v815
    %v833 = vpop.f32.mrf.mxu0
    %v834 = vadd.f32 0.0, %v833
    %835 = vdwg.mxu0
    %836 = vmatpush.msra.mxu0 %v173
    %837 = vmatpush.msra.mxu0 %v169
    %838 = vmatpush.msra.mxu0 %v165
    %839 = vmatpush.msra.mxu0 %v161
    %840 = vmatpush.msra.mxu0 %v157
    %841 = vmatpush.msra.mxu0 %v153
    %842 = vmatpush.msra.mxu0 %v149
    %843 = vmatpush.msra.mxu0 %v145
    %844 = vmatpush.msra.mxu0 %v141
    %845 = vmatpush.msra.mxu0 %v137
    %846 = vmatpush.msra.mxu0 %v133
    %847 = vmatpush.msra.mxu0 %v129
    %848 = vmatpush.msra.mxu0 %v125
    %849 = vmatpush.msra.mxu0 %v121
    %850 = vmatpush.msra.mxu0 %v117
    %851 = vmatpush.msra.mxu0 %v113
    %852 = vmatmul.f32.gmra.mxu0 %v815
    %v853 = vpop.f32.mrf.mxu0
    %v854 = vadd.f32 0.0, %v853
    %855 = vdwg.mxu0
    %856 = vmatpush.msra.mxu0 %v174
    %857 = vmatpush.msra.mxu0 %v170
    %858 = vmatpush.msra.mxu0 %v166
    %859 = vmatpush.msra.mxu0 %v162
    %860 = vmatpush.msra.mxu0 %v158
    %861 = vmatpush.msra.mxu0 %v154
    %862 = vmatpush.msra.mxu0 %v150
    %863 = vmatpush.msra.mxu0 %v146
    %864 = vmatpush.msra.mxu0 %v142
    %865 = vmatpush.msra.mxu0 %v138
    %866 = vmatpush.msra.mxu0 %v134
    %867 = vmatpush.msra.mxu0 %v130
    %868 = vmatpush.msra.mxu0 %v126
    %869 = vmatpush.msra.mxu0 %v122
    %870 = vmatpush.msra.mxu0 %v118
    %871 = vmatpush.msra.mxu0 %v114
    %872 = vmatmul.f32.gmra.mxu0 %v815
    %v873 = vpop.f32.mrf.mxu0
    %v874 = vadd.f32 0.0, %v873
    %875 = vdwg.mxu0
    %876 = vmatpush.msra.mxu0 %v175
    %877 = vmatpush.msra.mxu0 %v171
    %878 = vmatpush.msra.mxu0 %v167
    %879 = vmatpush.msra.mxu0 %v163
    %880 = vmatpush.msra.mxu0 %v159
    %881 = vmatpush.msra.mxu0 %v155
    %882 = vmatpush.msra.mxu0 %v151
    %883 = vmatpush.msra.mxu0 %v147
    %884 = vmatpush.msra.mxu0 %v143
    %885 = vmatpush.msra.mxu0 %v139
    %886 = vmatpush.msra.mxu0 %v135
    %887 = vmatpush.msra.mxu0 %v131
    %888 = vmatpush.msra.mxu0 %v127
    %889 = vmatpush.msra.mxu0 %v123
    %890 = vmatpush.msra.mxu0 %v119
    %891 = vmatpush.msra.mxu0 %v115
    %892 = vmatmul.f32.gmra.mxu0 %v815
    %v893 = vpop.f32.mrf.mxu0
    %v894 = vadd.f32 0.0, %v893
    %895 = vdwg.mxu0
    %v896 = vadd.f32 %v238, %v834
    %v897 = vadd.f32 %v279, %v854
    %v898 = vadd.f32 %v320, %v874
    %v899 = vadd.f32 %v361, %v894
    %v900 = vxor.u32 %v896, 2147483648
    %v901 = vmul.f32 %v900, 1.442695
    %v902 = vpow.pop %v901
    %v903 = vadd.f32 %v902, 1.0
    %v904 = vrcp.pop %v903
    %v905 = vmul.f32 %v903, %v904
    %v906 = vsub.f32 1.0, %v905
    %v907 = vmul.f32 %v904, %v906
    %v908 = vadd.f32 %v904, %v907
    %vm909 = vweird.f32 %v903
    %vm910 = vweird.f32 %v904
    %vm911 = vmor %vm909, %vm910
    %v912 = vsel %vm911, %v904, %v908
    %v913 = vand.u32 2147483647, %v903
    %vm914 = vcmp.eq.f32.partialorder %v913, 8.507059e+37
    %v915 = vand.u32 %v903, 2147483648
    %v916 = vor.u32 1.1754944e-38, %v915
    %v917 = vsel %vm914, %v916, %v912
    %v918 = vmul.f32 1.0, %v917
    %v919 = vxor.u32 %v897, 2147483648
    %v920 = vmul.f32 %v919, 1.442695
    %v921 = vpow.pop %v920
    %v922 = vadd.f32 %v921, 1.0
    %v923 = vrcp.pop %v922
    %v924 = vmul.f32 %v922, %v923
    %v925 = vsub.f32 1.0, %v924
    %v926 = vmul.f32 %v923, %v925
    %v927 = vadd.f32 %v923, %v926
    %vm928 = vweird.f32 %v922
    %vm929 = vweird.f32 %v923
    %vm930 = vmor %vm928, %vm929
    %v931 = vsel %vm930, %v923, %v927
    %v932 = vand.u32 2147483647, %v922
    %vm933 = vcmp.eq.f32.partialorder %v932, 8.507059e+37
    %v934 = vand.u32 %v922, 2147483648
    %v935 = vor.u32 1.1754944e-38, %v934
    %v936 = vsel %vm933, %v935, %v931
    %v937 = vmul.f32 1.0, %v936
    %v938 = vtanh.pop %v898
    %v939 = vxor.u32 %v899, 2147483648
    %v940 = vmul.f32 %v939, 1.442695
    %v941 = vpow.pop %v940
    %v942 = vadd.f32 %v941, 1.0
    %v943 = vrcp.pop %v942
    %v944 = vmul.f32 %v942, %v943
    %v945 = vsub.f32 1.0, %v944
    %v946 = vmul.f32 %v943, %v945
    %v947 = vadd.f32 %v943, %v946
    %vm948 = vweird.f32 %v942
    %vm949 = vweird.f32 %v943
    %vm950 = vmor %vm948, %vm949
    %v951 = vsel %vm950, %v943, %v947
    %v952 = vand.u32 2147483647, %v942
    %vm953 = vcmp.eq.f32.partialorder %v952, 8.507059e+37
    %v954 = vand.u32 %v942, 2147483648
    %v955 = vor.u32 1.1754944e-38, %v954
    %v956 = vsel %vm953, %v955, %v951
    %v957 = vmul.f32 1.0, %v956
    %v958 = vmul.f32 %v937, %v813
    %v959 = vmul.f32 %v918, %v938
    %v960 = vadd.f32 %v958, %v959
    %v961 = vtanh.pop %v960
    %v962 = vmul.f32 %v957, %v961
    %963 = vmatpush.msra.mxu0 %v172
    %964 = vmatpush.msra.mxu0 %v168
    %965 = vmatpush.msra.mxu0 %v164
    %966 = vmatpush.msra.mxu0 %v160
    %967 = vmatpush.msra.mxu0 %v156
    %968 = vmatpush.msra.mxu0 %v152
    %969 = vmatpush.msra.mxu0 %v148
    %970 = vmatpush.msra.mxu0 %v144
    %971 = vmatpush.msra.mxu0 %v140
    %972 = vmatpush.msra.mxu0 %v136
    %973 = vmatpush.msra.mxu0 %v132
    %974 = vmatpush.msra.mxu0 %v128
    %975 = vmatpush.msra.mxu0 %v124
    %976 = vmatpush.msra.mxu0 %v120
    %977 = vmatpush.msra.mxu0 %v116
    %978 = vmatpush.msra.mxu0 %v112
    %979 = vmatmul.f32.gmra.mxu0 %v962
    %v980 = vpop.f32.mrf.mxu0
    %v981 = vadd.f32 0.0, %v980
    %982 = vdwg.mxu0
    %983 = vmatpush.msra.mxu0 %v173
    %984 = vmatpush.msra.mxu0 %v169
    %985 = vmatpush.msra.mxu0 %v165
    %986 = vmatpush.msra.mxu0 %v161
    %987 = vmatpush.msra.mxu0 %v157
    %988 = vmatpush.msra.mxu0 %v153
    %989 = vmatpush.msra.mxu0 %v149
    %990 = vmatpush.msra.mxu0 %v145
    %991 = vmatpush.msra.mxu0 %v141
    %992 = vmatpush.msra.mxu0 %v137
    %993 = vmatpush.msra.mxu0 %v133
    %994 = vmatpush.msra.mxu0 %v129
    %995 = vmatpush.msra.mxu0 %v125
    %996 = vmatpush.msra.mxu0 %v121
    %997 = vmatpush.msra.mxu0 %v117
    %998 = vmatpush.msra.mxu0 %v113
    %999 = vmatmul.f32.gmra.mxu0 %v962
    %v1000 = vpop.f32.mrf.mxu0
    %v1001 = vadd.f32 0.0, %v1000
    %1002 = vdwg.mxu0
    %1003 = vmatpush.msra.mxu0 %v174
    %1004 = vmatpush.msra.mxu0 %v170
    %1005 = vmatpush.msra.mxu0 %v166
    %1006 = vmatpush.msra.mxu0 %v162
    %1007 = vmatpush.msra.mxu0 %v158
    %1008 = vmatpush.msra.mxu0 %v154
    %1009 = vmatpush.msra.mxu0 %v150
    %1010 = vmatpush.msra.mxu0 %v146
    %1011 = vmatpush.msra.mxu0 %v142
    %1012 = vmatpush.msra.mxu0 %v138
    %1013 = vmatpush.msra.mxu0 %v134
    %1014 = vmatpush.msra.mxu0 %v130
    %1015 = vmatpush.msra.mxu0 %v126
    %1016 = vmatpush.msra.mxu0 %v122
    %1017 = vmatpush.msra.mxu0 %v118
    %1018 = vmatpush.msra.mxu0 %v114
    %1019 = vmatmul.f32.gmra.mxu0 %v962
    %v1020 = vpop.f32.mrf.mxu0
    %v1021 = vadd.f32 0.0, %v1020
    %1022 = vdwg.mxu0
    %1023 = vmatpush.msra.mxu0 %v175
    %1024 = vmatpush.msra.mxu0 %v171
    %1025 = vmatpush.msra.mxu0 %v167
    %1026 = vmatpush.msra.mxu0 %v163
    %1027 = vmatpush.msra.mxu0 %v159
    %1028 = vmatpush.msra.mxu0 %v155
    %1029 = vmatpush.msra.mxu0 %v151
    %1030 = vmatpush.msra.mxu0 %v147
    %1031 = vmatpush.msra.mxu0 %v143
    %1032 = vmatpush.msra.mxu0 %v139
    %1033 = vmatpush.msra.mxu0 %v135
    %1034 = vmatpush.msra.mxu0 %v131
    %1035 = vmatpush.msra.mxu0 %v127
    %1036 = vmatpush.msra.mxu0 %v123
    %1037 = vmatpush.msra.mxu0 %v119
    %1038 = vmatpush.msra.mxu0 %v115
    %1039 = vmatmul.f32.gmra.mxu0 %v962
    %v1040 = vpop.f32.mrf.mxu0
    %v1041 = vadd.f32 0.0, %v1040
    %1042 = vdwg.mxu0
    %v1043 = vadd.f32 %v241, %v981
    %v1044 = vadd.f32 %v282, %v1001
    %v1045 = vadd.f32 %v323, %v1021
    %v1046 = vadd.f32 %v364, %v1041
    %v1047 = vxor.u32 %v1043, 2147483648
    %v1048 = vmul.f32 %v1047, 1.442695
    %v1049 = vpow.pop %v1048
    %v1050 = vadd.f32 %v1049, 1.0
    %v1051 = vrcp.pop %v1050
    %v1052 = vmul.f32 %v1050, %v1051
    %v1053 = vsub.f32 1.0, %v1052
    %v1054 = vmul.f32 %v1051, %v1053
    %v1055 = vadd.f32 %v1051, %v1054
    %vm1056 = vweird.f32 %v1050
    %vm1057 = vweird.f32 %v1051
    %vm1058 = vmor %vm1056, %vm1057
    %v1059 = vsel %vm1058, %v1051, %v1055
    %v1060 = vand.u32 2147483647, %v1050
    %vm1061 = vcmp.eq.f32.partialorder %v1060, 8.507059e+37
    %v1062 = vand.u32 %v1050, 2147483648
    %v1063 = vor.u32 1.1754944e-38, %v1062
    %v1064 = vsel %vm1061, %v1063, %v1059
    %v1065 = vmul.f32 1.0, %v1064
    %v1066 = vxor.u32 %v1044, 2147483648
    %v1067 = vmul.f32 %v1066, 1.442695
    %v1068 = vpow.pop %v1067
    %v1069 = vadd.f32 %v1068, 1.0
    %v1070 = vrcp.pop %v1069
    %v1071 = vmul.f32 %v1069, %v1070
    %v1072 = vsub.f32 1.0, %v1071
    %v1073 = vmul.f32 %v1070, %v1072
    %v1074 = vadd.f32 %v1070, %v1073
    %vm1075 = vweird.f32 %v1069
    %vm1076 = vweird.f32 %v1070
    %vm1077 = vmor %vm1075, %vm1076
    %v1078 = vsel %vm1077, %v1070, %v1074
    %v1079 = vand.u32 2147483647, %v1069
    %vm1080 = vcmp.eq.f32.partialorder %v1079, 8.507059e+37
    %v1081 = vand.u32 %v1069, 2147483648
    %v1082 = vor.u32 1.1754944e-38, %v1081
    %v1083 = vsel %vm1080, %v1082, %v1078
    %v1084 = vmul.f32 1.0, %v1083
    %v1085 = vtanh.pop %v1045
    %v1086 = vxor.u32 %v1046, 2147483648
    %v1087 = vmul.f32 %v1086, 1.442695
    %v1088 = vpow.pop %v1087
    %v1089 = vadd.f32 %v1088, 1.0
    %v1090 = vrcp.pop %v1089
    %v1091 = vmul.f32 %v1089, %v1090
    %v1092 = vsub.f32 1.0, %v1091
    %v1093 = vmul.f32 %v1090, %v1092
    %v1094 = vadd.f32 %v1090, %v1093
    %vm1095 = vweird.f32 %v1089
    %vm1096 = vweird.f32 %v1090
    %vm1097 = vmor %vm1095, %vm1096
    %v1098 = vsel %vm1097, %v1090, %v1094
    %v1099 = vand.u32 2147483647, %v1089
    %vm1100 = vcmp.eq.f32.partialorder %v1099, 8.507059e+37
    %v1101 = vand.u32 %v1089, 2147483648
    %v1102 = vor.u32 1.1754944e-38, %v1101
    %v1103 = vsel %vm1100, %v1102, %v1098
    %v1104 = vmul.f32 1.0, %v1103
    %v1105 = vmul.f32 %v1084, %v960
    %v1106 = vmul.f32 %v1065, %v1085
    %v1107 = vadd.f32 %v1105, %v1106
    %v1108 = vtanh.pop %v1107
    %v1109 = vmul.f32 %v1104, %v1108
    %1110 = vmatpush.msra.mxu0 %v172
    %1111 = vmatpush.msra.mxu0 %v168
    %1112 = vmatpush.msra.mxu0 %v164
    %1113 = vmatpush.msra.mxu0 %v160
    %1114 = vmatpush.msra.mxu0 %v156
    %1115 = vmatpush.msra.mxu0 %v152
    %1116 = vmatpush.msra.mxu0 %v148
    %1117 = vmatpush.msra.mxu0 %v144
    %1118 = vmatpush.msra.mxu0 %v140
    %1119 = vmatpush.msra.mxu0 %v136
    %1120 = vmatpush.msra.mxu0 %v132
    %1121 = vmatpush.msra.mxu0 %v128
    %1122 = vmatpush.msra.mxu0 %v124
    %1123 = vmatpush.msra.mxu0 %v120
    %1124 = vmatpush.msra.mxu0 %v116
    %1125 = vmatpush.msra.mxu0 %v112
    %1126 = vmatmul.f32.gmra.mxu0 %v1109
    %v1127 = vpop.f32.mrf.mxu0
    %v1128 = vadd.f32 0.0, %v1127
    %1129 = vdwg.mxu0
    %1130 = vmatpush.msra.mxu0 %v173
    %1131 = vmatpush.msra.mxu0 %v169
    %1132 = vmatpush.msra.mxu0 %v165
    %1133 = vmatpush.msra.mxu0 %v161
    %1134 = vmatpush.msra.mxu0 %v157
    %1135 = vmatpush.msra.mxu0 %v153
    %1136 = vmatpush.msra.mxu0 %v149
    %1137 = vmatpush.msra.mxu0 %v145
    %1138 = vmatpush.msra.mxu0 %v141
    %1139 = vmatpush.msra.mxu0 %v137
    %1140 = vmatpush.msra.mxu0 %v133
    %1141 = vmatpush.msra.mxu0 %v129
    %1142 = vmatpush.msra.mxu0 %v125
    %1143 = vmatpush.msra.mxu0 %v121
    %1144 = vmatpush.msra.mxu0 %v117
    %1145 = vmatpush.msra.mxu0 %v113
    %1146 = vmatmul.f32.gmra.mxu0 %v1109
    %v1147 = vpop.f32.mrf.mxu0
    %v1148 = vadd.f32 0.0, %v1147
    %1149 = vdwg.mxu0
    %1150 = vmatpush.msra.mxu0 %v174
    %1151 = vmatpush.msra.mxu0 %v170
    %1152 = vmatpush.msra.mxu0 %v166
    %1153 = vmatpush.msra.mxu0 %v162
    %1154 = vmatpush.msra.mxu0 %v158
    %1155 = vmatpush.msra.mxu0 %v154
    %1156 = vmatpush.msra.mxu0 %v150
    %1157 = vmatpush.msra.mxu0 %v146
    %1158 = vmatpush.msra.mxu0 %v142
    %1159 = vmatpush.msra.mxu0 %v138
    %1160 = vmatpush.msra.mxu0 %v134
    %1161 = vmatpush.msra.mxu0 %v130
    %1162 = vmatpush.msra.mxu0 %v126
    %1163 = vmatpush.msra.mxu0 %v122
    %1164 = vmatpush.msra.mxu0 %v118
    %1165 = vmatpush.msra.mxu0 %v114
    %1166 = vmatmul.f32.gmra.mxu0 %v1109
    %v1167 = vpop.f32.mrf.mxu0
    %v1168 = vadd.f32 0.0, %v1167
    %1169 = vdwg.mxu0
    %1170 = vmatpush.msra.mxu0 %v175
    %1171 = vmatpush.msra.mxu0 %v171
    %1172 = vmatpush.msra.mxu0 %v167
    %1173 = vmatpush.msra.mxu0 %v163
    %1174 = vmatpush.msra.mxu0 %v159
    %1175 = vmatpush.msra.mxu0 %v155
    %1176 = vmatpush.msra.mxu0 %v151
    %1177 = vmatpush.msra.mxu0 %v147
    %1178 = vmatpush.msra.mxu0 %v143
    %1179 = vmatpush.msra.mxu0 %v139
    %1180 = vmatpush.msra.mxu0 %v135
    %1181 = vmatpush.msra.mxu0 %v131
    %1182 = vmatpush.msra.mxu0 %v127
    %1183 = vmatpush.msra.mxu0 %v123
    %1184 = vmatpush.msra.mxu0 %v119
    %1185 = vmatpush.msra.mxu0 %v115
    %1186 = vmatmul.f32.gmra.mxu0 %v1109
    %v1187 = vpop.f32.mrf.mxu0
    %v1188 = vadd.f32 0.0, %v1187
    %1189 = vdwg.mxu0
    %v1190 = vadd.f32 %v244, %v1128
    %v1191 = vadd.f32 %v285, %v1148
    %v1192 = vadd.f32 %v326, %v1168
    %v1193 = vadd.f32 %v367, %v1188
    %v1194 = vxor.u32 %v1190, 2147483648
    %v1195 = vmul.f32 %v1194, 1.442695
    %v1196 = vpow.pop %v1195
    %v1197 = vadd.f32 %v1196, 1.0
    %v1198 = vrcp.pop %v1197
    %v1199 = vmul.f32 %v1197, %v1198
    %v1200 = vsub.f32 1.0, %v1199
    %v1201 = vmul.f32 %v1198, %v1200
    %v1202 = vadd.f32 %v1198, %v1201
    %vm1203 = vweird.f32 %v1197
    %vm1204 = vweird.f32 %v1198
    %vm1205 = vmor %vm1203, %vm1204
    %v1206 = vsel %vm1205, %v1198, %v1202
    %v1207 = vand.u32 2147483647, %v1197
    %vm1208 = vcmp.eq.f32.partialorder %v1207, 8.507059e+37
    %v1209 = vand.u32 %v1197, 2147483648
    %v1210 = vor.u32 1.1754944e-38, %v1209
    %v1211 = vsel %vm1208, %v1210, %v1206
    %v1212 = vmul.f32 1.0, %v1211
    %v1213 = vxor.u32 %v1191, 2147483648
    %v1214 = vmul.f32 %v1213, 1.442695
    %v1215 = vpow.pop %v1214
    %v1216 = vadd.f32 %v1215, 1.0
    %v1217 = vrcp.pop %v1216
    %v1218 = vmul.f32 %v1216, %v1217
    %v1219 = vsub.f32 1.0, %v1218
    %v1220 = vmul.f32 %v1217, %v1219
    %v1221 = vadd.f32 %v1217, %v1220
    %vm1222 = vweird.f32 %v1216
    %vm1223 = vweird.f32 %v1217
    %vm1224 = vmor %vm1222, %vm1223
    %v1225 = vsel %vm1224, %v1217, %v1221
    %v1226 = vand.u32 2147483647, %v1216
    %vm1227 = vcmp.eq.f32.partialorder %v1226, 8.507059e+37
    %v1228 = vand.u32 %v1216, 2147483648
    %v1229 = vor.u32 1.1754944e-38, %v1228
    %v1230 = vsel %vm1227, %v1229, %v1225
    %v1231 = vmul.f32 1.0, %v1230
    %v1232 = vtanh.pop %v1192
    %v1233 = vxor.u32 %v1193, 2147483648
    %v1234 = vmul.f32 %v1233, 1.442695
    %v1235 = vpow.pop %v1234
    %v1236 = vadd.f32 %v1235, 1.0
    %v1237 = vrcp.pop %v1236
    %v1238 = vmul.f32 %v1236, %v1237
    %v1239 = vsub.f32 1.0, %v1238
    %v1240 = vmul.f32 %v1237, %v1239
    %v1241 = vadd.f32 %v1237, %v1240
    %vm1242 = vweird.f32 %v1236
    %vm1243 = vweird.f32 %v1237
    %vm1244 = vmor %vm1242, %vm1243
    %v1245 = vsel %vm1244, %v1237, %v1241
    %v1246 = vand.u32 2147483647, %v1236
    %vm1247 = vcmp.eq.f32.partialorder %v1246, 8.507059e+37
    %v1248 = vand.u32 %v1236, 2147483648
    %v1249 = vor.u32 1.1754944e-38, %v1248
    %v1250 = vsel %vm1247, %v1249, %v1245
    %v1251 = vmul.f32 1.0, %v1250
    %v1252 = vmul.f32 %v1231, %v1107
    %v1253 = vmul.f32 %v1212, %v1232
    %v1254 = vadd.f32 %v1252, %v1253
    %v1255 = vtanh.pop %v1254
    %v1256 = vmul.f32 %v1251, %v1255
    %1257 = vmatpush.msra.mxu0 %v172
    %1258 = vmatpush.msra.mxu0 %v168
    %1259 = vmatpush.msra.mxu0 %v164
    %1260 = vmatpush.msra.mxu0 %v160
    %1261 = vmatpush.msra.mxu0 %v156
    %1262 = vmatpush.msra.mxu0 %v152
    %1263 = vmatpush.msra.mxu0 %v148
    %1264 = vmatpush.msra.mxu0 %v144
    %1265 = vmatpush.msra.mxu0 %v140
    %1266 = vmatpush.msra.mxu0 %v136
    %1267 = vmatpush.msra.mxu0 %v132
    %1268 = vmatpush.msra.mxu0 %v128
    %1269 = vmatpush.msra.mxu0 %v124
    %1270 = vmatpush.msra.mxu0 %v120
    %1271 = vmatpush.msra.mxu0 %v116
    %1272 = vmatpush.msra.mxu0 %v112
    %1273 = vmatmul.f32.gmra.mxu0 %v1256
    %v1274 = vpop.f32.mrf.mxu0
    %v1275 = vadd.f32 0.0, %v1274
    %1276 = vdwg.mxu0
    %1277 = vmatpush.msra.mxu0 %v173
    %1278 = vmatpush.msra.mxu0 %v169
    %1279 = vmatpush.msra.mxu0 %v165
    %1280 = vmatpush.msra.mxu0 %v161
    %1281 = vmatpush.msra.mxu0 %v157
    %1282 = vmatpush.msra.mxu0 %v153
    %1283 = vmatpush.msra.mxu0 %v149
    %1284 = vmatpush.msra.mxu0 %v145
    %1285 = vmatpush.msra.mxu0 %v141
    %1286 = vmatpush.msra.mxu0 %v137
    %1287 = vmatpush.msra.mxu0 %v133
    %1288 = vmatpush.msra.mxu0 %v129
    %1289 = vmatpush.msra.mxu0 %v125
    %1290 = vmatpush.msra.mxu0 %v121
    %1291 = vmatpush.msra.mxu0 %v117
    %1292 = vmatpush.msra.mxu0 %v113
    %1293 = vmatmul.f32.gmra.mxu0 %v1256
    %v1294 = vpop.f32.mrf.mxu0
    %v1295 = vadd.f32 0.0, %v1294
    %1296 = vdwg.mxu0
    %1297 = vmatpush.msra.mxu0 %v174
    %1298 = vmatpush.msra.mxu0 %v170
    %1299 = vmatpush.msra.mxu0 %v166
    %1300 = vmatpush.msra.mxu0 %v162
    %1301 = vmatpush.msra.mxu0 %v158
    %1302 = vmatpush.msra.mxu0 %v154
    %1303 = vmatpush.msra.mxu0 %v150
    %1304 = vmatpush.msra.mxu0 %v146
    %1305 = vmatpush.msra.mxu0 %v142
    %1306 = vmatpush.msra.mxu0 %v138
    %1307 = vmatpush.msra.mxu0 %v134
    %1308 = vmatpush.msra.mxu0 %v130
    %1309 = vmatpush.msra.mxu0 %v126
    %1310 = vmatpush.msra.mxu0 %v122
    %1311 = vmatpush.msra.mxu0 %v118
    %1312 = vmatpush.msra.mxu0 %v114
    %1313 = vmatmul.f32.gmra.mxu0 %v1256
    %v1314 = vpop.f32.mrf.mxu0
    %v1315 = vadd.f32 0.0, %v1314
    %1316 = vdwg.mxu0
    %1317 = vmatpush.msra.mxu0 %v175
    %1318 = vmatpush.msra.mxu0 %v171
    %1319 = vmatpush.msra.mxu0 %v167
    %1320 = vmatpush.msra.mxu0 %v163
    %1321 = vmatpush.msra.mxu0 %v159
    %1322 = vmatpush.msra.mxu0 %v155
    %1323 = vmatpush.msra.mxu0 %v151
    %1324 = vmatpush.msra.mxu0 %v147
    %1325 = vmatpush.msra.mxu0 %v143
    %1326 = vmatpush.msra.mxu0 %v139
    %1327 = vmatpush.msra.mxu0 %v135
    %1328 = vmatpush.msra.mxu0 %v131
    %1329 = vmatpush.msra.mxu0 %v127
    %1330 = vmatpush.msra.mxu0 %v123
    %1331 = vmatpush.msra.mxu0 %v119
    %1332 = vmatpush.msra.mxu0 %v115
    %1333 = vmatmul.f32.gmra.mxu0 %v1256
    %v1334 = vpop.f32.mrf.mxu0
    %v1335 = vadd.f32 0.0, %v1334
    %1336 = vdwg.mxu0
    %v1337 = vadd.f32 %v247, %v1275
    %v1338 = vadd.f32 %v288, %v1295
    %v1339 = vadd.f32 %v329, %v1315
    %v1340 = vadd.f32 %v370, %v1335
    %v1341 = vxor.u32 %v1337, 2147483648
    %v1342 = vmul.f32 %v1341, 1.442695
    %v1343 = vpow.pop %v1342
    %v1344 = vadd.f32 %v1343, 1.0
    %v1345 = vrcp.pop %v1344
    %v1346 = vmul.f32 %v1344, %v1345
    %v1347 = vsub.f32 1.0, %v1346
    %v1348 = vmul.f32 %v1345, %v1347
    %v1349 = vadd.f32 %v1345, %v1348
    %vm1350 = vweird.f32 %v1344
    %vm1351 = vweird.f32 %v1345
    %vm1352 = vmor %vm1350, %vm1351
    %v1353 = vsel %vm1352, %v1345, %v1349
    %v1354 = vand.u32 2147483647, %v1344
    %vm1355 = vcmp.eq.f32.partialorder %v1354, 8.507059e+37
    %v1356 = vand.u32 %v1344, 2147483648
    %v1357 = vor.u32 1.1754944e-38, %v1356
    %v1358 = vsel %vm1355, %v1357, %v1353
    %v1359 = vmul.f32 1.0, %v1358
    %v1360 = vxor.u32 %v1338, 2147483648
    %v1361 = vmul.f32 %v1360, 1.442695
    %v1362 = vpow.pop %v1361
    %v1363 = vadd.f32 %v1362, 1.0
    %v1364 = vrcp.pop %v1363
    %v1365 = vmul.f32 %v1363, %v1364
    %v1366 = vsub.f32 1.0, %v1365
    %v1367 = vmul.f32 %v1364, %v1366
    %v1368 = vadd.f32 %v1364, %v1367
    %vm1369 = vweird.f32 %v1363
    %vm1370 = vweird.f32 %v1364
    %vm1371 = vmor %vm1369, %vm1370
    %v1372 = vsel %vm1371, %v1364, %v1368
    %v1373 = vand.u32 2147483647, %v1363
    %vm1374 = vcmp.eq.f32.partialorder %v1373, 8.507059e+37
    %v1375 = vand.u32 %v1363, 2147483648
    %v1376 = vor.u32 1.1754944e-38, %v1375
    %v1377 = vsel %vm1374, %v1376, %v1372
    %v1378 = vmul.f32 1.0, %v1377
    %v1379 = vtanh.pop %v1339
    %v1380 = vxor.u32 %v1340, 2147483648
    %v1381 = vmul.f32 %v1380, 1.442695
    %v1382 = vpow.pop %v1381
    %v1383 = vadd.f32 %v1382, 1.0
    %v1384 = vrcp.pop %v1383
    %v1385 = vmul.f32 %v1383, %v1384
    %v1386 = vsub.f32 1.0, %v1385
    %v1387 = vmul.f32 %v1384, %v1386
    %v1388 = vadd.f32 %v1384, %v1387
    %vm1389 = vweird.f32 %v1383
    %vm1390 = vweird.f32 %v1384
    %vm1391 = vmor %vm1389, %vm1390
    %v1392 = vsel %vm1391, %v1384, %v1388
    %v1393 = vand.u32 2147483647, %v1383
    %vm1394 = vcmp.eq.f32.partialorder %v1393, 8.507059e+37
    %v1395 = vand.u32 %v1383, 2147483648
    %v1396 = vor.u32 1.1754944e-38, %v1395
    %v1397 = vsel %vm1394, %v1396, %v1392
    %v1398 = vmul.f32 1.0, %v1397
    %v1399 = vmul.f32 %v1378, %v1254
    %v1400 = vmul.f32 %v1359, %v1379
    %v1401 = vadd.f32 %v1399, %v1400
    %v1402 = vtanh.pop %v1401
    %v1403 = vmul.f32 %v1398, %v1402
    %1404 = vmatpush.msra.mxu0 %v172
    %1405 = vmatpush.msra.mxu0 %v168
    %1406 = vmatpush.msra.mxu0 %v164
    %1407 = vmatpush.msra.mxu0 %v160
    %1408 = vmatpush.msra.mxu0 %v156
    %1409 = vmatpush.msra.mxu0 %v152
    %1410 = vmatpush.msra.mxu0 %v148
    %1411 = vmatpush.msra.mxu0 %v144
    %1412 = vmatpush.msra.mxu0 %v140
    %1413 = vmatpush.msra.mxu0 %v136
    %1414 = vmatpush.msra.mxu0 %v132
    %1415 = vmatpush.msra.mxu0 %v128
    %1416 = vmatpush.msra.mxu0 %v124
    %1417 = vmatpush.msra.mxu0 %v120
    %1418 = vmatpush.msra.mxu0 %v116
    %1419 = vmatpush.msra.mxu0 %v112
    %1420 = vmatmul.f32.gmra.mxu0 %v1403
    %v1421 = vpop.f32.mrf.mxu0
    %v1422 = vadd.f32 0.0, %v1421
    %1423 = vdwg.mxu0
    %1424 = vmatpush.msra.mxu0 %v173
    %1425 = vmatpush.msra.mxu0 %v169
    %1426 = vmatpush.msra.mxu0 %v165
    %1427 = vmatpush.msra.mxu0 %v161
    %1428 = vmatpush.msra.mxu0 %v157
    %1429 = vmatpush.msra.mxu0 %v153
    %1430 = vmatpush.msra.mxu0 %v149
    %1431 = vmatpush.msra.mxu0 %v145
    %1432 = vmatpush.msra.mxu0 %v141
    %1433 = vmatpush.msra.mxu0 %v137
    %1434 = vmatpush.msra.mxu0 %v133
    %1435 = vmatpush.msra.mxu0 %v129
    %1436 = vmatpush.msra.mxu0 %v125
    %1437 = vmatpush.msra.mxu0 %v121
    %1438 = vmatpush.msra.mxu0 %v117
    %1439 = vmatpush.msra.mxu0 %v113
    %1440 = vmatmul.f32.gmra.mxu0 %v1403
    %v1441 = vpop.f32.mrf.mxu0
    %v1442 = vadd.f32 0.0, %v1441
    %1443 = vdwg.mxu0
    %1444 = vmatpush.msra.mxu0 %v174
    %1445 = vmatpush.msra.mxu0 %v170
    %1446 = vmatpush.msra.mxu0 %v166
    %1447 = vmatpush.msra.mxu0 %v162
    %1448 = vmatpush.msra.mxu0 %v158
    %1449 = vmatpush.msra.mxu0 %v154
    %1450 = vmatpush.msra.mxu0 %v150
    %1451 = vmatpush.msra.mxu0 %v146
    %1452 = vmatpush.msra.mxu0 %v142
    %1453 = vmatpush.msra.mxu0 %v138
    %1454 = vmatpush.msra.mxu0 %v134
    %1455 = vmatpush.msra.mxu0 %v130
    %1456 = vmatpush.msra.mxu0 %v126
    %1457 = vmatpush.msra.mxu0 %v122
    %1458 = vmatpush.msra.mxu0 %v118
    %1459 = vmatpush.msra.mxu0 %v114
    %1460 = vmatmul.f32.gmra.mxu0 %v1403
    %v1461 = vpop.f32.mrf.mxu0
    %v1462 = vadd.f32 0.0, %v1461
    %1463 = vdwg.mxu0
    %1464 = vmatpush.msra.mxu0 %v175
    %1465 = vmatpush.msra.mxu0 %v171
    %1466 = vmatpush.msra.mxu0 %v167
    %1467 = vmatpush.msra.mxu0 %v163
    %1468 = vmatpush.msra.mxu0 %v159
    %1469 = vmatpush.msra.mxu0 %v155
    %1470 = vmatpush.msra.mxu0 %v151
    %1471 = vmatpush.msra.mxu0 %v147
    %1472 = vmatpush.msra.mxu0 %v143
    %1473 = vmatpush.msra.mxu0 %v139
    %1474 = vmatpush.msra.mxu0 %v135
    %1475 = vmatpush.msra.mxu0 %v131
    %1476 = vmatpush.msra.mxu0 %v127
    %1477 = vmatpush.msra.mxu0 %v123
    %1478 = vmatpush.msra.mxu0 %v119
    %1479 = vmatpush.msra.mxu0 %v115
    %1480 = vmatmul.f32.gmra.mxu0 %v1403
    %v1481 = vpop.f32.mrf.mxu0
    %v1482 = vadd.f32 0.0, %v1481
    %1483 = vdwg.mxu0
    %v1484 = vadd.f32 %v250, %v1422
    %v1485 = vadd.f32 %v291, %v1442
    %v1486 = vadd.f32 %v332, %v1462
    %v1487 = vadd.f32 %v373, %v1482
    %v1488 = vxor.u32 %v1484, 2147483648
    %v1489 = vmul.f32 %v1488, 1.442695
    %v1490 = vpow.pop %v1489
    %v1491 = vadd.f32 %v1490, 1.0
    %v1492 = vrcp.pop %v1491
    %v1493 = vmul.f32 %v1491, %v1492
    %v1494 = vsub.f32 1.0, %v1493
    %v1495 = vmul.f32 %v1492, %v1494
    %v1496 = vadd.f32 %v1492, %v1495
    %vm1497 = vweird.f32 %v1491
    %vm1498 = vweird.f32 %v1492
    %vm1499 = vmor %vm1497, %vm1498
    %v1500 = vsel %vm1499, %v1492, %v1496
    %v1501 = vand.u32 2147483647, %v1491
    %vm1502 = vcmp.eq.f32.partialorder %v1501, 8.507059e+37
    %v1503 = vand.u32 %v1491, 2147483648
    %v1504 = vor.u32 1.1754944e-38, %v1503
    %v1505 = vsel %vm1502, %v1504, %v1500
    %v1506 = vmul.f32 1.0, %v1505
    %v1507 = vxor.u32 %v1485, 2147483648
    %v1508 = vmul.f32 %v1507, 1.442695
    %v1509 = vpow.pop %v1508
    %v1510 = vadd.f32 %v1509, 1.0
    %v1511 = vrcp.pop %v1510
    %v1512 = vmul.f32 %v1510, %v1511
    %v1513 = vsub.f32 1.0, %v1512
    %v1514 = vmul.f32 %v1511, %v1513
    %v1515 = vadd.f32 %v1511, %v1514
    %vm1516 = vweird.f32 %v1510
    %vm1517 = vweird.f32 %v1511
    %vm1518 = vmor %vm1516, %vm1517
    %v1519 = vsel %vm1518, %v1511, %v1515
    %v1520 = vand.u32 2147483647, %v1510
    %vm1521 = vcmp.eq.f32.partialorder %v1520, 8.507059e+37
    %v1522 = vand.u32 %v1510, 2147483648
    %v1523 = vor.u32 1.1754944e-38, %v1522
    %v1524 = vsel %vm1521, %v1523, %v1519
    %v1525 = vmul.f32 1.0, %v1524
    %v1526 = vtanh.pop %v1486
    %v1527 = vxor.u32 %v1487, 2147483648
    %v1528 = vmul.f32 %v1527, 1.442695
    %v1529 = vpow.pop %v1528
    %v1530 = vadd.f32 %v1529, 1.0
    %v1531 = vrcp.pop %v1530
    %v1532 = vmul.f32 %v1530, %v1531
    %v1533 = vsub.f32 1.0, %v1532
    %v1534 = vmul.f32 %v1531, %v1533
    %v1535 = vadd.f32 %v1531, %v1534
    %vm1536 = vweird.f32 %v1530
    %vm1537 = vweird.f32 %v1531
    %vm1538 = vmor %vm1536, %vm1537
    %v1539 = vsel %vm1538, %v1531, %v1535
    %v1540 = vand.u32 2147483647, %v1530
    %vm1541 = vcmp.eq.f32.partialorder %v1540, 8.507059e+37
    %v1542 = vand.u32 %v1530, 2147483648
    %v1543 = vor.u32 1.1754944e-38, %v1542
    %v1544 = vsel %vm1541, %v1543, %v1539
    %v1545 = vmul.f32 1.0, %v1544
    %v1546 = vmul.f32 %v1525, %v1401
    %v1547 = vmul.f32 %v1506, %v1526
    %v1548 = vadd.f32 %v1546, %v1547
    %v1549 = vtanh.pop %v1548
    %v1550 = vmul.f32 %v1545, %v1549
    %v1551 = vld [vmem:[#allocation5] sm:$0xff]
    %v1552 = vld [vmem:[#allocation5 + $0x8] sm:$0xff]
    %v1553 = vld [vmem:[#allocation5 + $0x10] sm:$0xff]
    %v1554 = vld [vmem:[#allocation5 + $0x18] sm:$0xff]
    %v1555 = vld [vmem:[#allocation5 + $0x20] sm:$0xff]
    %v1556 = vld [vmem:[#allocation5 + $0x28] sm:$0xff]
    %v1557 = vld [vmem:[#allocation5 + $0x30] sm:$0xff]
    %v1558 = vld [vmem:[#allocation5 + $0x38] sm:$0xff]
    %v1559 = vld [vmem:[#allocation5 + $0x40] sm:$0xff]
    %v1560 = vld [vmem:[#allocation5 + $0x48] sm:$0xff]
    %v1561 = vld [vmem:[#allocation5 + $0x50] sm:$0xff]
    %v1562 = vld [vmem:[#allocation5 + $0x58] sm:$0xff]
    %v1563 = vld [vmem:[#allocation5 + $0x60] sm:$0xff]
    %v1564 = vld [vmem:[#allocation5 + $0x68] sm:$0xff]
    %v1565 = vld [vmem:[#allocation5 + $0x70] sm:$0xff]
    %v1566 = vld [vmem:[#allocation5 + $0x78] sm:$0xff]
    %v1567 = vld [vmem:[#allocation5 + $0x80] sm:$0xff]
    %v1568 = vld [vmem:[#allocation5 + $0x88] sm:$0xff]
    %v1569 = vld [vmem:[#allocation5 + $0x90] sm:$0xff]
    %v1570 = vld [vmem:[#allocation5 + $0x98] sm:$0xff]
    %v1571 = vld [vmem:[#allocation5 + $0xa0] sm:$0xff]
    %v1572 = vld [vmem:[#allocation5 + $0xa8] sm:$0xff]
    %v1573 = vld [vmem:[#allocation5 + $0xb0] sm:$0xff]
    %v1574 = vld [vmem:[#allocation5 + $0xb8] sm:$0xff]
    %v1575 = vld [vmem:[#allocation5 + $0xc0] sm:$0xff]
    %v1576 = vld [vmem:[#allocation5 + $0xc8] sm:$0xff]
    %v1577 = vld [vmem:[#allocation5 + $0xd0] sm:$0xff]
    %v1578 = vld [vmem:[#allocation5 + $0xd8] sm:$0xff]
    %v1579 = vld [vmem:[#allocation5 + $0xe0] sm:$0xff]
    %v1580 = vld [vmem:[#allocation5 + $0xe8] sm:$0xff]
    %v1581 = vld [vmem:[#allocation5 + $0xf0] sm:$0xff]
    %v1582 = vld [vmem:[#allocation5 + $0xf8] sm:$0xff]
    %v1583 = vld [vmem:[#allocation5 + $0x100] sm:$0xff]
    %v1584 = vld [vmem:[#allocation5 + $0x108] sm:$0xff]
    %v1585 = vld [vmem:[#allocation5 + $0x110] sm:$0xff]
    %v1586 = vld [vmem:[#allocation5 + $0x118] sm:$0xff]
    %v1587 = vld [vmem:[#allocation5 + $0x120] sm:$0xff]
    %v1588 = vld [vmem:[#allocation5 + $0x128] sm:$0xff]
    %v1589 = vld [vmem:[#allocation5 + $0x130] sm:$0xff]
    %v1590 = vld [vmem:[#allocation5 + $0x138] sm:$0xff]
    %v1591 = vld [vmem:[#allocation5 + $0x140] sm:$0xff]
    %v1592 = vld [vmem:[#allocation5 + $0x148] sm:$0xff]
    %v1593 = vld [vmem:[#allocation5 + $0x150] sm:$0xff]
    %v1594 = vld [vmem:[#allocation5 + $0x158] sm:$0xff]
    %v1595 = vld [vmem:[#allocation5 + $0x160] sm:$0xff]
    %v1596 = vld [vmem:[#allocation5 + $0x168] sm:$0xff]
    %v1597 = vld [vmem:[#allocation5 + $0x170] sm:$0xff]
    %v1598 = vld [vmem:[#allocation5 + $0x178] sm:$0xff]
    %v1599 = vld [vmem:[#allocation5 + $0x180] sm:$0xff]
    %v1600 = vld [vmem:[#allocation5 + $0x188] sm:$0xff]
    %v1601 = vld [vmem:[#allocation5 + $0x190] sm:$0xff]
    %v1602 = vld [vmem:[#allocation5 + $0x198] sm:$0xff]
    %v1603 = vld [vmem:[#allocation5 + $0x1a0] sm:$0xff]
    %v1604 = vld [vmem:[#allocation5 + $0x1a8] sm:$0xff]
    %v1605 = vld [vmem:[#allocation5 + $0x1b0] sm:$0xff]
    %v1606 = vld [vmem:[#allocation5 + $0x1b8] sm:$0xff]
    %v1607 = vld [vmem:[#allocation5 + $0x1c0] sm:$0xff]
    %v1608 = vld [vmem:[#allocation5 + $0x1c8] sm:$0xff]
    %v1609 = vld [vmem:[#allocation5 + $0x1d0] sm:$0xff]
    %v1610 = vld [vmem:[#allocation5 + $0x1d8] sm:$0xff]
    %v1611 = vld [vmem:[#allocation5 + $0x1e0] sm:$0xff]
    %v1612 = vld [vmem:[#allocation5 + $0x1e8] sm:$0xff]
    %v1613 = vld [vmem:[#allocation5 + $0x1f0] sm:$0xff]
    %v1614 = vld [vmem:[#allocation5 + $0x1f8] sm:$0xff]
    %v1615 = vld [vmem:[#allocation7] sm:$0xff]
    %v1616 = vld [vmem:[#allocation7 + $0x8] sm:$0xff]
    %v1617 = vld [vmem:[#allocation7 + $0x10] sm:$0xff]
    %v1618 = vld [vmem:[#allocation7 + $0x18] sm:$0xff]
    %v1619 = vld [vmem:[#allocation7 + $0x20] sm:$0xff]
    %v1620 = vld [vmem:[#allocation7 + $0x28] sm:$0xff]
    %v1621 = vld [vmem:[#allocation7 + $0x30] sm:$0xff]
    %v1622 = vld [vmem:[#allocation7 + $0x38] sm:$0xff]
    %v1623 = vld [vmem:[#allocation7 + $0x40] sm:$0xff]
    %v1624 = vld [vmem:[#allocation7 + $0x48] sm:$0xff]
    %v1625 = vld [vmem:[#allocation7 + $0x50] sm:$0xff]
    %v1626 = vld [vmem:[#allocation7 + $0x58] sm:$0xff]
    %v1627 = vld [vmem:[#allocation7 + $0x60] sm:$0xff]
    %v1628 = vld [vmem:[#allocation7 + $0x68] sm:$0xff]
    %v1629 = vld [vmem:[#allocation7 + $0x70] sm:$0xff]
    %v1630 = vld [vmem:[#allocation7 + $0x78] sm:$0xff]
    %v1631 = vld [vmem:[#allocation7 + $0x80] sm:$0xff]
    %v1632 = vld [vmem:[#allocation7 + $0x88] sm:$0xff]
    %v1633 = vld [vmem:[#allocation7 + $0x90] sm:$0xff]
    %v1634 = vld [vmem:[#allocation7 + $0x98] sm:$0xff]
    %v1635 = vld [vmem:[#allocation7 + $0xa0] sm:$0xff]
    %v1636 = vld [vmem:[#allocation7 + $0xa8] sm:$0xff]
    %v1637 = vld [vmem:[#allocation7 + $0xb0] sm:$0xff]
    %v1638 = vld [vmem:[#allocation7 + $0xb8] sm:$0xff]
    %v1639 = vld [vmem:[#allocation7 + $0xc0] sm:$0xff]
    %v1640 = vld [vmem:[#allocation7 + $0xc8] sm:$0xff]
    %v1641 = vld [vmem:[#allocation7 + $0xd0] sm:$0xff]
    %v1642 = vld [vmem:[#allocation7 + $0xd8] sm:$0xff]
    %v1643 = vld [vmem:[#allocation7 + $0xe0] sm:$0xff]
    %v1644 = vld [vmem:[#allocation7 + $0xe8] sm:$0xff]
    %v1645 = vld [vmem:[#allocation7 + $0xf0] sm:$0xff]
    %v1646 = vld [vmem:[#allocation7 + $0xf8] sm:$0xff]
    %v1647 = vld [vmem:[#allocation7 + $0x100] sm:$0xff]
    %v1648 = vld [vmem:[#allocation7 + $0x108] sm:$0xff]
    %v1649 = vld [vmem:[#allocation7 + $0x110] sm:$0xff]
    %v1650 = vld [vmem:[#allocation7 + $0x118] sm:$0xff]
    %v1651 = vld [vmem:[#allocation7 + $0x120] sm:$0xff]
    %v1652 = vld [vmem:[#allocation7 + $0x128] sm:$0xff]
    %v1653 = vld [vmem:[#allocation7 + $0x130] sm:$0xff]
    %v1654 = vld [vmem:[#allocation7 + $0x138] sm:$0xff]
    %v1655 = vld [vmem:[#allocation7 + $0x140] sm:$0xff]
    %v1656 = vld [vmem:[#allocation7 + $0x148] sm:$0xff]
    %v1657 = vld [vmem:[#allocation7 + $0x150] sm:$0xff]
    %v1658 = vld [vmem:[#allocation7 + $0x158] sm:$0xff]
    %v1659 = vld [vmem:[#allocation7 + $0x160] sm:$0xff]
    %v1660 = vld [vmem:[#allocation7 + $0x168] sm:$0xff]
    %v1661 = vld [vmem:[#allocation7 + $0x170] sm:$0xff]
    %v1662 = vld [vmem:[#allocation7 + $0x178] sm:$0xff]
    %v1663 = vld [vmem:[#allocation7 + $0x180] sm:$0xff]
    %v1664 = vld [vmem:[#allocation7 + $0x188] sm:$0xff]
    %v1665 = vld [vmem:[#allocation7 + $0x190] sm:$0xff]
    %v1666 = vld [vmem:[#allocation7 + $0x198] sm:$0xff]
    %v1667 = vld [vmem:[#allocation7 + $0x1a0] sm:$0xff]
    %v1668 = vld [vmem:[#allocation7 + $0x1a8] sm:$0xff]
    %v1669 = vld [vmem:[#allocation7 + $0x1b0] sm:$0xff]
    %v1670 = vld [vmem:[#allocation7 + $0x1b8] sm:$0xff]
    %v1671 = vld [vmem:[#allocation7 + $0x1c0] sm:$0xff]
    %v1672 = vld [vmem:[#allocation7 + $0x1c8] sm:$0xff]
    %v1673 = vld [vmem:[#allocation7 + $0x1d0] sm:$0xff]
    %v1674 = vld [vmem:[#allocation7 + $0x1d8] sm:$0xff]
    %v1675 = vld [vmem:[#allocation7 + $0x1e0] sm:$0xff]
    %v1676 = vld [vmem:[#allocation7 + $0x1e8] sm:$0xff]
    %v1677 = vld [vmem:[#allocation7 + $0x1f0] sm:$0xff]
    %v1678 = vld [vmem:[#allocation7 + $0x1f8] sm:$0xff]
    %v1679 = vld [vmem:[%s6] sm:$0xf]
    %v1681 = vperm.slane %v1679, 0
    %v1682 = vperm.slane %v1679, 1
    %v1683 = vperm.slane %v1679, 2
    %v1684 = vperm.slane %v1679, 3
    %1689 = vmatpush.msra.mxu0 %v1611
    %1690 = vmatpush.msra.mxu0 %v1607
    %1691 = vmatpush.msra.mxu0 %v1603
    %1692 = vmatpush.msra.mxu0 %v1599
    %1693 = vmatpush.msra.mxu0 %v1595
    %1694 = vmatpush.msra.mxu0 %v1591
    %1695 = vmatpush.msra.mxu0 %v1587
    %1696 = vmatpush.msra.mxu0 %v1583
    %1697 = vmatpush.msra.mxu0 %v1579
    %1698 = vmatpush.msra.mxu0 %v1575
    %1699 = vmatpush.msra.mxu0 %v1571
    %1700 = vmatpush.msra.mxu0 %v1567
    %1701 = vmatpush.msra.mxu0 %v1563
    %1702 = vmatpush.msra.mxu0 %v1559
    %1703 = vmatpush.msra.mxu0 %v1555
    %1704 = vmatpush.msra.mxu0 %v1551
    %1705 = vmatmul.f32.gmra.mxu0 %v521
    %v1706 = vpop.f32.mrf.mxu0
    %v1707 = vadd.f32 %v1681, %v1706
    %1708 = vmatmul.f32.gmra.mxu0 %v668
    %v1709 = vpop.f32.mrf.mxu0
    %v1710 = vadd.f32 %v1681, %v1709
    %1711 = vmatmul.f32.gmra.mxu0 %v815
    %v1712 = vpop.f32.mrf.mxu0
    %v1713 = vadd.f32 %v1681, %v1712
    %1714 = vmatmul.f32.gmra.mxu0 %v962
    %v1715 = vpop.f32.mrf.mxu0
    %v1716 = vadd.f32 %v1681, %v1715
    %1717 = vmatmul.f32.gmra.mxu0 %v1109
    %v1718 = vpop.f32.mrf.mxu0
    %v1719 = vadd.f32 %v1681, %v1718
    %1720 = vmatmul.f32.gmra.mxu0 %v1256
    %v1721 = vpop.f32.mrf.mxu0
    %v1722 = vadd.f32 %v1681, %v1721
    %1723 = vmatmul.f32.gmra.mxu0 %v1403
    %v1724 = vpop.f32.mrf.mxu0
    %v1725 = vadd.f32 %v1681, %v1724
    %1726 = vmatmul.f32.gmra.mxu0 %v1550
    %v1727 = vpop.f32.mrf.mxu0
    %v1728 = vadd.f32 %v1681, %v1727
    %1729 = vdwg.mxu0
    %1730 = vmatpush.msra.mxu0 %v1612
    %1731 = vmatpush.msra.mxu0 %v1608
    %1732 = vmatpush.msra.mxu0 %v1604
    %1733 = vmatpush.msra.mxu0 %v1600
    %1734 = vmatpush.msra.mxu0 %v1596
    %1735 = vmatpush.msra.mxu0 %v1592
    %1736 = vmatpush.msra.mxu0 %v1588
    %1737 = vmatpush.msra.mxu0 %v1584
    %1738 = vmatpush.msra.mxu0 %v1580
    %1739 = vmatpush.msra.mxu0 %v1576
    %1740 = vmatpush.msra.mxu0 %v1572
    %1741 = vmatpush.msra.mxu0 %v1568
    %1742 = vmatpush.msra.mxu0 %v1564
    %1743 = vmatpush.msra.mxu0 %v1560
    %1744 = vmatpush.msra.mxu0 %v1556
    %1745 = vmatpush.msra.mxu0 %v1552
    %1746 = vmatmul.f32.gmra.mxu0 %v521
    %v1747 = vpop.f32.mrf.mxu0
    %v1748 = vadd.f32 %v1682, %v1747
    %1749 = vmatmul.f32.gmra.mxu0 %v668
    %v1750 = vpop.f32.mrf.mxu0
    %v1751 = vadd.f32 %v1682, %v1750
    %1752 = vmatmul.f32.gmra.mxu0 %v815
    %v1753 = vpop.f32.mrf.mxu0
    %v1754 = vadd.f32 %v1682, %v1753
    %1755 = vmatmul.f32.gmra.mxu0 %v962
    %v1756 = vpop.f32.mrf.mxu0
    %v1757 = vadd.f32 %v1682, %v1756
    %1758 = vmatmul.f32.gmra.mxu0 %v1109
    %v1759 = vpop.f32.mrf.mxu0
    %v1760 = vadd.f32 %v1682, %v1759
    %1761 = vmatmul.f32.gmra.mxu0 %v1256
    %v1762 = vpop.f32.mrf.mxu0
    %v1763 = vadd.f32 %v1682, %v1762
    %1764 = vmatmul.f32.gmra.mxu0 %v1403
    %v1765 = vpop.f32.mrf.mxu0
    %v1766 = vadd.f32 %v1682, %v1765
    %1767 = vmatmul.f32.gmra.mxu0 %v1550
    %v1768 = vpop.f32.mrf.mxu0
    %v1769 = vadd.f32 %v1682, %v1768
    %1770 = vdwg.mxu0
    %1771 = vmatpush.msra.mxu0 %v1613
    %1772 = vmatpush.msra.mxu0 %v1609
    %1773 = vmatpush.msra.mxu0 %v1605
    %1774 = vmatpush.msra.mxu0 %v1601
    %1775 = vmatpush.msra.mxu0 %v1597
    %1776 = vmatpush.msra.mxu0 %v1593
    %1777 = vmatpush.msra.mxu0 %v1589
    %1778 = vmatpush.msra.mxu0 %v1585
    %1779 = vmatpush.msra.mxu0 %v1581
    %1780 = vmatpush.msra.mxu0 %v1577
    %1781 = vmatpush.msra.mxu0 %v1573
    %1782 = vmatpush.msra.mxu0 %v1569
    %1783 = vmatpush.msra.mxu0 %v1565
    %1784 = vmatpush.msra.mxu0 %v1561
    %1785 = vmatpush.msra.mxu0 %v1557
    %1786 = vmatpush.msra.mxu0 %v1553
    %1787 = vmatmul.f32.gmra.mxu0 %v521
    %v1788 = vpop.f32.mrf.mxu0
    %v1789 = vadd.f32 %v1683, %v1788
    %1790 = vmatmul.f32.gmra.mxu0 %v668
    %v1791 = vpop.f32.mrf.mxu0
    %v1792 = vadd.f32 %v1683, %v1791
    %1793 = vmatmul.f32.gmra.mxu0 %v815
    %v1794 = vpop.f32.mrf.mxu0
    %v1795 = vadd.f32 %v1683, %v1794
    %1796 = vmatmul.f32.gmra.mxu0 %v962
    %v1797 = vpop.f32.mrf.mxu0
    %v1798 = vadd.f32 %v1683, %v1797
    %1799 = vmatmul.f32.gmra.mxu0 %v1109
    %v1800 = vpop.f32.mrf.mxu0
    %v1801 = vadd.f32 %v1683, %v1800
    %1802 = vmatmul.f32.gmra.mxu0 %v1256
    %v1803 = vpop.f32.mrf.mxu0
    %v1804 = vadd.f32 %v1683, %v1803
    %1805 = vmatmul.f32.gmra.mxu0 %v1403
    %v1806 = vpop.f32.mrf.mxu0
    %v1807 = vadd.f32 %v1683, %v1806
    %1808 = vmatmul.f32.gmra.mxu0 %v1550
    %v1809 = vpop.f32.mrf.mxu0
    %v1810 = vadd.f32 %v1683, %v1809
    %1811 = vdwg.mxu0
    %1812 = vmatpush.msra.mxu0 %v1614
    %1813 = vmatpush.msra.mxu0 %v1610
    %1814 = vmatpush.msra.mxu0 %v1606
    %1815 = vmatpush.msra.mxu0 %v1602
    %1816 = vmatpush.msra.mxu0 %v1598
    %1817 = vmatpush.msra.mxu0 %v1594
    %1818 = vmatpush.msra.mxu0 %v1590
    %1819 = vmatpush.msra.mxu0 %v1586
    %1820 = vmatpush.msra.mxu0 %v1582
    %1821 = vmatpush.msra.mxu0 %v1578
    %1822 = vmatpush.msra.mxu0 %v1574
    %1823 = vmatpush.msra.mxu0 %v1570
    %1824 = vmatpush.msra.mxu0 %v1566
    %1825 = vmatpush.msra.mxu0 %v1562
    %1826 = vmatpush.msra.mxu0 %v1558
    %1827 = vmatpush.msra.mxu0 %v1554
    %1828 = vmatmul.f32.gmra.mxu0 %v521
    %v1829 = vpop.f32.mrf.mxu0
    %v1830 = vadd.f32 %v1684, %v1829
    %1831 = vmatmul.f32.gmra.mxu0 %v668
    %v1832 = vpop.f32.mrf.mxu0
    %v1833 = vadd.f32 %v1684, %v1832
    %1834 = vmatmul.f32.gmra.mxu0 %v815
    %v1835 = vpop.f32.mrf.mxu0
    %v1836 = vadd.f32 %v1684, %v1835
    %1837 = vmatmul.f32.gmra.mxu0 %v962
    %v1838 = vpop.f32.mrf.mxu0
    %v1839 = vadd.f32 %v1684, %v1838
    %1840 = vmatmul.f32.gmra.mxu0 %v1109
    %v1841 = vpop.f32.mrf.mxu0
    %v1842 = vadd.f32 %v1684, %v1841
    %1843 = vmatmul.f32.gmra.mxu0 %v1256
    %v1844 = vpop.f32.mrf.mxu0
    %v1845 = vadd.f32 %v1684, %v1844
    %1846 = vmatmul.f32.gmra.mxu0 %v1403
    %v1847 = vpop.f32.mrf.mxu0
    %v1848 = vadd.f32 %v1684, %v1847
    %1849 = vmatmul.f32.gmra.mxu0 %v1550
    %v1850 = vpop.f32.mrf.mxu0
    %v1851 = vadd.f32 %v1684, %v1850
    %1852 = vdwg.mxu0
    %1853 = vmatpush.msra.mxu0 %v1675
    %1854 = vmatpush.msra.mxu0 %v1671
    %1855 = vmatpush.msra.mxu0 %v1667
    %1856 = vmatpush.msra.mxu0 %v1663
    %1857 = vmatpush.msra.mxu0 %v1659
    %1858 = vmatpush.msra.mxu0 %v1655
    %1859 = vmatpush.msra.mxu0 %v1651
    %1860 = vmatpush.msra.mxu0 %v1647
    %1861 = vmatpush.msra.mxu0 %v1643
    %1862 = vmatpush.msra.mxu0 %v1639
    %1863 = vmatpush.msra.mxu0 %v1635
    %1864 = vmatpush.msra.mxu0 %v1631
    %1865 = vmatpush.msra.mxu0 %v1627
    %1866 = vmatpush.msra.mxu0 %v1623
    %1867 = vmatpush.msra.mxu0 %v1619
    %1868 = vmatpush.msra.mxu0 %v1615
    %1869 = vmatmul.f32.gmra.mxu0 0.0
    %v1870 = vpop.f32.mrf.mxu0
    %v1871 = vadd.f32 0.0, %v1870
    %1872 = vdwg.mxu0
    %1873 = vmatpush.msra.mxu0 %v1676
    %1874 = vmatpush.msra.mxu0 %v1672
    %1875 = vmatpush.msra.mxu0 %v1668
    %1876 = vmatpush.msra.mxu0 %v1664
    %1877 = vmatpush.msra.mxu0 %v1660
    %1878 = vmatpush.msra.mxu0 %v1656
    %1879 = vmatpush.msra.mxu0 %v1652
    %1880 = vmatpush.msra.mxu0 %v1648
    %1881 = vmatpush.msra.mxu0 %v1644
    %1882 = vmatpush.msra.mxu0 %v1640
    %1883 = vmatpush.msra.mxu0 %v1636
    %1884 = vmatpush.msra.mxu0 %v1632
    %1885 = vmatpush.msra.mxu0 %v1628
    %1886 = vmatpush.msra.mxu0 %v1624
    %1887 = vmatpush.msra.mxu0 %v1620
    %1888 = vmatpush.msra.mxu0 %v1616
    %1889 = vmatmul.f32.gmra.mxu0 0.0
    %v1890 = vpop.f32.mrf.mxu0
    %v1891 = vadd.f32 0.0, %v1890
    %1892 = vdwg.mxu0
    %1893 = vmatpush.msra.mxu0 %v1677
    %1894 = vmatpush.msra.mxu0 %v1673
    %1895 = vmatpush.msra.mxu0 %v1669
    %1896 = vmatpush.msra.mxu0 %v1665
    %1897 = vmatpush.msra.mxu0 %v1661
    %1898 = vmatpush.msra.mxu0 %v1657
    %1899 = vmatpush.msra.mxu0 %v1653
    %1900 = vmatpush.msra.mxu0 %v1649
    %1901 = vmatpush.msra.mxu0 %v1645
    %1902 = vmatpush.msra.mxu0 %v1641
    %1903 = vmatpush.msra.mxu0 %v1637
    %1904 = vmatpush.msra.mxu0 %v1633
    %1905 = vmatpush.msra.mxu0 %v1629
    %1906 = vmatpush.msra.mxu0 %v1625
    %1907 = vmatpush.msra.mxu0 %v1621
    %1908 = vmatpush.msra.mxu0 %v1617
    %1909 = vmatmul.f32.gmra.mxu0 0.0
    %v1910 = vpop.f32.mrf.mxu0
    %v1911 = vadd.f32 0.0, %v1910
    %1912 = vdwg.mxu0
    %1913 = vmatpush.msra.mxu0 %v1678
    %1914 = vmatpush.msra.mxu0 %v1674
    %1915 = vmatpush.msra.mxu0 %v1670
    %1916 = vmatpush.msra.mxu0 %v1666
    %1917 = vmatpush.msra.mxu0 %v1662
    %1918 = vmatpush.msra.mxu0 %v1658
    %1919 = vmatpush.msra.mxu0 %v1654
    %1920 = vmatpush.msra.mxu0 %v1650
    %1921 = vmatpush.msra.mxu0 %v1646
    %1922 = vmatpush.msra.mxu0 %v1642
    %1923 = vmatpush.msra.mxu0 %v1638
    %1924 = vmatpush.msra.mxu0 %v1634
    %1925 = vmatpush.msra.mxu0 %v1630
    %1926 = vmatpush.msra.mxu0 %v1626
    %1927 = vmatpush.msra.mxu0 %v1622
    %1928 = vmatpush.msra.mxu0 %v1618
    %1929 = vmatmul.f32.gmra.mxu0 0.0
    %v1930 = vpop.f32.mrf.mxu0
    %v1931 = vadd.f32 0.0, %v1930
    %1932 = vdwg.mxu0
    %v1933 = vadd.f32 %v1707, %v1871
    %v1934 = vadd.f32 %v1748, %v1891
    %v1935 = vadd.f32 %v1789, %v1911
    %v1936 = vadd.f32 %v1830, %v1931
    %v1937 = vxor.u32 %v1933, 2147483648
    %v1938 = vmul.f32 %v1937, 1.442695
    %v1939 = vpow.pop %v1938
    %v1940 = vadd.f32 %v1939, 1.0
    %v1941 = vrcp.pop %v1940
    %v1942 = vmul.f32 %v1940, %v1941
    %v1943 = vsub.f32 1.0, %v1942
    %v1944 = vmul.f32 %v1941, %v1943
    %v1945 = vadd.f32 %v1941, %v1944
    %vm1946 = vweird.f32 %v1940
    %vm1947 = vweird.f32 %v1941
    %vm1948 = vmor %vm1946, %vm1947
    %v1949 = vsel %vm1948, %v1941, %v1945
    %v1950 = vand.u32 2147483647, %v1940
    %vm1951 = vcmp.eq.f32.partialorder %v1950, 8.507059e+37
    %v1952 = vand.u32 %v1940, 2147483648
    %v1953 = vor.u32 1.1754944e-38, %v1952
    %v1954 = vsel %vm1951, %v1953, %v1949
    %v1955 = vmul.f32 1.0, %v1954
    %v1956 = vxor.u32 %v1934, 2147483648
    %v1957 = vmul.f32 %v1956, 1.442695
    %v1958 = vpow.pop %v1957
    %v1959 = vadd.f32 %v1958, 1.0
    %v1960 = vrcp.pop %v1959
    %v1961 = vmul.f32 %v1959, %v1960
    %v1962 = vsub.f32 1.0, %v1961
    %v1963 = vmul.f32 %v1960, %v1962
    %v1964 = vadd.f32 %v1960, %v1963
    %vm1965 = vweird.f32 %v1959
    %vm1966 = vweird.f32 %v1960
    %vm1967 = vmor %vm1965, %vm1966
    %v1968 = vsel %vm1967, %v1960, %v1964
    %v1969 = vand.u32 2147483647, %v1959
    %vm1970 = vcmp.eq.f32.partialorder %v1969, 8.507059e+37
    %v1971 = vand.u32 %v1959, 2147483648
    %v1972 = vor.u32 1.1754944e-38, %v1971
    %v1973 = vsel %vm1970, %v1972, %v1968
    %v1974 = vmul.f32 1.0, %v1973
    %v1975 = vtanh.pop %v1935
    %v1976 = vxor.u32 %v1936, 2147483648
    %v1977 = vmul.f32 %v1976, 1.442695
    %v1978 = vpow.pop %v1977
    %v1979 = vadd.f32 %v1978, 1.0
    %v1980 = vrcp.pop %v1979
    %v1981 = vmul.f32 %v1979, %v1980
    %v1982 = vsub.f32 1.0, %v1981
    %v1983 = vmul.f32 %v1980, %v1982
    %v1984 = vadd.f32 %v1980, %v1983
    %vm1985 = vweird.f32 %v1979
    %vm1986 = vweird.f32 %v1980
    %vm1987 = vmor %vm1985, %vm1986
    %v1988 = vsel %vm1987, %v1980, %v1984
    %v1989 = vand.u32 2147483647, %v1979
    %vm1990 = vcmp.eq.f32.partialorder %v1989, 8.507059e+37
    %v1991 = vand.u32 %v1979, 2147483648
    %v1992 = vor.u32 1.1754944e-38, %v1991
    %v1993 = vsel %vm1990, %v1992, %v1988
    %v1994 = vmul.f32 1.0, %v1993
    %v1995 = vmul.f32 %v1974, 0.0
    %v1996 = vmul.f32 %v1955, %v1975
    %v1997 = vadd.f32 %v1995, %v1996
    %v1998 = vtanh.pop %v1997
    %v1999 = vmul.f32 %v1994, %v1998
    %2000 = vmatpush.msra.mxu0 %v1675
    %2001 = vmatpush.msra.mxu0 %v1671
    %2002 = vmatpush.msra.mxu0 %v1667
    %2003 = vmatpush.msra.mxu0 %v1663
    %2004 = vmatpush.msra.mxu0 %v1659
    %2005 = vmatpush.msra.mxu0 %v1655
    %2006 = vmatpush.msra.mxu0 %v1651
    %2007 = vmatpush.msra.mxu0 %v1647
    %2008 = vmatpush.msra.mxu0 %v1643
    %2009 = vmatpush.msra.mxu0 %v1639
    %2010 = vmatpush.msra.mxu0 %v1635
    %2011 = vmatpush.msra.mxu0 %v1631
    %2012 = vmatpush.msra.mxu0 %v1627
    %2013 = vmatpush.msra.mxu0 %v1623
    %2014 = vmatpush.msra.mxu0 %v1619
    %2015 = vmatpush.msra.mxu0 %v1615
    %2016 = vmatmul.f32.gmra.mxu0 %v1999
    %v2017 = vpop.f32.mrf.mxu0
    %v2018 = vadd.f32 0.0, %v2017
    %2019 = vdwg.mxu0
    %2020 = vmatpush.msra.mxu0 %v1676
    %2021 = vmatpush.msra.mxu0 %v1672
    %2022 = vmatpush.msra.mxu0 %v1668
    %2023 = vmatpush.msra.mxu0 %v1664
    %2024 = vmatpush.msra.mxu0 %v1660
    %2025 = vmatpush.msra.mxu0 %v1656
    %2026 = vmatpush.msra.mxu0 %v1652
    %2027 = vmatpush.msra.mxu0 %v1648
    %2028 = vmatpush.msra.mxu0 %v1644
    %2029 = vmatpush.msra.mxu0 %v1640
    %2030 = vmatpush.msra.mxu0 %v1636
    %2031 = vmatpush.msra.mxu0 %v1632
    %2032 = vmatpush.msra.mxu0 %v1628
    %2033 = vmatpush.msra.mxu0 %v1624
    %2034 = vmatpush.msra.mxu0 %v1620
    %2035 = vmatpush.msra.mxu0 %v1616
    %2036 = vmatmul.f32.gmra.mxu0 %v1999
    %v2037 = vpop.f32.mrf.mxu0
    %v2038 = vadd.f32 0.0, %v2037
    %2039 = vdwg.mxu0
    %2040 = vmatpush.msra.mxu0 %v1677
    %2041 = vmatpush.msra.mxu0 %v1673
    %2042 = vmatpush.msra.mxu0 %v1669
    %2043 = vmatpush.msra.mxu0 %v1665
    %2044 = vmatpush.msra.mxu0 %v1661
    %2045 = vmatpush.msra.mxu0 %v1657
    %2046 = vmatpush.msra.mxu0 %v1653
    %2047 = vmatpush.msra.mxu0 %v1649
    %2048 = vmatpush.msra.mxu0 %v1645
    %2049 = vmatpush.msra.mxu0 %v1641
    %2050 = vmatpush.msra.mxu0 %v1637
    %2051 = vmatpush.msra.mxu0 %v1633
    %2052 = vmatpush.msra.mxu0 %v1629
    %2053 = vmatpush.msra.mxu0 %v1625
    %2054 = vmatpush.msra.mxu0 %v1621
    %2055 = vmatpush.msra.mxu0 %v1617
    %2056 = vmatmul.f32.gmra.mxu0 %v1999
    %v2057 = vpop.f32.mrf.mxu0
    %v2058 = vadd.f32 0.0, %v2057
    %2059 = vdwg.mxu0
    %2060 = vmatpush.msra.mxu0 %v1678
    %2061 = vmatpush.msra.mxu0 %v1674
    %2062 = vmatpush.msra.mxu0 %v1670
    %2063 = vmatpush.msra.mxu0 %v1666
    %2064 = vmatpush.msra.mxu0 %v1662
    %2065 = vmatpush.msra.mxu0 %v1658
    %2066 = vmatpush.msra.mxu0 %v1654
    %2067 = vmatpush.msra.mxu0 %v1650
    %2068 = vmatpush.msra.mxu0 %v1646
    %2069 = vmatpush.msra.mxu0 %v1642
    %2070 = vmatpush.msra.mxu0 %v1638
    %2071 = vmatpush.msra.mxu0 %v1634
    %2072 = vmatpush.msra.mxu0 %v1630
    %2073 = vmatpush.msra.mxu0 %v1626
    %2074 = vmatpush.msra.mxu0 %v1622
    %2075 = vmatpush.msra.mxu0 %v1618
    %2076 = vmatmul.f32.gmra.mxu0 %v1999
    %v2077 = vpop.f32.mrf.mxu0
    %v2078 = vadd.f32 0.0, %v2077
    %2079 = vdwg.mxu0
    %v2080 = vadd.f32 %v1710, %v2018
    %v2081 = vadd.f32 %v1751, %v2038
    %v2082 = vadd.f32 %v1792, %v2058
    %v2083 = vadd.f32 %v1833, %v2078
    %v2084 = vxor.u32 %v2080, 2147483648
    %v2085 = vmul.f32 %v2084, 1.442695
    %v2086 = vpow.pop %v2085
    %v2087 = vadd.f32 %v2086, 1.0
    %v2088 = vrcp.pop %v2087
    %v2089 = vmul.f32 %v2087, %v2088
    %v2090 = vsub.f32 1.0, %v2089
    %v2091 = vmul.f32 %v2088, %v2090
    %v2092 = vadd.f32 %v2088, %v2091
    %vm2093 = vweird.f32 %v2087
    %vm2094 = vweird.f32 %v2088
    %vm2095 = vmor %vm2093, %vm2094
    %v2096 = vsel %vm2095, %v2088, %v2092
    %v2097 = vand.u32 2147483647, %v2087
    %vm2098 = vcmp.eq.f32.partialorder %v2097, 8.507059e+37
    %v2099 = vand.u32 %v2087, 2147483648
    %v2100 = vor.u32 1.1754944e-38, %v2099
    %v2101 = vsel %vm2098, %v2100, %v2096
    %v2102 = vmul.f32 1.0, %v2101
    %v2103 = vxor.u32 %v2081, 2147483648
    %v2104 = vmul.f32 %v2103, 1.442695
    %v2105 = vpow.pop %v2104
    %v2106 = vadd.f32 %v2105, 1.0
    %v2107 = vrcp.pop %v2106
    %v2108 = vmul.f32 %v2106, %v2107
    %v2109 = vsub.f32 1.0, %v2108
    %v2110 = vmul.f32 %v2107, %v2109
    %v2111 = vadd.f32 %v2107, %v2110
    %vm2112 = vweird.f32 %v2106
    %vm2113 = vweird.f32 %v2107
    %vm2114 = vmor %vm2112, %vm2113
    %v2115 = vsel %vm2114, %v2107, %v2111
    %v2116 = vand.u32 2147483647, %v2106
    %vm2117 = vcmp.eq.f32.partialorder %v2116, 8.507059e+37
    %v2118 = vand.u32 %v2106, 2147483648
    %v2119 = vor.u32 1.1754944e-38, %v2118
    %v2120 = vsel %vm2117, %v2119, %v2115
    %v2121 = vmul.f32 1.0, %v2120
    %v2122 = vtanh.pop %v2082
    %v2123 = vxor.u32 %v2083, 2147483648
    %v2124 = vmul.f32 %v2123, 1.442695
    %v2125 = vpow.pop %v2124
    %v2126 = vadd.f32 %v2125, 1.0
    %v2127 = vrcp.pop %v2126
    %v2128 = vmul.f32 %v2126, %v2127
    %v2129 = vsub.f32 1.0, %v2128
    %v2130 = vmul.f32 %v2127, %v2129
    %v2131 = vadd.f32 %v2127, %v2130
    %vm2132 = vweird.f32 %v2126
    %vm2133 = vweird.f32 %v2127
    %vm2134 = vmor %vm2132, %vm2133
    %v2135 = vsel %vm2134, %v2127, %v2131
    %v2136 = vand.u32 2147483647, %v2126
    %vm2137 = vcmp.eq.f32.partialorder %v2136, 8.507059e+37
    %v2138 = vand.u32 %v2126, 2147483648
    %v2139 = vor.u32 1.1754944e-38, %v2138
    %v2140 = vsel %vm2137, %v2139, %v2135
    %v2141 = vmul.f32 1.0, %v2140
    %v2142 = vmul.f32 %v2121, %v1997
    %v2143 = vmul.f32 %v2102, %v2122
    %v2144 = vadd.f32 %v2142, %v2143
    %v2145 = vtanh.pop %v2144
    %v2146 = vmul.f32 %v2141, %v2145
    %2147 = vmatpush.msra.mxu0 %v1675
    %2148 = vmatpush.msra.mxu0 %v1671
    %2149 = vmatpush.msra.mxu0 %v1667
    %2150 = vmatpush.msra.mxu0 %v1663
    %2151 = vmatpush.msra.mxu0 %v1659
    %2152 = vmatpush.msra.mxu0 %v1655
    %2153 = vmatpush.msra.mxu0 %v1651
    %2154 = vmatpush.msra.mxu0 %v1647
    %2155 = vmatpush.msra.mxu0 %v1643
    %2156 = vmatpush.msra.mxu0 %v1639
    %2157 = vmatpush.msra.mxu0 %v1635
    %2158 = vmatpush.msra.mxu0 %v1631
    %2159 = vmatpush.msra.mxu0 %v1627
    %2160 = vmatpush.msra.mxu0 %v1623
    %2161 = vmatpush.msra.mxu0 %v1619
    %2162 = vmatpush.msra.mxu0 %v1615
    %2163 = vmatmul.f32.gmra.mxu0 %v2146
    %v2164 = vpop.f32.mrf.mxu0
    %v2165 = vadd.f32 0.0, %v2164
    %2166 = vdwg.mxu0
    %2167 = vmatpush.msra.mxu0 %v1676
    %2168 = vmatpush.msra.mxu0 %v1672
    %2169 = vmatpush.msra.mxu0 %v1668
    %2170 = vmatpush.msra.mxu0 %v1664
    %2171 = vmatpush.msra.mxu0 %v1660
    %2172 = vmatpush.msra.mxu0 %v1656
    %2173 = vmatpush.msra.mxu0 %v1652
    %2174 = vmatpush.msra.mxu0 %v1648
    %2175 = vmatpush.msra.mxu0 %v1644
    %2176 = vmatpush.msra.mxu0 %v1640
    %2177 = vmatpush.msra.mxu0 %v1636
    %2178 = vmatpush.msra.mxu0 %v1632
    %2179 = vmatpush.msra.mxu0 %v1628
    %2180 = vmatpush.msra.mxu0 %v1624
    %2181 = vmatpush.msra.mxu0 %v1620
    %2182 = vmatpush.msra.mxu0 %v1616
    %2183 = vmatmul.f32.gmra.mxu0 %v2146
    %v2184 = vpop.f32.mrf.mxu0
    %v2185 = vadd.f32 0.0, %v2184
    %2186 = vdwg.mxu0
    %2187 = vmatpush.msra.mxu0 %v1677
    %2188 = vmatpush.msra.mxu0 %v1673
    %2189 = vmatpush.msra.mxu0 %v1669
    %2190 = vmatpush.msra.mxu0 %v1665
    %2191 = vmatpush.msra.mxu0 %v1661
    %2192 = vmatpush.msra.mxu0 %v1657
    %2193 = vmatpush.msra.mxu0 %v1653
    %2194 = vmatpush.msra.mxu0 %v1649
    %2195 = vmatpush.msra.mxu0 %v1645
    %2196 = vmatpush.msra.mxu0 %v1641
    %2197 = vmatpush.msra.mxu0 %v1637
    %2198 = vmatpush.msra.mxu0 %v1633
    %2199 = vmatpush.msra.mxu0 %v1629
    %2200 = vmatpush.msra.mxu0 %v1625
    %2201 = vmatpush.msra.mxu0 %v1621
    %2202 = vmatpush.msra.mxu0 %v1617
    %2203 = vmatmul.f32.gmra.mxu0 %v2146
    %v2204 = vpop.f32.mrf.mxu0
    %v2205 = vadd.f32 0.0, %v2204
    %2206 = vdwg.mxu0
    %2207 = vmatpush.msra.mxu0 %v1678
    %2208 = vmatpush.msra.mxu0 %v1674
    %2209 = vmatpush.msra.mxu0 %v1670
    %2210 = vmatpush.msra.mxu0 %v1666
    %2211 = vmatpush.msra.mxu0 %v1662
    %2212 = vmatpush.msra.mxu0 %v1658
    %2213 = vmatpush.msra.mxu0 %v1654
    %2214 = vmatpush.msra.mxu0 %v1650
    %2215 = vmatpush.msra.mxu0 %v1646
    %2216 = vmatpush.msra.mxu0 %v1642
    %2217 = vmatpush.msra.mxu0 %v1638
    %2218 = vmatpush.msra.mxu0 %v1634
    %2219 = vmatpush.msra.mxu0 %v1630
    %2220 = vmatpush.msra.mxu0 %v1626
    %2221 = vmatpush.msra.mxu0 %v1622
    %2222 = vmatpush.msra.mxu0 %v1618
    %2223 = vmatmul.f32.gmra.mxu0 %v2146
    %v2224 = vpop.f32.mrf.mxu0
    %v2225 = vadd.f32 0.0, %v2224
    %2226 = vdwg.mxu0
    %v2227 = vadd.f32 %v1713, %v2165
    %v2228 = vadd.f32 %v1754, %v2185
    %v2229 = vadd.f32 %v1795, %v2205
    %v2230 = vadd.f32 %v1836, %v2225
    %v2231 = vxor.u32 %v2227, 2147483648
    %v2232 = vmul.f32 %v2231, 1.442695
    %v2233 = vpow.pop %v2232
    %v2234 = vadd.f32 %v2233, 1.0
    %v2235 = vrcp.pop %v2234
    %v2236 = vmul.f32 %v2234, %v2235
    %v2237 = vsub.f32 1.0, %v2236
    %v2238 = vmul.f32 %v2235, %v2237
    %v2239 = vadd.f32 %v2235, %v2238
    %vm2240 = vweird.f32 %v2234
    %vm2241 = vweird.f32 %v2235
    %vm2242 = vmor %vm2240, %vm2241
    %v2243 = vsel %vm2242, %v2235, %v2239
    %v2244 = vand.u32 2147483647, %v2234
    %vm2245 = vcmp.eq.f32.partialorder %v2244, 8.507059e+37
    %v2246 = vand.u32 %v2234, 2147483648
    %v2247 = vor.u32 1.1754944e-38, %v2246
    %v2248 = vsel %vm2245, %v2247, %v2243
    %v2249 = vmul.f32 1.0, %v2248
    %v2250 = vxor.u32 %v2228, 2147483648
    %v2251 = vmul.f32 %v2250, 1.442695
    %v2252 = vpow.pop %v2251
    %v2253 = vadd.f32 %v2252, 1.0
    %v2254 = vrcp.pop %v2253
    %v2255 = vmul.f32 %v2253, %v2254
    %v2256 = vsub.f32 1.0, %v2255
    %v2257 = vmul.f32 %v2254, %v2256
    %v2258 = vadd.f32 %v2254, %v2257
    %vm2259 = vweird.f32 %v2253
    %vm2260 = vweird.f32 %v2254
    %vm2261 = vmor %vm2259, %vm2260
    %v2262 = vsel %vm2261, %v2254, %v2258
    %v2263 = vand.u32 2147483647, %v2253
    %vm2264 = vcmp.eq.f32.partialorder %v2263, 8.507059e+37
    %v2265 = vand.u32 %v2253, 2147483648
    %v2266 = vor.u32 1.1754944e-38, %v2265
    %v2267 = vsel %vm2264, %v2266, %v2262
    %v2268 = vmul.f32 1.0, %v2267
    %v2269 = vtanh.pop %v2229
    %v2270 = vxor.u32 %v2230, 2147483648
    %v2271 = vmul.f32 %v2270, 1.442695
    %v2272 = vpow.pop %v2271
    %v2273 = vadd.f32 %v2272, 1.0
    %v2274 = vrcp.pop %v2273
    %v2275 = vmul.f32 %v2273, %v2274
    %v2276 = vsub.f32 1.0, %v2275
    %v2277 = vmul.f32 %v2274, %v2276
    %v2278 = vadd.f32 %v2274, %v2277
    %vm2279 = vweird.f32 %v2273
    %vm2280 = vweird.f32 %v2274
    %vm2281 = vmor %vm2279, %vm2280
    %v2282 = vsel %vm2281, %v2274, %v2278
    %v2283 = vand.u32 2147483647, %v2273
    %vm2284 = vcmp.eq.f32.partialorder %v2283, 8.507059e+37
    %v2285 = vand.u32 %v2273, 2147483648
    %v2286 = vor.u32 1.1754944e-38, %v2285
    %v2287 = vsel %vm2284, %v2286, %v2282
    %v2288 = vmul.f32 1.0, %v2287
    %v2289 = vmul.f32 %v2268, %v2144
    %v2290 = vmul.f32 %v2249, %v2269
    %v2291 = vadd.f32 %v2289, %v2290
    %v2292 = vtanh.pop %v2291
    %v2293 = vmul.f32 %v2288, %v2292
    %2294 = vmatpush.msra.mxu0 %v1675
    %2295 = vmatpush.msra.mxu0 %v1671
    %2296 = vmatpush.msra.mxu0 %v1667
    %2297 = vmatpush.msra.mxu0 %v1663
    %2298 = vmatpush.msra.mxu0 %v1659
    %2299 = vmatpush.msra.mxu0 %v1655
    %2300 = vmatpush.msra.mxu0 %v1651
    %2301 = vmatpush.msra.mxu0 %v1647
    %2302 = vmatpush.msra.mxu0 %v1643
    %2303 = vmatpush.msra.mxu0 %v1639
    %2304 = vmatpush.msra.mxu0 %v1635
    %2305 = vmatpush.msra.mxu0 %v1631
    %2306 = vmatpush.msra.mxu0 %v1627
    %2307 = vmatpush.msra.mxu0 %v1623
    %2308 = vmatpush.msra.mxu0 %v1619
    %2309 = vmatpush.msra.mxu0 %v1615
    %2310 = vmatmul.f32.gmra.mxu0 %v2293
    %v2311 = vpop.f32.mrf.mxu0
    %v2312 = vadd.f32 0.0, %v2311
    %2313 = vdwg.mxu0
    %2314 = vmatpush.msra.mxu0 %v1676
    %2315 = vmatpush.msra.mxu0 %v1672
    %2316 = vmatpush.msra.mxu0 %v1668
    %2317 = vmatpush.msra.mxu0 %v1664
    %2318 = vmatpush.msra.mxu0 %v1660
    %2319 = vmatpush.msra.mxu0 %v1656
    %2320 = vmatpush.msra.mxu0 %v1652
    %2321 = vmatpush.msra.mxu0 %v1648
    %2322 = vmatpush.msra.mxu0 %v1644
    %2323 = vmatpush.msra.mxu0 %v1640
    %2324 = vmatpush.msra.mxu0 %v1636
    %2325 = vmatpush.msra.mxu0 %v1632
    %2326 = vmatpush.msra.mxu0 %v1628
    %2327 = vmatpush.msra.mxu0 %v1624
    %2328 = vmatpush.msra.mxu0 %v1620
    %2329 = vmatpush.msra.mxu0 %v1616
    %2330 = vmatmul.f32.gmra.mxu0 %v2293
    %v2331 = vpop.f32.mrf.mxu0
    %v2332 = vadd.f32 0.0, %v2331
    %2333 = vdwg.mxu0
    %2334 = vmatpush.msra.mxu0 %v1677
    %2335 = vmatpush.msra.mxu0 %v1673
    %2336 = vmatpush.msra.mxu0 %v1669
    %2337 = vmatpush.msra.mxu0 %v1665
    %2338 = vmatpush.msra.mxu0 %v1661
    %2339 = vmatpush.msra.mxu0 %v1657
    %2340 = vmatpush.msra.mxu0 %v1653
    %2341 = vmatpush.msra.mxu0 %v1649
    %2342 = vmatpush.msra.mxu0 %v1645
    %2343 = vmatpush.msra.mxu0 %v1641
    %2344 = vmatpush.msra.mxu0 %v1637
    %2345 = vmatpush.msra.mxu0 %v1633
    %2346 = vmatpush.msra.mxu0 %v1629
    %2347 = vmatpush.msra.mxu0 %v1625
    %2348 = vmatpush.msra.mxu0 %v1621
    %2349 = vmatpush.msra.mxu0 %v1617
    %2350 = vmatmul.f32.gmra.mxu0 %v2293
    %v2351 = vpop.f32.mrf.mxu0
    %v2352 = vadd.f32 0.0, %v2351
    %2353 = vdwg.mxu0
    %2354 = vmatpush.msra.mxu0 %v1678
    %2355 = vmatpush.msra.mxu0 %v1674
    %2356 = vmatpush.msra.mxu0 %v1670
    %2357 = vmatpush.msra.mxu0 %v1666
    %2358 = vmatpush.msra.mxu0 %v1662
    %2359 = vmatpush.msra.mxu0 %v1658
    %2360 = vmatpush.msra.mxu0 %v1654
    %2361 = vmatpush.msra.mxu0 %v1650
    %2362 = vmatpush.msra.mxu0 %v1646
    %2363 = vmatpush.msra.mxu0 %v1642
    %2364 = vmatpush.msra.mxu0 %v1638
    %2365 = vmatpush.msra.mxu0 %v1634
    %2366 = vmatpush.msra.mxu0 %v1630
    %2367 = vmatpush.msra.mxu0 %v1626
    %2368 = vmatpush.msra.mxu0 %v1622
    %2369 = vmatpush.msra.mxu0 %v1618
    %2370 = vmatmul.f32.gmra.mxu0 %v2293
    %v2371 = vpop.f32.mrf.mxu0
    %v2372 = vadd.f32 0.0, %v2371
    %2373 = vdwg.mxu0
    %v2374 = vadd.f32 %v1716, %v2312
    %v2375 = vadd.f32 %v1757, %v2332
    %v2376 = vadd.f32 %v1798, %v2352
    %v2377 = vadd.f32 %v1839, %v2372
    %v2378 = vxor.u32 %v2374, 2147483648
    %v2379 = vmul.f32 %v2378, 1.442695
    %v2380 = vpow.pop %v2379
    %v2381 = vadd.f32 %v2380, 1.0
    %v2382 = vrcp.pop %v2381
    %v2383 = vmul.f32 %v2381, %v2382
    %v2384 = vsub.f32 1.0, %v2383
    %v2385 = vmul.f32 %v2382, %v2384
    %v2386 = vadd.f32 %v2382, %v2385
    %vm2387 = vweird.f32 %v2381
    %vm2388 = vweird.f32 %v2382
    %vm2389 = vmor %vm2387, %vm2388
    %v2390 = vsel %vm2389, %v2382, %v2386
    %v2391 = vand.u32 2147483647, %v2381
    %vm2392 = vcmp.eq.f32.partialorder %v2391, 8.507059e+37
    %v2393 = vand.u32 %v2381, 2147483648
    %v2394 = vor.u32 1.1754944e-38, %v2393
    %v2395 = vsel %vm2392, %v2394, %v2390
    %v2396 = vmul.f32 1.0, %v2395
    %v2397 = vxor.u32 %v2375, 2147483648
    %v2398 = vmul.f32 %v2397, 1.442695
    %v2399 = vpow.pop %v2398
    %v2400 = vadd.f32 %v2399, 1.0
    %v2401 = vrcp.pop %v2400
    %v2402 = vmul.f32 %v2400, %v2401
    %v2403 = vsub.f32 1.0, %v2402
    %v2404 = vmul.f32 %v2401, %v2403
    %v2405 = vadd.f32 %v2401, %v2404
    %vm2406 = vweird.f32 %v2400
    %vm2407 = vweird.f32 %v2401
    %vm2408 = vmor %vm2406, %vm2407
    %v2409 = vsel %vm2408, %v2401, %v2405
    %v2410 = vand.u32 2147483647, %v2400
    %vm2411 = vcmp.eq.f32.partialorder %v2410, 8.507059e+37
    %v2412 = vand.u32 %v2400, 2147483648
    %v2413 = vor.u32 1.1754944e-38, %v2412
    %v2414 = vsel %vm2411, %v2413, %v2409
    %v2415 = vmul.f32 1.0, %v2414
    %v2416 = vtanh.pop %v2376
    %v2417 = vxor.u32 %v2377, 2147483648
    %v2418 = vmul.f32 %v2417, 1.442695
    %v2419 = vpow.pop %v2418
    %v2420 = vadd.f32 %v2419, 1.0
    %v2421 = vrcp.pop %v2420
    %v2422 = vmul.f32 %v2420, %v2421
    %v2423 = vsub.f32 1.0, %v2422
    %v2424 = vmul.f32 %v2421, %v2423
    %v2425 = vadd.f32 %v2421, %v2424
    %vm2426 = vweird.f32 %v2420
    %vm2427 = vweird.f32 %v2421
    %vm2428 = vmor %vm2426, %vm2427
    %v2429 = vsel %vm2428, %v2421, %v2425
    %v2430 = vand.u32 2147483647, %v2420
    %vm2431 = vcmp.eq.f32.partialorder %v2430, 8.507059e+37
    %v2432 = vand.u32 %v2420, 2147483648
    %v2433 = vor.u32 1.1754944e-38, %v2432
    %v2434 = vsel %vm2431, %v2433, %v2429
    %v2435 = vmul.f32 1.0, %v2434
    %v2436 = vmul.f32 %v2415, %v2291
    %v2437 = vmul.f32 %v2396, %v2416
    %v2438 = vadd.f32 %v2436, %v2437
    %v2439 = vtanh.pop %v2438
    %v2440 = vmul.f32 %v2435, %v2439
    %2441 = vmatpush.msra.mxu0 %v1675
    %2442 = vmatpush.msra.mxu0 %v1671
    %2443 = vmatpush.msra.mxu0 %v1667
    %2444 = vmatpush.msra.mxu0 %v1663
    %2445 = vmatpush.msra.mxu0 %v1659
    %2446 = vmatpush.msra.mxu0 %v1655
    %2447 = vmatpush.msra.mxu0 %v1651
    %2448 = vmatpush.msra.mxu0 %v1647
    %2449 = vmatpush.msra.mxu0 %v1643
    %2450 = vmatpush.msra.mxu0 %v1639
    %2451 = vmatpush.msra.mxu0 %v1635
    %2452 = vmatpush.msra.mxu0 %v1631
    %2453 = vmatpush.msra.mxu0 %v1627
    %2454 = vmatpush.msra.mxu0 %v1623
    %2455 = vmatpush.msra.mxu0 %v1619
    %2456 = vmatpush.msra.mxu0 %v1615
    %2457 = vmatmul.f32.gmra.mxu0 %v2440
    %v2458 = vpop.f32.mrf.mxu0
    %v2459 = vadd.f32 0.0, %v2458
    %2460 = vdwg.mxu0
    %2461 = vmatpush.msra.mxu0 %v1676
    %2462 = vmatpush.msra.mxu0 %v1672
    %2463 = vmatpush.msra.mxu0 %v1668
    %2464 = vmatpush.msra.mxu0 %v1664
    %2465 = vmatpush.msra.mxu0 %v1660
    %2466 = vmatpush.msra.mxu0 %v1656
    %2467 = vmatpush.msra.mxu0 %v1652
    %2468 = vmatpush.msra.mxu0 %v1648
    %2469 = vmatpush.msra.mxu0 %v1644
    %2470 = vmatpush.msra.mxu0 %v1640
    %2471 = vmatpush.msra.mxu0 %v1636
    %2472 = vmatpush.msra.mxu0 %v1632
    %2473 = vmatpush.msra.mxu0 %v1628
    %2474 = vmatpush.msra.mxu0 %v1624
    %2475 = vmatpush.msra.mxu0 %v1620
    %2476 = vmatpush.msra.mxu0 %v1616
    %2477 = vmatmul.f32.gmra.mxu0 %v2440
    %v2478 = vpop.f32.mrf.mxu0
    %v2479 = vadd.f32 0.0, %v2478
    %2480 = vdwg.mxu0
    %2481 = vmatpush.msra.mxu0 %v1677
    %2482 = vmatpush.msra.mxu0 %v1673
    %2483 = vmatpush.msra.mxu0 %v1669
    %2484 = vmatpush.msra.mxu0 %v1665
    %2485 = vmatpush.msra.mxu0 %v1661
    %2486 = vmatpush.msra.mxu0 %v1657
    %2487 = vmatpush.msra.mxu0 %v1653
    %2488 = vmatpush.msra.mxu0 %v1649
    %2489 = vmatpush.msra.mxu0 %v1645
    %2490 = vmatpush.msra.mxu0 %v1641
    %2491 = vmatpush.msra.mxu0 %v1637
    %2492 = vmatpush.msra.mxu0 %v1633
    %2493 = vmatpush.msra.mxu0 %v1629
    %2494 = vmatpush.msra.mxu0 %v1625
    %2495 = vmatpush.msra.mxu0 %v1621
    %2496 = vmatpush.msra.mxu0 %v1617
    %2497 = vmatmul.f32.gmra.mxu0 %v2440
    %v2498 = vpop.f32.mrf.mxu0
    %v2499 = vadd.f32 0.0, %v2498
    %2500 = vdwg.mxu0
    %2501 = vmatpush.msra.mxu0 %v1678
    %2502 = vmatpush.msra.mxu0 %v1674
    %2503 = vmatpush.msra.mxu0 %v1670
    %2504 = vmatpush.msra.mxu0 %v1666
    %2505 = vmatpush.msra.mxu0 %v1662
    %2506 = vmatpush.msra.mxu0 %v1658
    %2507 = vmatpush.msra.mxu0 %v1654
    %2508 = vmatpush.msra.mxu0 %v1650
    %2509 = vmatpush.msra.mxu0 %v1646
    %2510 = vmatpush.msra.mxu0 %v1642
    %2511 = vmatpush.msra.mxu0 %v1638
    %2512 = vmatpush.msra.mxu0 %v1634
    %2513 = vmatpush.msra.mxu0 %v1630
    %2514 = vmatpush.msra.mxu0 %v1626
    %2515 = vmatpush.msra.mxu0 %v1622
    %2516 = vmatpush.msra.mxu0 %v1618
    %2517 = vmatmul.f32.gmra.mxu0 %v2440
    %v2518 = vpop.f32.mrf.mxu0
    %v2519 = vadd.f32 0.0, %v2518
    %2520 = vdwg.mxu0
    %v2521 = vadd.f32 %v1719, %v2459
    %v2522 = vadd.f32 %v1760, %v2479
    %v2523 = vadd.f32 %v1801, %v2499
    %v2524 = vadd.f32 %v1842, %v2519
    %v2525 = vxor.u32 %v2521, 2147483648
    %v2526 = vmul.f32 %v2525, 1.442695
    %v2527 = vpow.pop %v2526
    %v2528 = vadd.f32 %v2527, 1.0
    %v2529 = vrcp.pop %v2528
    %v2530 = vmul.f32 %v2528, %v2529
    %v2531 = vsub.f32 1.0, %v2530
    %v2532 = vmul.f32 %v2529, %v2531
    %v2533 = vadd.f32 %v2529, %v2532
    %vm2534 = vweird.f32 %v2528
    %vm2535 = vweird.f32 %v2529
    %vm2536 = vmor %vm2534, %vm2535
    %v2537 = vsel %vm2536, %v2529, %v2533
    %v2538 = vand.u32 2147483647, %v2528
    %vm2539 = vcmp.eq.f32.partialorder %v2538, 8.507059e+37
    %v2540 = vand.u32 %v2528, 2147483648
    %v2541 = vor.u32 1.1754944e-38, %v2540
    %v2542 = vsel %vm2539, %v2541, %v2537
    %v2543 = vmul.f32 1.0, %v2542
    %v2544 = vxor.u32 %v2522, 2147483648
    %v2545 = vmul.f32 %v2544, 1.442695
    %v2546 = vpow.pop %v2545
    %v2547 = vadd.f32 %v2546, 1.0
    %v2548 = vrcp.pop %v2547
    %v2549 = vmul.f32 %v2547, %v2548
    %v2550 = vsub.f32 1.0, %v2549
    %v2551 = vmul.f32 %v2548, %v2550
    %v2552 = vadd.f32 %v2548, %v2551
    %vm2553 = vweird.f32 %v2547
    %vm2554 = vweird.f32 %v2548
    %vm2555 = vmor %vm2553, %vm2554
    %v2556 = vsel %vm2555, %v2548, %v2552
    %v2557 = vand.u32 2147483647, %v2547
    %vm2558 = vcmp.eq.f32.partialorder %v2557, 8.507059e+37
    %v2559 = vand.u32 %v2547, 2147483648
    %v2560 = vor.u32 1.1754944e-38, %v2559
    %v2561 = vsel %vm2558, %v2560, %v2556
    %v2562 = vmul.f32 1.0, %v2561
    %v2563 = vtanh.pop %v2523
    %v2564 = vxor.u32 %v2524, 2147483648
    %v2565 = vmul.f32 %v2564, 1.442695
    %v2566 = vpow.pop %v2565
    %v2567 = vadd.f32 %v2566, 1.0
    %v2568 = vrcp.pop %v2567
    %v2569 = vmul.f32 %v2567, %v2568
    %v2570 = vsub.f32 1.0, %v2569
    %v2571 = vmul.f32 %v2568, %v2570
    %v2572 = vadd.f32 %v2568, %v2571
    %vm2573 = vweird.f32 %v2567
    %vm2574 = vweird.f32 %v2568
    %vm2575 = vmor %vm2573, %vm2574
    %v2576 = vsel %vm2575, %v2568, %v2572
    %v2577 = vand.u32 2147483647, %v2567
    %vm2578 = vcmp.eq.f32.partialorder %v2577, 8.507059e+37
    %v2579 = vand.u32 %v2567, 2147483648
    %v2580 = vor.u32 1.1754944e-38, %v2579
    %v2581 = vsel %vm2578, %v2580, %v2576
    %v2582 = vmul.f32 1.0, %v2581
    %v2583 = vmul.f32 %v2562, %v2438
    %v2584 = vmul.f32 %v2543, %v2563
    %v2585 = vadd.f32 %v2583, %v2584
    %v2586 = vtanh.pop %v2585
    %v2587 = vmul.f32 %v2582, %v2586
    %2588 = vmatpush.msra.mxu0 %v1675
    %2589 = vmatpush.msra.mxu0 %v1671
    %2590 = vmatpush.msra.mxu0 %v1667
    %2591 = vmatpush.msra.mxu0 %v1663
    %2592 = vmatpush.msra.mxu0 %v1659
    %2593 = vmatpush.msra.mxu0 %v1655
    %2594 = vmatpush.msra.mxu0 %v1651
    %2595 = vmatpush.msra.mxu0 %v1647
    %2596 = vmatpush.msra.mxu0 %v1643
    %2597 = vmatpush.msra.mxu0 %v1639
    %2598 = vmatpush.msra.mxu0 %v1635
    %2599 = vmatpush.msra.mxu0 %v1631
    %2600 = vmatpush.msra.mxu0 %v1627
    %2601 = vmatpush.msra.mxu0 %v1623
    %2602 = vmatpush.msra.mxu0 %v1619
    %2603 = vmatpush.msra.mxu0 %v1615
    %2604 = vmatmul.f32.gmra.mxu0 %v2587
    %v2605 = vpop.f32.mrf.mxu0
    %v2606 = vadd.f32 0.0, %v2605
    %2607 = vdwg.mxu0
    %2608 = vmatpush.msra.mxu0 %v1676
    %2609 = vmatpush.msra.mxu0 %v1672
    %2610 = vmatpush.msra.mxu0 %v1668
    %2611 = vmatpush.msra.mxu0 %v1664
    %2612 = vmatpush.msra.mxu0 %v1660
    %2613 = vmatpush.msra.mxu0 %v1656
    %2614 = vmatpush.msra.mxu0 %v1652
    %2615 = vmatpush.msra.mxu0 %v1648
    %2616 = vmatpush.msra.mxu0 %v1644
    %2617 = vmatpush.msra.mxu0 %v1640
    %2618 = vmatpush.msra.mxu0 %v1636
    %2619 = vmatpush.msra.mxu0 %v1632
    %2620 = vmatpush.msra.mxu0 %v1628
    %2621 = vmatpush.msra.mxu0 %v1624
    %2622 = vmatpush.msra.mxu0 %v1620
    %2623 = vmatpush.msra.mxu0 %v1616
    %2624 = vmatmul.f32.gmra.mxu0 %v2587
    %v2625 = vpop.f32.mrf.mxu0
    %v2626 = vadd.f32 0.0, %v2625
    %2627 = vdwg.mxu0
    %2628 = vmatpush.msra.mxu0 %v1677
    %2629 = vmatpush.msra.mxu0 %v1673
    %2630 = vmatpush.msra.mxu0 %v1669
    %2631 = vmatpush.msra.mxu0 %v1665
    %2632 = vmatpush.msra.mxu0 %v1661
    %2633 = vmatpush.msra.mxu0 %v1657
    %2634 = vmatpush.msra.mxu0 %v1653
    %2635 = vmatpush.msra.mxu0 %v1649
    %2636 = vmatpush.msra.mxu0 %v1645
    %2637 = vmatpush.msra.mxu0 %v1641
    %2638 = vmatpush.msra.mxu0 %v1637
    %2639 = vmatpush.msra.mxu0 %v1633
    %2640 = vmatpush.msra.mxu0 %v1629
    %2641 = vmatpush.msra.mxu0 %v1625
    %2642 = vmatpush.msra.mxu0 %v1621
    %2643 = vmatpush.msra.mxu0 %v1617
    %2644 = vmatmul.f32.gmra.mxu0 %v2587
    %v2645 = vpop.f32.mrf.mxu0
    %v2646 = vadd.f32 0.0, %v2645
    %2647 = vdwg.mxu0
    %2648 = vmatpush.msra.mxu0 %v1678
    %2649 = vmatpush.msra.mxu0 %v1674
    %2650 = vmatpush.msra.mxu0 %v1670
    %2651 = vmatpush.msra.mxu0 %v1666
    %2652 = vmatpush.msra.mxu0 %v1662
    %2653 = vmatpush.msra.mxu0 %v1658
    %2654 = vmatpush.msra.mxu0 %v1654
    %2655 = vmatpush.msra.mxu0 %v1650
    %2656 = vmatpush.msra.mxu0 %v1646
    %2657 = vmatpush.msra.mxu0 %v1642
    %2658 = vmatpush.msra.mxu0 %v1638
    %2659 = vmatpush.msra.mxu0 %v1634
    %2660 = vmatpush.msra.mxu0 %v1630
    %2661 = vmatpush.msra.mxu0 %v1626
    %2662 = vmatpush.msra.mxu0 %v1622
    %2663 = vmatpush.msra.mxu0 %v1618
    %2664 = vmatmul.f32.gmra.mxu0 %v2587
    %v2665 = vpop.f32.mrf.mxu0
    %v2666 = vadd.f32 0.0, %v2665
    %2667 = vdwg.mxu0
    %v2668 = vadd.f32 %v1722, %v2606
    %v2669 = vadd.f32 %v1763, %v2626
    %v2670 = vadd.f32 %v1804, %v2646
    %v2671 = vadd.f32 %v1845, %v2666
    %v2672 = vxor.u32 %v2668, 2147483648
    %v2673 = vmul.f32 %v2672, 1.442695
    %v2674 = vpow.pop %v2673
    %v2675 = vadd.f32 %v2674, 1.0
    %v2676 = vrcp.pop %v2675
    %v2677 = vmul.f32 %v2675, %v2676
    %v2678 = vsub.f32 1.0, %v2677
    %v2679 = vmul.f32 %v2676, %v2678
    %v2680 = vadd.f32 %v2676, %v2679
    %vm2681 = vweird.f32 %v2675
    %vm2682 = vweird.f32 %v2676
    %vm2683 = vmor %vm2681, %vm2682
    %v2684 = vsel %vm2683, %v2676, %v2680
    %v2685 = vand.u32 2147483647, %v2675
    %vm2686 = vcmp.eq.f32.partialorder %v2685, 8.507059e+37
    %v2687 = vand.u32 %v2675, 2147483648
    %v2688 = vor.u32 1.1754944e-38, %v2687
    %v2689 = vsel %vm2686, %v2688, %v2684
    %v2690 = vmul.f32 1.0, %v2689
    %v2691 = vxor.u32 %v2669, 2147483648
    %v2692 = vmul.f32 %v2691, 1.442695
    %v2693 = vpow.pop %v2692
    %v2694 = vadd.f32 %v2693, 1.0
    %v2695 = vrcp.pop %v2694
    %v2696 = vmul.f32 %v2694, %v2695
    %v2697 = vsub.f32 1.0, %v2696
    %v2698 = vmul.f32 %v2695, %v2697
    %v2699 = vadd.f32 %v2695, %v2698
    %vm2700 = vweird.f32 %v2694
    %vm2701 = vweird.f32 %v2695
    %vm2702 = vmor %vm2700, %vm2701
    %v2703 = vsel %vm2702, %v2695, %v2699
    %v2704 = vand.u32 2147483647, %v2694
    %vm2705 = vcmp.eq.f32.partialorder %v2704, 8.507059e+37
    %v2706 = vand.u32 %v2694, 2147483648
    %v2707 = vor.u32 1.1754944e-38, %v2706
    %v2708 = vsel %vm2705, %v2707, %v2703
    %v2709 = vmul.f32 1.0, %v2708
    %v2710 = vtanh.pop %v2670
    %v2711 = vxor.u32 %v2671, 2147483648
    %v2712 = vmul.f32 %v2711, 1.442695
    %v2713 = vpow.pop %v2712
    %v2714 = vadd.f32 %v2713, 1.0
    %v2715 = vrcp.pop %v2714
    %v2716 = vmul.f32 %v2714, %v2715
    %v2717 = vsub.f32 1.0, %v2716
    %v2718 = vmul.f32 %v2715, %v2717
    %v2719 = vadd.f32 %v2715, %v2718
    %vm2720 = vweird.f32 %v2714
    %vm2721 = vweird.f32 %v2715
    %vm2722 = vmor %vm2720, %vm2721
    %v2723 = vsel %vm2722, %v2715, %v2719
    %v2724 = vand.u32 2147483647, %v2714
    %vm2725 = vcmp.eq.f32.partialorder %v2724, 8.507059e+37
    %v2726 = vand.u32 %v2714, 2147483648
    %v2727 = vor.u32 1.1754944e-38, %v2726
    %v2728 = vsel %vm2725, %v2727, %v2723
    %v2729 = vmul.f32 1.0, %v2728
    %v2730 = vmul.f32 %v2709, %v2585
    %v2731 = vmul.f32 %v2690, %v2710
    %v2732 = vadd.f32 %v2730, %v2731
    %v2733 = vtanh.pop %v2732
    %v2734 = vmul.f32 %v2729, %v2733
    %2735 = vmatpush.msra.mxu0 %v1675
    %2736 = vmatpush.msra.mxu0 %v1671
    %2737 = vmatpush.msra.mxu0 %v1667
    %2738 = vmatpush.msra.mxu0 %v1663
    %2739 = vmatpush.msra.mxu0 %v1659
    %2740 = vmatpush.msra.mxu0 %v1655
    %2741 = vmatpush.msra.mxu0 %v1651
    %2742 = vmatpush.msra.mxu0 %v1647
    %2743 = vmatpush.msra.mxu0 %v1643
    %2744 = vmatpush.msra.mxu0 %v1639
    %2745 = vmatpush.msra.mxu0 %v1635
    %2746 = vmatpush.msra.mxu0 %v1631
    %2747 = vmatpush.msra.mxu0 %v1627
    %2748 = vmatpush.msra.mxu0 %v1623
    %2749 = vmatpush.msra.mxu0 %v1619
    %2750 = vmatpush.msra.mxu0 %v1615
    %2751 = vmatmul.f32.gmra.mxu0 %v2734
    %v2752 = vpop.f32.mrf.mxu0
    %v2753 = vadd.f32 0.0, %v2752
    %2754 = vdwg.mxu0
    %2755 = vmatpush.msra.mxu0 %v1676
    %2756 = vmatpush.msra.mxu0 %v1672
    %2757 = vmatpush.msra.mxu0 %v1668
    %2758 = vmatpush.msra.mxu0 %v1664
    %2759 = vmatpush.msra.mxu0 %v1660
    %2760 = vmatpush.msra.mxu0 %v1656
    %2761 = vmatpush.msra.mxu0 %v1652
    %2762 = vmatpush.msra.mxu0 %v1648
    %2763 = vmatpush.msra.mxu0 %v1644
    %2764 = vmatpush.msra.mxu0 %v1640
    %2765 = vmatpush.msra.mxu0 %v1636
    %2766 = vmatpush.msra.mxu0 %v1632
    %2767 = vmatpush.msra.mxu0 %v1628
    %2768 = vmatpush.msra.mxu0 %v1624
    %2769 = vmatpush.msra.mxu0 %v1620
    %2770 = vmatpush.msra.mxu0 %v1616
    %2771 = vmatmul.f32.gmra.mxu0 %v2734
    %v2772 = vpop.f32.mrf.mxu0
    %v2773 = vadd.f32 0.0, %v2772
    %2774 = vdwg.mxu0
    %2775 = vmatpush.msra.mxu0 %v1677
    %2776 = vmatpush.msra.mxu0 %v1673
    %2777 = vmatpush.msra.mxu0 %v1669
    %2778 = vmatpush.msra.mxu0 %v1665
    %2779 = vmatpush.msra.mxu0 %v1661
    %2780 = vmatpush.msra.mxu0 %v1657
    %2781 = vmatpush.msra.mxu0 %v1653
    %2782 = vmatpush.msra.mxu0 %v1649
    %2783 = vmatpush.msra.mxu0 %v1645
    %2784 = vmatpush.msra.mxu0 %v1641
    %2785 = vmatpush.msra.mxu0 %v1637
    %2786 = vmatpush.msra.mxu0 %v1633
    %2787 = vmatpush.msra.mxu0 %v1629
    %2788 = vmatpush.msra.mxu0 %v1625
    %2789 = vmatpush.msra.mxu0 %v1621
    %2790 = vmatpush.msra.mxu0 %v1617
    %2791 = vmatmul.f32.gmra.mxu0 %v2734
    %v2792 = vpop.f32.mrf.mxu0
    %v2793 = vadd.f32 0.0, %v2792
    %2794 = vdwg.mxu0
    %2795 = vmatpush.msra.mxu0 %v1678
    %2796 = vmatpush.msra.mxu0 %v1674
    %2797 = vmatpush.msra.mxu0 %v1670
    %2798 = vmatpush.msra.mxu0 %v1666
    %2799 = vmatpush.msra.mxu0 %v1662
    %2800 = vmatpush.msra.mxu0 %v1658
    %2801 = vmatpush.msra.mxu0 %v1654
    %2802 = vmatpush.msra.mxu0 %v1650
    %2803 = vmatpush.msra.mxu0 %v1646
    %2804 = vmatpush.msra.mxu0 %v1642
    %2805 = vmatpush.msra.mxu0 %v1638
    %2806 = vmatpush.msra.mxu0 %v1634
    %2807 = vmatpush.msra.mxu0 %v1630
    %2808 = vmatpush.msra.mxu0 %v1626
    %2809 = vmatpush.msra.mxu0 %v1622
    %2810 = vmatpush.msra.mxu0 %v1618
    %2811 = vmatmul.f32.gmra.mxu0 %v2734
    %v2812 = vpop.f32.mrf.mxu0
    %v2813 = vadd.f32 0.0, %v2812
    %2814 = vdwg.mxu0
    %v2815 = vadd.f32 %v1725, %v2753
    %v2816 = vadd.f32 %v1766, %v2773
    %v2817 = vadd.f32 %v1807, %v2793
    %v2818 = vadd.f32 %v1848, %v2813
    %v2819 = vxor.u32 %v2815, 2147483648
    %v2820 = vmul.f32 %v2819, 1.442695
    %v2821 = vpow.pop %v2820
    %v2822 = vadd.f32 %v2821, 1.0
    %v2823 = vrcp.pop %v2822
    %v2824 = vmul.f32 %v2822, %v2823
    %v2825 = vsub.f32 1.0, %v2824
    %v2826 = vmul.f32 %v2823, %v2825
    %v2827 = vadd.f32 %v2823, %v2826
    %vm2828 = vweird.f32 %v2822
    %vm2829 = vweird.f32 %v2823
    %vm2830 = vmor %vm2828, %vm2829
    %v2831 = vsel %vm2830, %v2823, %v2827
    %v2832 = vand.u32 2147483647, %v2822
    %vm2833 = vcmp.eq.f32.partialorder %v2832, 8.507059e+37
    %v2834 = vand.u32 %v2822, 2147483648
    %v2835 = vor.u32 1.1754944e-38, %v2834
    %v2836 = vsel %vm2833, %v2835, %v2831
    %v2837 = vmul.f32 1.0, %v2836
    %v2838 = vxor.u32 %v2816, 2147483648
    %v2839 = vmul.f32 %v2838, 1.442695
    %v2840 = vpow.pop %v2839
    %v2841 = vadd.f32 %v2840, 1.0
    %v2842 = vrcp.pop %v2841
    %v2843 = vmul.f32 %v2841, %v2842
    %v2844 = vsub.f32 1.0, %v2843
    %v2845 = vmul.f32 %v2842, %v2844
    %v2846 = vadd.f32 %v2842, %v2845
    %vm2847 = vweird.f32 %v2841
    %vm2848 = vweird.f32 %v2842
    %vm2849 = vmor %vm2847, %vm2848
    %v2850 = vsel %vm2849, %v2842, %v2846
    %v2851 = vand.u32 2147483647, %v2841
    %vm2852 = vcmp.eq.f32.partialorder %v2851, 8.507059e+37
    %v2853 = vand.u32 %v2841, 2147483648
    %v2854 = vor.u32 1.1754944e-38, %v2853
    %v2855 = vsel %vm2852, %v2854, %v2850
    %v2856 = vmul.f32 1.0, %v2855
    %v2857 = vtanh.pop %v2817
    %v2858 = vxor.u32 %v2818, 2147483648
    %v2859 = vmul.f32 %v2858, 1.442695
    %v2860 = vpow.pop %v2859
    %v2861 = vadd.f32 %v2860, 1.0
    %v2862 = vrcp.pop %v2861
    %v2863 = vmul.f32 %v2861, %v2862
    %v2864 = vsub.f32 1.0, %v2863
    %v2865 = vmul.f32 %v2862, %v2864
    %v2866 = vadd.f32 %v2862, %v2865
    %vm2867 = vweird.f32 %v2861
    %vm2868 = vweird.f32 %v2862
    %vm2869 = vmor %vm2867, %vm2868
    %v2870 = vsel %vm2869, %v2862, %v2866
    %v2871 = vand.u32 2147483647, %v2861
    %vm2872 = vcmp.eq.f32.partialorder %v2871, 8.507059e+37
    %v2873 = vand.u32 %v2861, 2147483648
    %v2874 = vor.u32 1.1754944e-38, %v2873
    %v2875 = vsel %vm2872, %v2874, %v2870
    %v2876 = vmul.f32 1.0, %v2875
    %v2877 = vmul.f32 %v2856, %v2732
    %v2878 = vmul.f32 %v2837, %v2857
    %v2879 = vadd.f32 %v2877, %v2878
    %v2880 = vtanh.pop %v2879
    %v2881 = vmul.f32 %v2876, %v2880
    %2882 = vmatpush.msra.mxu0 %v1675
    %2883 = vmatpush.msra.mxu0 %v1671
    %2884 = vmatpush.msra.mxu0 %v1667
    %2885 = vmatpush.msra.mxu0 %v1663
    %2886 = vmatpush.msra.mxu0 %v1659
    %2887 = vmatpush.msra.mxu0 %v1655
    %2888 = vmatpush.msra.mxu0 %v1651
    %2889 = vmatpush.msra.mxu0 %v1647
    %2890 = vmatpush.msra.mxu0 %v1643
    %2891 = vmatpush.msra.mxu0 %v1639
    %2892 = vmatpush.msra.mxu0 %v1635
    %2893 = vmatpush.msra.mxu0 %v1631
    %2894 = vmatpush.msra.mxu0 %v1627
    %2895 = vmatpush.msra.mxu0 %v1623
    %2896 = vmatpush.msra.mxu0 %v1619
    %2897 = vmatpush.msra.mxu0 %v1615
    %2898 = vmatmul.f32.gmra.mxu0 %v2881
    %v2899 = vpop.f32.mrf.mxu0
    %v2900 = vadd.f32 0.0, %v2899
    %2901 = vdwg.mxu0
    %2902 = vmatpush.msra.mxu0 %v1676
    %2903 = vmatpush.msra.mxu0 %v1672
    %2904 = vmatpush.msra.mxu0 %v1668
    %2905 = vmatpush.msra.mxu0 %v1664
    %2906 = vmatpush.msra.mxu0 %v1660
    %2907 = vmatpush.msra.mxu0 %v1656
    %2908 = vmatpush.msra.mxu0 %v1652
    %2909 = vmatpush.msra.mxu0 %v1648
    %2910 = vmatpush.msra.mxu0 %v1644
    %2911 = vmatpush.msra.mxu0 %v1640
    %2912 = vmatpush.msra.mxu0 %v1636
    %2913 = vmatpush.msra.mxu0 %v1632
    %2914 = vmatpush.msra.mxu0 %v1628
    %2915 = vmatpush.msra.mxu0 %v1624
    %2916 = vmatpush.msra.mxu0 %v1620
    %2917 = vmatpush.msra.mxu0 %v1616
    %2918 = vmatmul.f32.gmra.mxu0 %v2881
    %v2919 = vpop.f32.mrf.mxu0
    %v2920 = vadd.f32 0.0, %v2919
    %2921 = vdwg.mxu0
    %2922 = vmatpush.msra.mxu0 %v1677
    %2923 = vmatpush.msra.mxu0 %v1673
    %2924 = vmatpush.msra.mxu0 %v1669
    %2925 = vmatpush.msra.mxu0 %v1665
    %2926 = vmatpush.msra.mxu0 %v1661
    %2927 = vmatpush.msra.mxu0 %v1657
    %2928 = vmatpush.msra.mxu0 %v1653
    %2929 = vmatpush.msra.mxu0 %v1649
    %2930 = vmatpush.msra.mxu0 %v1645
    %2931 = vmatpush.msra.mxu0 %v1641
    %2932 = vmatpush.msra.mxu0 %v1637
    %2933 = vmatpush.msra.mxu0 %v1633
    %2934 = vmatpush.msra.mxu0 %v1629
    %2935 = vmatpush.msra.mxu0 %v1625
    %2936 = vmatpush.msra.mxu0 %v1621
    %2937 = vmatpush.msra.mxu0 %v1617
    %2938 = vmatmul.f32.gmra.mxu0 %v2881
    %v2939 = vpop.f32.mrf.mxu0
    %v2940 = vadd.f32 0.0, %v2939
    %2941 = vdwg.mxu0
    %2942 = vmatpush.msra.mxu0 %v1678
    %2943 = vmatpush.msra.mxu0 %v1674
    %2944 = vmatpush.msra.mxu0 %v1670
    %2945 = vmatpush.msra.mxu0 %v1666
    %2946 = vmatpush.msra.mxu0 %v1662
    %2947 = vmatpush.msra.mxu0 %v1658
    %2948 = vmatpush.msra.mxu0 %v1654
    %2949 = vmatpush.msra.mxu0 %v1650
    %2950 = vmatpush.msra.mxu0 %v1646
    %2951 = vmatpush.msra.mxu0 %v1642
    %2952 = vmatpush.msra.mxu0 %v1638
    %2953 = vmatpush.msra.mxu0 %v1634
    %2954 = vmatpush.msra.mxu0 %v1630
    %2955 = vmatpush.msra.mxu0 %v1626
    %2956 = vmatpush.msra.mxu0 %v1622
    %2957 = vmatpush.msra.mxu0 %v1618
    %2958 = vmatmul.f32.gmra.mxu0 %v2881
    %v2959 = vpop.f32.mrf.mxu0
    %v2960 = vadd.f32 0.0, %v2959
    %2961 = vdwg.mxu0
    %v2962 = vadd.f32 %v1728, %v2900
    %v2963 = vadd.f32 %v1769, %v2920
    %v2964 = vadd.f32 %v1810, %v2940
    %v2965 = vadd.f32 %v1851, %v2960
    %v2966 = vxor.u32 %v2962, 2147483648
    %v2967 = vmul.f32 %v2966, 1.442695
    %v2968 = vpow.pop %v2967
    %v2969 = vadd.f32 %v2968, 1.0
    %v2970 = vrcp.pop %v2969
    %v2971 = vmul.f32 %v2969, %v2970
    %v2972 = vsub.f32 1.0, %v2971
    %v2973 = vmul.f32 %v2970, %v2972
    %v2974 = vadd.f32 %v2970, %v2973
    %vm2975 = vweird.f32 %v2969
    %vm2976 = vweird.f32 %v2970
    %vm2977 = vmor %vm2975, %vm2976
    %v2978 = vsel %vm2977, %v2970, %v2974
    %v2979 = vand.u32 2147483647, %v2969
    %vm2980 = vcmp.eq.f32.partialorder %v2979, 8.507059e+37
    %v2981 = vand.u32 %v2969, 2147483648
    %v2982 = vor.u32 1.1754944e-38, %v2981
    %v2983 = vsel %vm2980, %v2982, %v2978
    %v2984 = vmul.f32 1.0, %v2983
    %v2985 = vxor.u32 %v2963, 2147483648
    %v2986 = vmul.f32 %v2985, 1.442695
    %v2987 = vpow.pop %v2986
    %v2988 = vadd.f32 %v2987, 1.0
    %v2989 = vrcp.pop %v2988
    %v2990 = vmul.f32 %v2988, %v2989
    %v2991 = vsub.f32 1.0, %v2990
    %v2992 = vmul.f32 %v2989, %v2991
    %v2993 = vadd.f32 %v2989, %v2992
    %vm2994 = vweird.f32 %v2988
    %vm2995 = vweird.f32 %v2989
    %vm2996 = vmor %vm2994, %vm2995
    %v2997 = vsel %vm2996, %v2989, %v2993
    %v2998 = vand.u32 2147483647, %v2988
    %vm2999 = vcmp.eq.f32.partialorder %v2998, 8.507059e+37
    %v3000 = vand.u32 %v2988, 2147483648
    %v3001 = vor.u32 1.1754944e-38, %v3000
    %v3002 = vsel %vm2999, %v3001, %v2997
    %v3003 = vmul.f32 1.0, %v3002
    %v3004 = vtanh.pop %v2964
    %v3005 = vxor.u32 %v2965, 2147483648
    %v3006 = vmul.f32 %v3005, 1.442695
    %v3007 = vpow.pop %v3006
    %v3008 = vadd.f32 %v3007, 1.0
    %v3009 = vrcp.pop %v3008
    %v3010 = vmul.f32 %v3008, %v3009
    %v3011 = vsub.f32 1.0, %v3010
    %v3012 = vmul.f32 %v3009, %v3011
    %v3013 = vadd.f32 %v3009, %v3012
    %vm3014 = vweird.f32 %v3008
    %vm3015 = vweird.f32 %v3009
    %vm3016 = vmor %vm3014, %vm3015
    %v3017 = vsel %vm3016, %v3009, %v3013
    %v3018 = vand.u32 2147483647, %v3008
    %vm3019 = vcmp.eq.f32.partialorder %v3018, 8.507059e+37
    %v3020 = vand.u32 %v3008, 2147483648
    %v3021 = vor.u32 1.1754944e-38, %v3020
    %v3022 = vsel %vm3019, %v3021, %v3017
    %v3023 = vmul.f32 1.0, %v3022
    %v3024 = vmul.f32 %v3003, %v2879
    %v3025 = vmul.f32 %v2984, %v3004
    %v3026 = vadd.f32 %v3024, %v3025
    %v3027 = vtanh.pop %v3026
    %v3028 = vmul.f32 %v3023, %v3027
    %v3029 = vld [vmem:[#allocation8] sm:$0xff]
    %v3030 = vld [vmem:[#allocation8 + $0x8] sm:$0xff]
    %v3031 = vld [vmem:[#allocation8 + $0x10] sm:$0xff]
    %v3032 = vld [vmem:[#allocation8 + $0x18] sm:$0xff]
    %v3033 = vld [vmem:[#allocation8 + $0x20] sm:$0xff]
    %v3034 = vld [vmem:[#allocation8 + $0x28] sm:$0xff]
    %v3035 = vld [vmem:[#allocation8 + $0x30] sm:$0xff]
    %v3036 = vld [vmem:[#allocation8 + $0x38] sm:$0xff]
    %v3037 = vld [vmem:[#allocation8 + $0x40] sm:$0xff]
    %v3038 = vld [vmem:[#allocation8 + $0x48] sm:$0xff]
    %v3039 = vld [vmem:[#allocation8 + $0x50] sm:$0xff]
    %v3040 = vld [vmem:[#allocation8 + $0x58] sm:$0xff]
    %v3041 = vld [vmem:[#allocation8 + $0x60] sm:$0xff]
    %v3042 = vld [vmem:[#allocation8 + $0x68] sm:$0xff]
    %v3043 = vld [vmem:[#allocation8 + $0x70] sm:$0xff]
    %v3044 = vld [vmem:[#allocation8 + $0x78] sm:$0xff]
    %v3045 = vld [vmem:[%s8] sm:$0x1]
    %v3047 = vperm.slane %v3045, 0
    %3049 = vmatpush.msra.mxu0 %v3044
    %3050 = vmatpush.msra.mxu0 %v3043
    %3051 = vmatpush.msra.mxu0 %v3042
    %3052 = vmatpush.msra.mxu0 %v3041
    %3053 = vmatpush.msra.mxu0 %v3040
    %3054 = vmatpush.msra.mxu0 %v3039
    %3055 = vmatpush.msra.mxu0 %v3038
    %3056 = vmatpush.msra.mxu0 %v3037
    %3057 = vmatpush.msra.mxu0 %v3036
    %3058 = vmatpush.msra.mxu0 %v3035
    %3059 = vmatpush.msra.mxu0 %v3034
    %3060 = vmatpush.msra.mxu0 %v3033
    %3061 = vmatpush.msra.mxu0 %v3032
    %3062 = vmatpush.msra.mxu0 %v3031
    %3063 = vmatpush.msra.mxu0 %v3030
    %3064 = vmatpush.msra.mxu0 %v3029
    %3065 = vmatmul.f32.gmra.mxu0 %v3028
    %v3066 = vpop.f32.mrf.mxu0
    %v3067 = vadd.f32 %v3047, %v3066
    %3068 = vdwg.mxu0
    %3069 = vst [vmem:[#allocation10] sm:$0xff] %v3067
    // Predicated region
    $region54: #{tpu_custom_call.1} parent=1 // pred_check
      _
    $region55: #{tpu_custom_call.1} parent=1 // pred_check_branch
      %3071 = sbr.rel (0) target = $region57
    $region56: #{tpu_custom_call.1} parent=1 // pred_region
      %3073 = vsyncadd [#allocation4], 0
      %s3075 = sshll.u32 [#allocation10], 4
      %s3076 = int_to_ptr.vmem [resolvable:$true] %s3075
      %s3077 = sshll.u32 %s9, 4
      %s3078 = int_to_ptr.hbm [resolvable:$true] %s3077
      %3080 = dma.vmem_to_hbm [thread:$0]  %s3076, 128, %s3078, [#allocation4]
    $region57: #{tpu_custom_call.1} parent=1 // pred_fallthru
      _
    // Predicated region
    $region58: #{tpu_custom_call.1} parent=1 // pred_check
      _
    $region59: #{tpu_custom_call.1} parent=1 // pred_check_branch
      %3082 = sbr.rel (0) target = $region61
    $region60: #{tpu_custom_call.1} parent=1 // pred_region
      %3084 = dma.done [#allocation4], 128
    $region61: #{tpu_custom_call.1} parent=1 // pred_fallthru
      _
    %3085 = vsyncpa [#allocation3], 1
    %3086 = vsyncpa [#allocation6], 1
    %3087 = vsyncpa [#allocation9], 1
    %3088 = vsyncpa [#allocation4], 1

</llo_original>
